<compile_context>
chip_gen: v7x
topology: tpu7x:2x2x1
jax: 0.10.0
libtpu: 0.0.40
codegen_flags: <defaults>
</compile_context>

<pallas_src>
import functools
import math

import jax
import jax.numpy as jnp
from jax.experimental import pallas as pl
from jax.experimental.pallas import tpu as pltpu


# ----------------------------------------------------------------------------
# Tiling helper
# ----------------------------------------------------------------------------
def _pick_tile(dim, preferred, align):
    """Largest multiple of `align` that divides `dim` and is <= `preferred`.

    Falls back to the full dimension when the dim is small or not aligned
    (full-extent blocks are always legal on TPU)."""
    if dim <= preferred or dim % align != 0:
        return dim
    t = (preferred // align) * align
    while dim % t != 0:
        t -= align
    return t


# ----------------------------------------------------------------------------
# Pallas kernels
# ----------------------------------------------------------------------------
def _linear_kernel(x_ref, w_ref, b_ref, o_ref, acc_ref, *, activation):
    """Tiled matmul: grid = (rows, cols, K); f32 accumulator in VMEM."""
    @pl.when(pl.program_id(2) == 0)
    def _():
        acc_ref[...] = jnp.zeros_like(acc_ref)

    acc_ref[...] += jnp.dot(
        x_ref[...].astype(jnp.float32),
        w_ref[...].astype(jnp.float32),
        preferred_element_type=jnp.float32,
    )

    @pl.when(pl.program_id(2) == pl.num_programs(2) - 1)
    def _():
        y = acc_ref[...] + b_ref[...].astype(jnp.float32)
        if activation == "relu":
            y = jnp.maximum(y, 0.0)
        o_ref[...] = y.astype(o_ref.dtype)


def linear(x2d, w, b, activation=None, *, tm=256, tn=256, tk=512):
    """x2d: (N, din), w: (din, dout), b: (dout,) -> (N, dout)."""
    N, din = x2d.shape
    dout = w.shape[1]
    tm = _pick_tile(N, tm, 8)
    tn = _pick_tile(dout, tn, 128)
    tk = _pick_tile(din, tk, 128)
    grid = (N // tm, dout // tn, din // tk)
    return pl.pallas_call(
        functools.partial(_linear_kernel, activation=activation),
        out_shape=jax.ShapeDtypeStruct((N, dout), x2d.dtype),
        grid=grid,
        in_specs=[
            pl.BlockSpec((tm, tk), lambda i, j, k: (i, k)),
            pl.BlockSpec((tk, tn), lambda i, j, k: (k, j)),
            pl.BlockSpec((1, tn), lambda i, j, k: (0, j)),
        ],
        out_specs=pl.BlockSpec((tm, tn), lambda i, j, k: (i, j)),
        scratch_shapes=[pltpu.VMEM((tm, tn), jnp.float32)],
        compiler_params=pltpu.CompilerParams(
            dimension_semantics=("parallel", "parallel", "arbitrary")),
    )(x2d, w, b.reshape(1, dout))


def _proj_addln_kernel(x_ref, w_ref, b_ref, r_ref, g_ref, beta_ref,
                       o_ref, acc_ref, *, eps):
    """x @ W + b, then residual add + LayerNorm fused in the epilogue."""
    @pl.when(pl.program_id(1) == 0)
    def _():
        acc_ref[...] = jnp.zeros_like(acc_ref)

    acc_ref[...] += jnp.dot(
        x_ref[...].astype(jnp.float32),
        w_ref[...].astype(jnp.float32),
        preferred_element_type=jnp.float32,
    )

    @pl.when(pl.program_id(1) == pl.num_programs(1) - 1)
    def _():
        y = acc_ref[...] + b_ref[...].astype(jnp.float32) \
            + r_ref[...].astype(jnp.float32)
        mu = jnp.mean(y, axis=-1, keepdims=True)
        var = jnp.mean((y - mu) ** 2, axis=-1, keepdims=True)
        y = (y - mu) * jax.lax.rsqrt(var + eps)
        y = y * g_ref[...].astype(jnp.float32) + beta_ref[...].astype(jnp.float32)
        o_ref[...] = y.astype(o_ref.dtype)


def proj_add_layernorm(x2d, w, b, residual, gamma, beta, eps=1e-5,
                       *, tm=256, tk=512):
    """(x2d @ w + b + residual) -> LayerNorm.  x2d: (N, din), w: (din, D)."""
    N, din = x2d.shape
    D = w.shape[1]
    tm = _pick_tile(N, tm, 8)
    tk = _pick_tile(din, tk, 128)
    grid = (N // tm, din // tk)
    return pl.pallas_call(
        functools.partial(_proj_addln_kernel, eps=eps),
        out_shape=jax.ShapeDtypeStruct((N, D), residual.dtype),
        grid=grid,
        in_specs=[
            pl.BlockSpec((tm, tk), lambda i, k: (i, k)),
            pl.BlockSpec((tk, D), lambda i, k: (k, 0)),
            pl.BlockSpec((1, D), lambda i, k: (0, 0)),
            pl.BlockSpec((tm, D), lambda i, k: (i, 0)),
            pl.BlockSpec((1, D), lambda i, k: (0, 0)),
            pl.BlockSpec((1, D), lambda i, k: (0, 0)),
        ],
        out_specs=pl.BlockSpec((tm, D), lambda i, k: (i, 0)),
        scratch_shapes=[pltpu.VMEM((tm, D), jnp.float32)],
        compiler_params=pltpu.CompilerParams(
            dimension_semantics=("parallel", "arbitrary")),
    )(x2d, w, b.reshape(1, D), residual,
      gamma.reshape(1, D), beta.reshape(1, D))


def _ffn_addln_kernel(x_ref, w1_ref, b1_ref, w2_ref, b2_ref,
                      g_ref, beta_ref, o_ref, *, eps):
    """relu(x@W1+b1)@W2+b2 + residual(x) -> LayerNorm, all in VMEM."""
    x = x_ref[...].astype(jnp.float32)
    h = jnp.dot(x, w1_ref[...].astype(jnp.float32),
                preferred_element_type=jnp.float32)
    h = jnp.maximum(h + b1_ref[...].astype(jnp.float32), 0.0)
    y = jnp.dot(h, w2_ref[...].astype(jnp.float32),
                preferred_element_type=jnp.float32)
    y = y + b2_ref[...].astype(jnp.float32) + x
    mu = jnp.mean(y, axis=-1, keepdims=True)
    var = jnp.mean((y - mu) ** 2, axis=-1, keepdims=True)
    y = (y - mu) * jax.lax.rsqrt(var + eps)
    y = y * g_ref[...].astype(jnp.float32) + beta_ref[...].astype(jnp.float32)
    o_ref[...] = y.astype(o_ref.dtype)


def ffn_add_layernorm(x2d, w1, b1, w2, b2, gamma, beta, eps=1e-5, *, tm=256):
    N, D = x2d.shape
    dff = w1.shape[1]
    tm = _pick_tile(N, tm, 8)
    grid = (N // tm,)
    return pl.pallas_call(
        functools.partial(_ffn_addln_kernel, eps=eps),
        out_shape=jax.ShapeDtypeStruct((N, D), x2d.dtype),
        grid=grid,
        in_specs=[
            pl.BlockSpec((tm, D), lambda i: (i, 0)),
            pl.BlockSpec((D, dff), lambda i: (0, 0)),
            pl.BlockSpec((1, dff), lambda i: (0, 0)),
            pl.BlockSpec((dff, D), lambda i: (0, 0)),
            pl.BlockSpec((1, D), lambda i: (0, 0)),
            pl.BlockSpec((1, D), lambda i: (0, 0)),
            pl.BlockSpec((1, D), lambda i: (0, 0)),
        ],
        out_specs=pl.BlockSpec((tm, D), lambda i: (i, 0)),
        compiler_params=pltpu.CompilerParams(dimension_semantics=("parallel",)),
    )(x2d, w1, b1.reshape(1, dff), w2, b2.reshape(1, D),
      gamma.reshape(1, D), beta.reshape(1, D))


def _attention_kernel(q_ref, k_ref, v_ref, m_ref, o_ref, *, head, d_k, d_v):
    """All heads of one batch element.  q/k/v keep heads fused in lanes.

    1/sqrt(d_k) is already folded into the Q projection weights outside.
    """
    q_all = q_ref[0].astype(jnp.float32)     # (Lq, head*d_k)
    k_all = k_ref[0].astype(jnp.float32)     # (Lk, head*d_k)
    v_all = v_ref[0].astype(jnp.float32)     # (Lk, head*d_v)
    keep = m_ref[0] != 0                     # (Lq, Lk) bool

    outs = []
    for h in range(head):                    # static unroll over heads
        q = q_all[:, h * d_k:(h + 1) * d_k]
        k = k_all[:, h * d_k:(h + 1) * d_k]
        v = v_all[:, h * d_v:(h + 1) * d_v]
        s = jnp.dot(q, k.T, preferred_element_type=jnp.float32)
        s = jnp.where(keep, s, -1e9)         # masked_fill(mask==0, -1e9)
        s = s - jnp.max(s, axis=-1, keepdims=True)
        p = jnp.exp(s)
        inv_l = pl.reciprocal(jnp.sum(p, axis=-1, keepdims=True), approx=True)
        outs.append(jnp.dot(p, v, preferred_element_type=jnp.float32) * inv_l)

    # single lane-dense store of all heads
    o_ref[0] = jnp.concatenate(outs, axis=-1).astype(o_ref.dtype)


def sdp_attention(q, k, v, mask, *, head, d_k, d_v):
    """q:(B,Lq,H*dk) k:(B,Lk,H*dk) v:(B,Lk,H*dv) mask:(B,Lq,Lk) int32."""
    B, Lq, hdk = q.shape
    Lk = k.shape[1]
    hdv = v.shape[2]
    return pl.pallas_call(
        functools.partial(_attention_kernel, head=head, d_k=d_k, d_v=d_v),
        out_shape=jax.ShapeDtypeStruct((B, Lq, hdv), q.dtype),
        grid=(B,),
        in_specs=[
            pl.BlockSpec((1, Lq, hdk), lambda i: (i, 0, 0)),
            pl.BlockSpec((1, Lk, hdk), lambda i: (i, 0, 0)),
            pl.BlockSpec((1, Lk, hdv), lambda i: (i, 0, 0)),
            pl.BlockSpec((1, Lq, Lk), lambda i: (i, 0, 0)),
        ],
        out_specs=pl.BlockSpec((1, Lq, hdv), lambda i: (i, 0, 0)),
        compiler_params=pltpu.CompilerParams(dimension_semantics=("parallel",)),
    )(q, k, v, mask)


# ----------------------------------------------------------------------------
# Model building blocks (plain-JAX glue calling Pallas kernels)
# ----------------------------------------------------------------------------
def positional_encoding(length, d_model):
    pos = jnp.arange(length, dtype=jnp.float32)[:, None]
    i = jnp.arange(d_model, dtype=jnp.float32)[None, :]
    angle = pos / jnp.power(10000.0, (2.0 * jnp.floor(i / 2.0)) / d_model)
    pe = jnp.where((jnp.arange(d_model) % 2) == 0, jnp.sin(angle), jnp.cos(angle))
    return pe.astype(jnp.float32)


def embed(tokens, emb_table, d_model):
    B, L = tokens.shape
    x = jnp.take(emb_table, tokens, axis=0)          # (B, L, d_model)
    pe = positional_encoding(L, d_model)[None, :, :]
    return x + pe


def multi_head_attention(p, q_in, kv_in, mask, residual2d, ln_g, ln_b,
                         *, head, d_k, d_v, d_model, self_attn):
    """Fused QKV projection -> per-batch attention -> Wo + residual + LN."""
    B, Lq, _ = q_in.shape
    Lk = kv_in.shape[1]
    scale = 1.0 / math.sqrt(d_k)
    hdk, hdv = head * d_k, head * d_v
    q2 = q_in.reshape(B * Lq, d_model)

    if self_attn:
        # one projection kernel for Q|K|V (scale folded into Wq / bq)
        w_qkv = jnp.concatenate([p["wq"] * scale, p["wk"], p["wv"]], axis=1)
        b_qkv = jnp.concatenate([p["bq"] * scale, p["bk"], p["bv"]])
        qkv = linear(q2, w_qkv, b_qkv)
        q = qkv[:, :hdk]
        k = qkv[:, hdk:2 * hdk]
        v = qkv[:, 2 * hdk:]
    else:
        kv2 = kv_in.reshape(B * Lk, d_model)
        q = linear(q2, p["wq"] * scale, p["bq"] * scale)
        w_kv = jnp.concatenate([p["wk"], p["wv"]], axis=1)
        b_kv = jnp.concatenate([p["bk"], p["bv"]])
        kv = linear(kv2, w_kv, b_kv)
        k = kv[:, :hdk]
        v = kv[:, hdk:]

    q = q.reshape(B, Lq, hdk)
    k = k.reshape(B, Lk, hdk)
    v = v.reshape(B, Lk, hdv)

    o = sdp_attention(q, k, v, mask, head=head, d_k=d_k, d_v=d_v)  # (B,Lq,hdv)
    o2 = o.reshape(B * Lq, hdv)

    # output projection fused with residual add + LayerNorm
    return proj_add_layernorm(o2, p["wo"], p["bo"], residual2d, ln_g, ln_b)


def encoder_layer(p, x, mask, *, cfg):
    B, L, D = x.shape
    x2 = x.reshape(B * L, D)
    x2 = multi_head_attention(p["attn"], x, x, mask, x2, p["ln1_g"], p["ln1_b"],
                              head=cfg["head"], d_k=cfg["d_k"], d_v=cfg["d_v"],
                              d_model=D, self_attn=True)
    x2 = ffn_add_layernorm(x2, p["ffn"]["w1"], p["ffn"]["b1"],
                           p["ffn"]["w2"], p["ffn"]["b2"],
                           p["ln2_g"], p["ln2_b"])
    return x2.reshape(B, L, D)


def decoder_layer(p, enc_out, x, dec_mask, enc_dec_mask, *, cfg):
    B, L, D = x.shape
    x2 = x.reshape(B * L, D)
    x2 = multi_head_attention(p["self_attn"], x, x, dec_mask, x2,
                              p["ln1_g"], p["ln1_b"],
                              head=cfg["head"], d_k=cfg["d_k"], d_v=cfg["d_v"],
                              d_model=D, self_attn=True)
    x3 = x2.reshape(B, L, D)
    x2 = multi_head_attention(p["cross_attn"], x3, enc_out, enc_dec_mask, x2,
                              p["ln2_g"], p["ln2_b"],
                              head=cfg["head"], d_k=cfg["d_k"], d_v=cfg["d_v"],
                              d_model=D, self_attn=False)
    x2 = ffn_add_layernorm(x2, p["ffn"]["w1"], p["ffn"]["b1"],
                           p["ffn"]["w2"], p["ffn"]["b2"],
                           p["ln3_g"], p["ln3_b"])
    return x2.reshape(B, L, D)


def get_pad_mask(q_tok, k_tok, pad):
    # (B, Lq, Lk) bool  (broadcast over heads happens inside the kernel grid)
    k_ne = (k_tok != pad)[:, None, :]
    q_ne = (q_tok != pad)[:, :, None]
    return k_ne & q_ne


def get_no_peak_mask(Lq, Lk):
    return jnp.tril(jnp.ones((Lq, Lk), dtype=bool))


def transformer_forward(params, enc_in, dec_in, *, cfg):
    pad = cfg["pad"]
    Le, Ld = enc_in.shape[1], dec_in.shape[1]
    enc_mask = get_pad_mask(enc_in, enc_in, pad).astype(jnp.int32)
    dec_mask = (get_pad_mask(dec_in, dec_in, pad)
                & get_no_peak_mask(Ld, Ld)[None, :, :]).astype(jnp.int32)
    enc_dec_mask = get_pad_mask(dec_in, enc_in, pad).astype(jnp.int32)

    x_enc = embed(enc_in, params["enc_emb"], cfg["d_model"])
    x_dec = embed(dec_in, params["dec_emb"], cfg["d_model"])

    enc_out = x_enc
    for lp in params["encoder"]:
        enc_out = encoder_layer(lp, enc_out, enc_mask, cfg=cfg)

    dec_out = x_dec
    for lp in params["decoder"]:
        dec_out = decoder_layer(lp, enc_out, dec_out, dec_mask, enc_dec_mask,
                                cfg=cfg)

    B, Ldd, D = dec_out.shape
    logits = linear(dec_out.reshape(B * Ldd, D), params["out_w"], params["out_b"])
    return logits.reshape(B, Ldd, cfg["dec_vocab_size"])


# ----------------------------------------------------------------------------
# Deterministic parameter initialization
# ----------------------------------------------------------------------------
def _init_params(key, cfg):
    d_model, d_k, d_v, head, d_ff = (cfg["d_model"], cfg["d_k"], cfg["d_v"],
                                     cfg["head"], cfg["d_ff"])

    def nrm(key, shape):
        return jax.random.normal(key, shape, dtype=jnp.float32) * 0.02

    def mha_params(key):
        ks = jax.random.split(key, 4)
        return {
            "wq": nrm(ks[0], (d_model, head * d_k)), "bq": jnp.zeros((head * d_k,), jnp.float32),
            "wk": nrm(ks[1], (d_model, head * d_k)), "bk": jnp.zeros((head * d_k,), jnp.float32),
            "wv": nrm(ks[2], (d_model, head * d_v)), "bv": jnp.zeros((head * d_v,), jnp.float32),
            "wo": nrm(ks[3], (head * d_v, d_model)), "bo": jnp.zeros((d_model,), jnp.float32),
        }

    def ffn_params(key):
        k1, k2 = jax.random.split(key)
        return {
            "w1": nrm(k1, (d_model, d_ff)), "b1": jnp.zeros((d_ff,), jnp.float32),
            "w2": nrm(k2, (d_ff, d_model)), "b2": jnp.zeros((d_model,), jnp.float32),
        }

    def ln():
        return jnp.ones((d_model,), jnp.float32), jnp.zeros((d_model,), jnp.float32)

    keys = jax.random.split(key, 4 + 2 * cfg["n_layer"])
    enc_emb = nrm(keys[0], (cfg["enc_vocab_size"], d_model))
    dec_emb = nrm(keys[1], (cfg["dec_vocab_size"], d_model))

    encoder = []
    for l in range(cfg["n_layer"]):
        k_a, k_f = jax.random.split(keys[2 + l])
        g1, b1 = ln()
        g2, b2 = ln()
        encoder.append({"attn": mha_params(k_a), "ffn": ffn_params(k_f),
                        "ln1_g": g1, "ln1_b": b1, "ln2_g": g2, "ln2_b": b2})

    decoder = []
    for l in range(cfg["n_layer"]):
        k_sa, k_ca, k_f = jax.random.split(keys[2 + cfg["n_layer"] + l], 3)
        g1, b1 = ln()
        g2, b2 = ln()
        g3, b3 = ln()
        decoder.append({"self_attn": mha_params(k_sa), "cross_attn": mha_params(k_ca),
                        "ffn": ffn_params(k_f),
                        "ln1_g": g1, "ln1_b": b1, "ln2_g": g2, "ln2_b": b2,
                        "ln3_g": g3, "ln3_b": b3})

    out_w = nrm(keys[2 + 2 * cfg["n_layer"]], (d_model, cfg["dec_vocab_size"]))
    out_b = jnp.zeros((cfg["dec_vocab_size"],), jnp.float32)

    return {"enc_emb": enc_emb, "dec_emb": dec_emb, "encoder": encoder,
            "decoder": decoder, "out_w": out_w, "out_b": out_b}


# ----------------------------------------------------------------------------
# Main
# ----------------------------------------------------------------------------
if __name__ == "__main__":
    cfg = dict(d_model=32, d_k=8, d_v=8, head=4, d_ff=64, n_layer=2,
               enc_vocab_size=32, dec_vocab_size=32,
               enc_len=8, dec_len=8, pad=0)

    key = jax.random.PRNGKey(0)
    k_param, k_enc, k_dec = jax.random.split(key, 3)
    params = _init_params(k_param, cfg)

    bs = 2
    enc_in = jax.random.randint(k_enc, (bs, cfg["enc_len"]), 1, cfg["enc_vocab_size"],
                                dtype=jnp.int32)
    dec_in = jax.random.randint(k_dec, (bs, cfg["dec_len"]), 1, cfg["dec_vocab_size"],
                                dtype=jnp.int32)
    # introduce some pad tokens so pad-masking is exercised
    enc_in = enc_in.at[:, -2:].set(cfg["pad"])
    dec_in = dec_in.at[:, -1:].set(cfg["pad"])

    fwd = jax.jit(functools.partial(transformer_forward, cfg=cfg))
    out = fwd(params, enc_in, dec_in)
    out = jax.block_until_ready(out)

    assert out.shape == (bs, cfg["dec_len"], cfg["dec_vocab_size"])
    assert bool(jnp.all(jnp.isfinite(out)))
    print("KERNEL_OK")
</pallas_src>

<mosaic_0001>
module attributes {stable_mosaic.version = 11 : i64} {
  func.func @_proj_addln_kernel(%arg0: i32, %arg1: i32, %arg2: memref<16x32xf32, #tpu.memory_space<vmem>>, %arg3: memref<32x32xf32, #tpu.memory_space<vmem>>, %arg4: memref<1x32xf32, #tpu.memory_space<vmem>>, %arg5: memref<16x32xf32, #tpu.memory_space<vmem>>, %arg6: memref<1x32xf32, #tpu.memory_space<vmem>>, %arg7: memref<1x32xf32, #tpu.memory_space<vmem>>, %arg8: memref<16x32xf32, #tpu.memory_space<vmem>>, %arg9: memref<16x32xf32, #tpu.memory_space<vmem>>) attributes {dimension_semantics = [#tpu.dimension_semantics<parallel>, #tpu.dimension_semantics<arbitrary>], iteration_bounds = array<i64: 1, 1>, scalar_prefetch = 0 : i64, scratch_operands = 1 : i64, tpu.core_type = #tpu.core_type<tc>, window_params = [{transform_indices = @transform_0, window_bounds = array<i64: 16, 32>}, {transform_indices = @transform_1, window_bounds = array<i64: 32, 32>}, {pipeline_mode = #tpu.pipeline_mode<synchronous>, transform_indices = @transform_2, window_bounds = array<i64: 1, 32>}, {transform_indices = @transform_3, window_bounds = array<i64: 16, 32>}, {pipeline_mode = #tpu.pipeline_mode<synchronous>, transform_indices = @transform_4, window_bounds = array<i64: 1, 32>}, {pipeline_mode = #tpu.pipeline_mode<synchronous>, transform_indices = @transform_5, window_bounds = array<i64: 1, 32>}, {transform_indices = @transform_6, window_bounds = array<i64: 16, 32>}]} {
    %c0_i32 = arith.constant 0 : i32
    %0 = arith.cmpi eq, %arg1, %c0_i32 : i32
    %1 = arith.extui %0 : i1 to i32
    %c0_i32_0 = arith.constant 0 : i32
    %2 = arith.cmpi ne, %1, %c0_i32_0 : i32
    scf.if %2 {
      %cst_10 = arith.constant 0.000000e+00 : f32
      %12 = vector.broadcast %cst_10 : f32 to vector<16x32xf32>
      %c0_11 = arith.constant 0 : index
      %c0_12 = arith.constant 0 : index
      %13 = vector.load %arg9[%c0_11, %c0_12] : memref<16x32xf32, #tpu.memory_space<vmem>>, vector<16x32xf32>
      tpu.vector_store %arg9[%c0_11, %c0_12], %12 {strides = array<i32>} : memref<16x32xf32, #tpu.memory_space<vmem>>, vector<16x32xf32>,
    } else {
    }
    %c0 = arith.constant 0 : index
    %c0_1 = arith.constant 0 : index
    %3 = vector.load %arg9[%c0, %c0_1] : memref<16x32xf32, #tpu.memory_space<vmem>>, vector<16x32xf32>
    %c0_2 = arith.constant 0 : index
    %c0_3 = arith.constant 0 : index
    %4 = vector.load %arg2[%c0_2, %c0_3] : memref<16x32xf32, #tpu.memory_space<vmem>>, vector<16x32xf32>
    %c0_4 = arith.constant 0 : index
    %c0_5 = arith.constant 0 : index
    %5 = vector.load %arg3[%c0_4, %c0_5] : memref<32x32xf32, #tpu.memory_space<vmem>>, vector<32x32xf32>
    %cst = arith.constant dense<0.000000e+00> : vector<16x32xf32>
    %6 = tpu.matmul %4, %5, %cst {dimension_numbers = #tpu.dot_dimension_numbers<[1], [0], [0], [1], [0, 0, 1, 1], [], []>} : vector<16x32xf32>, vector<32x32xf32>, vector<16x32xf32> -> vector<16x32xf32>
    %7 = arith.addf %3, %6 : vector<16x32xf32>
    %c0_6 = arith.constant 0 : index
    %c0_7 = arith.constant 0 : index
    %8 = vector.load %arg9[%c0_6, %c0_7] : memref<16x32xf32, #tpu.memory_space<vmem>>, vector<16x32xf32>
    tpu.vector_store %arg9[%c0_6, %c0_7], %7 {strides = array<i32>} : memref<16x32xf32, #tpu.memory_space<vmem>>, vector<16x32xf32>,
    %c0_i32_8 = arith.constant 0 : i32
    %9 = arith.cmpi eq, %arg1, %c0_i32_8 : i32
    %10 = arith.extui %9 : i1 to i32
    %c0_i32_9 = arith.constant 0 : i32
    %11 = arith.cmpi ne, %10, %c0_i32_9 : i32
    scf.if %11 {
      %c0_10 = arith.constant 0 : index
      %c0_11 = arith.constant 0 : index
      %12 = vector.load %arg9[%c0_10, %c0_11] : memref<16x32xf32, #tpu.memory_space<vmem>>, vector<16x32xf32>
      %c0_12 = arith.constant 0 : index
      %c0_13 = arith.constant 0 : index
      %13 = vector.load %arg4[%c0_12, %c0_13] : memref<1x32xf32, #tpu.memory_space<vmem>>, vector<1x32xf32>
      %14 = vector.broadcast %13 : vector<1x32xf32> to vector<16x32xf32>
      %15 = arith.addf %12, %14 : vector<16x32xf32>
      %c0_14 = arith.constant 0 : index
      %c0_15 = arith.constant 0 : index
      %16 = vector.load %arg5[%c0_14, %c0_15] : memref<16x32xf32, #tpu.memory_space<vmem>>, vector<16x32xf32>
      %17 = arith.addf %15, %16 : vector<16x32xf32>
      %cst_16 = arith.constant dense<0.000000e+00> : vector<16xf32>
      %18 = vector.multi_reduction <add>, %17, %cst_16 [1] : vector<16x32xf32> to vector<16xf32>
      %19 = vector.shape_cast %18 : vector<16xf32> to vector<16x1xf32>
      %cst_17 = arith.constant 3.200000e+01 : f32
      %20 = vector.broadcast %cst_17 : f32 to vector<16x1xf32>
      %21 = arith.divf %19, %20 : vector<16x1xf32>
      %22 = vector.broadcast %21 : vector<16x1xf32> to vector<16x32xf32>
      %23 = arith.subf %17, %22 : vector<16x32xf32>
      %24 = arith.mulf %23, %23 : vector<16x32xf32>
      %cst_18 = arith.constant dense<0.000000e+00> : vector<16xf32>
      %25 = vector.multi_reduction <add>, %24, %cst_18 [1] : vector<16x32xf32> to vector<16xf32>
      %26 = vector.shape_cast %25 : vector<16xf32> to vector<16x1xf32>
      %cst_19 = arith.constant 3.200000e+01 : f32
      %27 = vector.broadcast %cst_19 : f32 to vector<16x1xf32>
      %28 = arith.divf %26, %27 : vector<16x1xf32>
      %29 = vector.broadcast %21 : vector<16x1xf32> to vector<16x32xf32>
      %30 = arith.subf %17, %29 : vector<16x32xf32>
      %cst_20 = arith.constant 9.99999974E-6 : f32
      %31 = vector.broadcast %cst_20 : f32 to vector<16x1xf32>
      %32 = arith.addf %28, %31 : vector<16x1xf32>
      %33 = math.rsqrt %32 : vector<16x1xf32>
      %34 = vector.broadcast %33 : vector<16x1xf32> to vector<16x32xf32>
      %35 = arith.mulf %30, %34 : vector<16x32xf32>
      %c0_21 = arith.constant 0 : index
      %c0_22 = arith.constant 0 : index
      %36 = vector.load %arg6[%c0_21, %c0_22] : memref<1x32xf32, #tpu.memory_space<vmem>>, vector<1x32xf32>
      %37 = vector.broadcast %36 : vector<1x32xf32> to vector<16x32xf32>
      %38 = arith.mulf %35, %37 : vector<16x32xf32>
      %c0_23 = arith.constant 0 : index
      %c0_24 = arith.constant 0 : index
      %39 = vector.load %arg7[%c0_23, %c0_24] : memref<1x32xf32, #tpu.memory_space<vmem>>, vector<1x32xf32>
      %40 = vector.broadcast %39 : vector<1x32xf32> to vector<16x32xf32>
      %41 = arith.addf %38, %40 : vector<16x32xf32>
      %c0_25 = arith.constant 0 : index
      %c0_26 = arith.constant 0 : index
      %42 = vector.load %arg8[%c0_25, %c0_26] : memref<16x32xf32, #tpu.memory_space<vmem>>, vector<16x32xf32>
      tpu.vector_store %arg8[%c0_25, %c0_26], %41 {strides = array<i32>} : memref<16x32xf32, #tpu.memory_space<vmem>>, vector<16x32xf32>,
    } else {
    }
    return
  }
  func.func @transform_0(%arg0: i32, %arg1: i32) -> (i32, i32) {
    %c0_i32 = arith.constant 0 : i32
    return %arg0, %arg1 : i32, i32
  }
  func.func @transform_1(%arg0: i32, %arg1: i32) -> (i32, i32) {
    %c0_i32 = arith.constant 0 : i32
    %c0_i32_0 = arith.constant 0 : i32
    return %arg1, %c0_i32 : i32, i32
  }
  func.func @transform_2(%arg0: i32, %arg1: i32) -> (i32, i32) {
    %c0_i32 = arith.constant 0 : i32
    %c0_i32_0 = arith.constant 0 : i32
    %c0_i32_1 = arith.constant 0 : i32
    return %c0_i32, %c0_i32_0 : i32, i32
  }
  func.func @transform_3(%arg0: i32, %arg1: i32) -> (i32, i32) {
    %c0_i32 = arith.constant 0 : i32
    %c0_i32_0 = arith.constant 0 : i32
    return %arg0, %c0_i32 : i32, i32
  }
  func.func @transform_4(%arg0: i32, %arg1: i32) -> (i32, i32) {
    %c0_i32 = arith.constant 0 : i32
    %c0_i32_0 = arith.constant 0 : i32
    %c0_i32_1 = arith.constant 0 : i32
    return %c0_i32, %c0_i32_0 : i32, i32
  }
  func.func @transform_5(%arg0: i32, %arg1: i32) -> (i32, i32) {
    %c0_i32 = arith.constant 0 : i32
    %c0_i32_0 = arith.constant 0 : i32
    %c0_i32_1 = arith.constant 0 : i32
    return %c0_i32, %c0_i32_0 : i32, i32
  }
  func.func @transform_6(%arg0: i32, %arg1: i32) -> (i32, i32) {
    %c0_i32 = arith.constant 0 : i32
    %c0_i32_0 = arith.constant 0 : i32
    return %arg0, %c0_i32 : i32, i32
  }
}

module attributes {stable_mosaic.version = 11 : i64} {
  func.func @_linear_kernel(%arg0: i32, %arg1: i32, %arg2: i32, %arg3: memref<16x32xf32, #tpu.memory_space<vmem>>, %arg4: memref<32x96xf32, #tpu.memory_space<vmem>>, %arg5: memref<1x96xf32, #tpu.memory_space<vmem>>, %arg6: memref<16x96xf32, #tpu.memory_space<vmem>>, %arg7: memref<16x96xf32, #tpu.memory_space<vmem>>) attributes {dimension_semantics = [#tpu.dimension_semantics<parallel>, #tpu.dimension_semantics<parallel>, #tpu.dimension_semantics<arbitrary>], iteration_bounds = array<i64: 1, 1, 1>, scalar_prefetch = 0 : i64, scratch_operands = 1 : i64, tpu.core_type = #tpu.core_type<tc>, window_params = [{transform_indices = @transform_0, window_bounds = array<i64: 16, 32>}, {transform_indices = @transform_1, window_bounds = array<i64: 32, 96>}, {transform_indices = @transform_2, window_bounds = array<i64: 1, 96>}, {transform_indices = @transform_3, window_bounds = array<i64: 16, 96>}]} {
    %c0_i32 = arith.constant 0 : i32
    %0 = arith.cmpi eq, %arg2, %c0_i32 : i32
    %1 = arith.extui %0 : i1 to i32
    %c0_i32_0 = arith.constant 0 : i32
    %2 = arith.cmpi ne, %1, %c0_i32_0 : i32
    scf.if %2 {
      %cst_10 = arith.constant 0.000000e+00 : f32
      %12 = vector.broadcast %cst_10 : f32 to vector<16x96xf32>
      %c0_11 = arith.constant 0 : index
      %c0_12 = arith.constant 0 : index
      %13 = vector.load %arg7[%c0_11, %c0_12] : memref<16x96xf32, #tpu.memory_space<vmem>>, vector<16x96xf32>
      tpu.vector_store %arg7[%c0_11, %c0_12], %12 {strides = array<i32>} : memref<16x96xf32, #tpu.memory_space<vmem>>, vector<16x96xf32>,
    } else {
    }
    %c0 = arith.constant 0 : index
    %c0_1 = arith.constant 0 : index
    %3 = vector.load %arg7[%c0, %c0_1] : memref<16x96xf32, #tpu.memory_space<vmem>>, vector<16x96xf32>
    %c0_2 = arith.constant 0 : index
    %c0_3 = arith.constant 0 : index
    %4 = vector.load %arg3[%c0_2, %c0_3] : memref<16x32xf32, #tpu.memory_space<vmem>>, vector<16x32xf32>
    %c0_4 = arith.constant 0 : index
    %c0_5 = arith.constant 0 : index
    %5 = vector.load %arg4[%c0_4, %c0_5] : memref<32x96xf32, #tpu.memory_space<vmem>>, vector<32x96xf32>
    %cst = arith.constant dense<0.000000e+00> : vector<16x96xf32>
    %6 = tpu.matmul %4, %5, %cst {dimension_numbers = #tpu.dot_dimension_numbers<[1], [0], [0], [1], [0, 0, 1, 1], [], []>} : vector<16x32xf32>, vector<32x96xf32>, vector<16x96xf32> -> vector<16x96xf32>
    %7 = arith.addf %3, %6 : vector<16x96xf32>
    %c0_6 = arith.constant 0 : index
    %c0_7 = arith.constant 0 : index
    %8 = vector.load %arg7[%c0_6, %c0_7] : memref<16x96xf32, #tpu.memory_space<vmem>>, vector<16x96xf32>
    tpu.vector_store %arg7[%c0_6, %c0_7], %7 {strides = array<i32>} : memref<16x96xf32, #tpu.memory_space<vmem>>, vector<16x96xf32>,
    %c0_i32_8 = arith.constant 0 : i32
    %9 = arith.cmpi eq, %arg2, %c0_i32_8 : i32
    %10 = arith.extui %9 : i1 to i32
    %c0_i32_9 = arith.constant 0 : i32
    %11 = arith.cmpi ne, %10, %c0_i32_9 : i32
    scf.if %11 {
      %c0_10 = arith.constant 0 : index
      %c0_11 = arith.constant 0 : index
      %12 = vector.load %arg7[%c0_10, %c0_11] : memref<16x96xf32, #tpu.memory_space<vmem>>, vector<16x96xf32>
      %c0_12 = arith.constant 0 : index
      %c0_13 = arith.constant 0 : index
      %13 = vector.load %arg5[%c0_12, %c0_13] : memref<1x96xf32, #tpu.memory_space<vmem>>, vector<1x96xf32>
      %14 = vector.broadcast %13 : vector<1x96xf32> to vector<16x96xf32>
      %15 = arith.addf %12, %14 : vector<16x96xf32>
      %c0_14 = arith.constant 0 : index
      %c0_15 = arith.constant 0 : index
      %16 = vector.load %arg6[%c0_14, %c0_15] : memref<16x96xf32, #tpu.memory_space<vmem>>, vector<16x96xf32>
      tpu.vector_store %arg6[%c0_14, %c0_15], %15 {strides = array<i32>} : memref<16x96xf32, #tpu.memory_space<vmem>>, vector<16x96xf32>,
    } else {
    }
    return
  }
  func.func @transform_0(%arg0: i32, %arg1: i32, %arg2: i32) -> (i32, i32) {
    %c0_i32 = arith.constant 0 : i32
    return %arg0, %arg2 : i32, i32
  }
  func.func @transform_1(%arg0: i32, %arg1: i32, %arg2: i32) -> (i32, i32) {
    %c0_i32 = arith.constant 0 : i32
    return %arg2, %arg1 : i32, i32
  }
  func.func @transform_2(%arg0: i32, %arg1: i32, %arg2: i32) -> (i32, i32) {
    %c0_i32 = arith.constant 0 : i32
    %c0_i32_0 = arith.constant 0 : i32
    return %c0_i32, %arg1 : i32, i32
  }
  func.func @transform_3(%arg0: i32, %arg1: i32, %arg2: i32) -> (i32, i32) {
    %c0_i32 = arith.constant 0 : i32
    return %arg0, %arg1 : i32, i32
  }
}

module attributes {stable_mosaic.version = 11 : i64} {
  func.func @_attention_kernel(%arg0: i32, %arg1: memref<1x8x32xf32, #tpu.memory_space<vmem>>, %arg2: memref<1x8x32xf32, #tpu.memory_space<vmem>>, %arg3: memref<1x8x32xf32, #tpu.memory_space<vmem>>, %arg4: memref<1x8x8xi32, #tpu.memory_space<vmem>>, %arg5: memref<1x8x32xf32, #tpu.memory_space<vmem>>) attributes {dimension_semantics = [#tpu.dimension_semantics<parallel>], iteration_bounds = array<i64: 2>, scalar_prefetch = 0 : i64, scratch_operands = 0 : i64, tpu.core_type = #tpu.core_type<tc>, window_params = [{transform_indices = @transform_0, window_bounds = array<i64: 1, 8, 32>}, {transform_indices = @transform_1, window_bounds = array<i64: 1, 8, 32>}, {transform_indices = @transform_2, window_bounds = array<i64: 1, 8, 32>}, {transform_indices = @transform_3, window_bounds = array<i64: 1, 8, 8>}, {transform_indices = @transform_4, window_bounds = array<i64: 1, 8, 32>}]} {
    %c0 = arith.constant 0 : index
    %c0_0 = arith.constant 0 : index
    %c0_1 = arith.constant 0 : index
    %0 = vector.load %arg1[%c0, %c0_0, %c0_1] : memref<1x8x32xf32, #tpu.memory_space<vmem>>, vector<1x8x32xf32>
    %1 = vector.shape_cast %0 : vector<1x8x32xf32> to vector<8x32xf32>
    %c0_2 = arith.constant 0 : index
    %c0_3 = arith.constant 0 : index
    %c0_4 = arith.constant 0 : index
    %2 = vector.load %arg2[%c0_2, %c0_3, %c0_4] : memref<1x8x32xf32, #tpu.memory_space<vmem>>, vector<1x8x32xf32>
    %3 = vector.shape_cast %2 : vector<1x8x32xf32> to vector<8x32xf32>
    %c0_5 = arith.constant 0 : index
    %c0_6 = arith.constant 0 : index
    %c0_7 = arith.constant 0 : index
    %4 = vector.load %arg3[%c0_5, %c0_6, %c0_7] : memref<1x8x32xf32, #tpu.memory_space<vmem>>, vector<1x8x32xf32>
    %5 = vector.shape_cast %4 : vector<1x8x32xf32> to vector<8x32xf32>
    %c0_8 = arith.constant 0 : index
    %c0_9 = arith.constant 0 : index
    %c0_10 = arith.constant 0 : index
    %6 = vector.load %arg4[%c0_8, %c0_9, %c0_10] : memref<1x8x8xi32, #tpu.memory_space<vmem>>, vector<1x8x8xi32>
    %7 = vector.shape_cast %6 : vector<1x8x8xi32> to vector<8x8xi32>
    %c0_i32 = arith.constant 0 : i32
    %8 = vector.broadcast %c0_i32 : i32 to vector<8x8xi32>
    %9 = arith.cmpi ne, %7, %8 : vector<8x8xi32>
    %10 = vector.extract_strided_slice %1 {offsets = [0, 0], sizes = [8, 8], strides = [1, 1]} : vector<8x32xf32> to vector<8x8xf32>
    %11 = vector.extract_strided_slice %3 {offsets = [0, 0], sizes = [8, 8], strides = [1, 1]} : vector<8x32xf32> to vector<8x8xf32>
    %12 = vector.extract_strided_slice %5 {offsets = [0, 0], sizes = [8, 8], strides = [1, 1]} : vector<8x32xf32> to vector<8x8xf32>
    %13 = tpu.transpose %11, [1, 0] : vector<8x8xf32> -> vector<8x8xf32>
    %cst = arith.constant dense<0.000000e+00> : vector<8x8xf32>
    %14 = tpu.matmul %10, %13, %cst {dimension_numbers = #tpu.dot_dimension_numbers<[1], [0], [0], [1], [0, 0, 1, 1], [], []>} : vector<8x8xf32>, vector<8x8xf32>, vector<8x8xf32> -> vector<8x8xf32>
    %cst_11 = arith.constant -1.000000e+09 : f32
    %15 = vector.broadcast %cst_11 : f32 to vector<8x8xf32>
    %16 = arith.select %9, %14, %15 : vector<8x8xi1>, vector<8x8xf32>
    %cst_12 = arith.constant dense<0xFF800000> : vector<8xf32>
    %17 = vector.multi_reduction <maximumf>, %16, %cst_12 [1] : vector<8x8xf32> to vector<8xf32>
    %18 = vector.shape_cast %17 : vector<8xf32> to vector<8x1xf32>
    %19 = vector.broadcast %18 : vector<8x1xf32> to vector<8x8xf32>
    %20 = arith.subf %16, %19 : vector<8x8xf32>
    %21 = math.exp %20 : vector<8x8xf32>
    %cst_13 = arith.constant dense<0.000000e+00> : vector<8xf32>
    %22 = vector.multi_reduction <add>, %21, %cst_13 [1] : vector<8x8xf32> to vector<8xf32>
    %23 = vector.shape_cast %22 : vector<8xf32> to vector<8x1xf32>
    %24 = tpu.reciprocal %23 {approx = true} : vector<8x1xf32> -> vector<8x1xf32>
    %cst_14 = arith.constant dense<0.000000e+00> : vector<8x8xf32>
    %25 = tpu.matmul %21, %12, %cst_14 {dimension_numbers = #tpu.dot_dimension_numbers<[1], [0], [0], [1], [0, 0, 1, 1], [], []>} : vector<8x8xf32>, vector<8x8xf32>, vector<8x8xf32> -> vector<8x8xf32>
    %26 = vector.broadcast %24 : vector<8x1xf32> to vector<8x8xf32>
    %27 = arith.mulf %25, %26 : vector<8x8xf32>
    %28 = vector.extract_strided_slice %1 {offsets = [0, 8], sizes = [8, 8], strides = [1, 1]} : vector<8x32xf32> to vector<8x8xf32>
    %29 = vector.extract_strided_slice %3 {offsets = [0, 8], sizes = [8, 8], strides = [1, 1]} : vector<8x32xf32> to vector<8x8xf32>
    %30 = vector.extract_strided_slice %5 {offsets = [0, 8], sizes = [8, 8], strides = [1, 1]} : vector<8x32xf32> to vector<8x8xf32>
    %31 = tpu.transpose %29, [1, 0] : vector<8x8xf32> -> vector<8x8xf32>
    %cst_15 = arith.constant dense<0.000000e+00> : vector<8x8xf32>
    %32 = tpu.matmul %28, %31, %cst_15 {dimension_numbers = #tpu.dot_dimension_numbers<[1], [0], [0], [1], [0, 0, 1, 1], [], []>} : vector<8x8xf32>, vector<8x8xf32>, vector<8x8xf32> -> vector<8x8xf32>
    %cst_16 = arith.constant -1.000000e+09 : f32
    %33 = vector.broadcast %cst_16 : f32 to vector<8x8xf32>
    %34 = arith.select %9, %32, %33 : vector<8x8xi1>, vector<8x8xf32>
    %cst_17 = arith.constant dense<0xFF800000> : vector<8xf32>
    %35 = vector.multi_reduction <maximumf>, %34, %cst_17 [1] : vector<8x8xf32> to vector<8xf32>
    %36 = vector.shape_cast %35 : vector<8xf32> to vector<8x1xf32>
    %37 = vector.broadcast %36 : vector<8x1xf32> to vector<8x8xf32>
    %38 = arith.subf %34, %37 : vector<8x8xf32>
    %39 = math.exp %38 : vector<8x8xf32>
    %cst_18 = arith.constant dense<0.000000e+00> : vector<8xf32>
    %40 = vector.multi_reduction <add>, %39, %cst_18 [1] : vector<8x8xf32> to vector<8xf32>
    %41 = vector.shape_cast %40 : vector<8xf32> to vector<8x1xf32>
    %42 = tpu.reciprocal %41 {approx = true} : vector<8x1xf32> -> vector<8x1xf32>
    %cst_19 = arith.constant dense<0.000000e+00> : vector<8x8xf32>
    %43 = tpu.matmul %39, %30, %cst_19 {dimension_numbers = #tpu.dot_dimension_numbers<[1], [0], [0], [1], [0, 0, 1, 1], [], []>} : vector<8x8xf32>, vector<8x8xf32>, vector<8x8xf32> -> vector<8x8xf32>
    %44 = vector.broadcast %42 : vector<8x1xf32> to vector<8x8xf32>
    %45 = arith.mulf %43, %44 : vector<8x8xf32>
    %46 = vector.extract_strided_slice %1 {offsets = [0, 16], sizes = [8, 8], strides = [1, 1]} : vector<8x32xf32> to vector<8x8xf32>
    %47 = vector.extract_strided_slice %3 {offsets = [0, 16], sizes = [8, 8], strides = [1, 1]} : vector<8x32xf32> to vector<8x8xf32>
    %48 = vector.extract_strided_slice %5 {offsets = [0, 16], sizes = [8, 8], strides = [1, 1]} : vector<8x32xf32> to vector<8x8xf32>
    %49 = tpu.transpose %47, [1, 0] : vector<8x8xf32> -> vector<8x8xf32>
    %cst_20 = arith.constant dense<0.000000e+00> : vector<8x8xf32>
    %50 = tpu.matmul %46, %49, %cst_20 {dimension_numbers = #tpu.dot_dimension_numbers<[1], [0], [0], [1], [0, 0, 1, 1], [], []>} : vector<8x8xf32>, vector<8x8xf32>, vector<8x8xf32> -> vector<8x8xf32>
    %cst_21 = arith.constant -1.000000e+09 : f32
    %51 = vector.broadcast %cst_21 : f32 to vector<8x8xf32>
    %52 = arith.select %9, %50, %51 : vector<8x8xi1>, vector<8x8xf32>
    %cst_22 = arith.constant dense<0xFF800000> : vector<8xf32>
    %53 = vector.multi_reduction <maximumf>, %52, %cst_22 [1] : vector<8x8xf32> to vector<8xf32>
    %54 = vector.shape_cast %53 : vector<8xf32> to vector<8x1xf32>
    %55 = vector.broadcast %54 : vector<8x1xf32> to vector<8x8xf32>
    %56 = arith.subf %52, %55 : vector<8x8xf32>
    %57 = math.exp %56 : vector<8x8xf32>
    %cst_23 = arith.constant dense<0.000000e+00> : vector<8xf32>
    %58 = vector.multi_reduction <add>, %57, %cst_23 [1] : vector<8x8xf32> to vector<8xf32>
    %59 = vector.shape_cast %58 : vector<8xf32> to vector<8x1xf32>
    %60 = tpu.reciprocal %59 {approx = true} : vector<8x1xf32> -> vector<8x1xf32>
    %cst_24 = arith.constant dense<0.000000e+00> : vector<8x8xf32>
    %61 = tpu.matmul %57, %48, %cst_24 {dimension_numbers = #tpu.dot_dimension_numbers<[1], [0], [0], [1], [0, 0, 1, 1], [], []>} : vector<8x8xf32>, vector<8x8xf32>, vector<8x8xf32> -> vector<8x8xf32>
    %62 = vector.broadcast %60 : vector<8x1xf32> to vector<8x8xf32>
    %63 = arith.mulf %61, %62 : vector<8x8xf32>
    %64 = vector.extract_strided_slice %1 {offsets = [0, 24], sizes = [8, 8], strides = [1, 1]} : vector<8x32xf32> to vector<8x8xf32>
    %65 = vector.extract_strided_slice %3 {offsets = [0, 24], sizes = [8, 8], strides = [1, 1]} : vector<8x32xf32> to vector<8x8xf32>
    %66 = vector.extract_strided_slice %5 {offsets = [0, 24], sizes = [8, 8], strides = [1, 1]} : vector<8x32xf32> to vector<8x8xf32>
    %67 = tpu.transpose %65, [1, 0] : vector<8x8xf32> -> vector<8x8xf32>
    %cst_25 = arith.constant dense<0.000000e+00> : vector<8x8xf32>
    %68 = tpu.matmul %64, %67, %cst_25 {dimension_numbers = #tpu.dot_dimension_numbers<[1], [0], [0], [1], [0, 0, 1, 1], [], []>} : vector<8x8xf32>, vector<8x8xf32>, vector<8x8xf32> -> vector<8x8xf32>
    %cst_26 = arith.constant -1.000000e+09 : f32
    %69 = vector.broadcast %cst_26 : f32 to vector<8x8xf32>
    %70 = arith.select %9, %68, %69 : vector<8x8xi1>, vector<8x8xf32>
    %cst_27 = arith.constant dense<0xFF800000> : vector<8xf32>
    %71 = vector.multi_reduction <maximumf>, %70, %cst_27 [1] : vector<8x8xf32> to vector<8xf32>
    %72 = vector.shape_cast %71 : vector<8xf32> to vector<8x1xf32>
    %73 = vector.broadcast %72 : vector<8x1xf32> to vector<8x8xf32>
    %74 = arith.subf %70, %73 : vector<8x8xf32>
    %75 = math.exp %74 : vector<8x8xf32>
    %cst_28 = arith.constant dense<0.000000e+00> : vector<8xf32>
    %76 = vector.multi_reduction <add>, %75, %cst_28 [1] : vector<8x8xf32> to vector<8xf32>
    %77 = vector.shape_cast %76 : vector<8xf32> to vector<8x1xf32>
    %78 = tpu.reciprocal %77 {approx = true} : vector<8x1xf32> -> vector<8x1xf32>
    %cst_29 = arith.constant dense<0.000000e+00> : vector<8x8xf32>
    %79 = tpu.matmul %75, %66, %cst_29 {dimension_numbers = #tpu.dot_dimension_numbers<[1], [0], [0], [1], [0, 0, 1, 1], [], []>} : vector<8x8xf32>, vector<8x8xf32>, vector<8x8xf32> -> vector<8x8xf32>
    %80 = vector.broadcast %78 : vector<8x1xf32> to vector<8x8xf32>
    %81 = arith.mulf %79, %80 : vector<8x8xf32>
    %82 = tpu.concatenate %27, %45, %63, %81 in 1 : vector<8x8xf32>, vector<8x8xf32>, vector<8x8xf32>, vector<8x8xf32> -> vector<8x32xf32>
    %c0_30 = arith.constant 0 : index
    %c0_31 = arith.constant 0 : index
    %c0_32 = arith.constant 0 : index
    %83 = vector.load %arg5[%c0_30, %c0_31, %c0_32] : memref<1x8x32xf32, #tpu.memory_space<vmem>>, vector<1x8x32xf32>
    %84 = vector.shape_cast %83 : vector<1x8x32xf32> to vector<8x32xf32>
    %85 = vector.shape_cast %82 : vector<8x32xf32> to vector<1x8x32xf32>
    tpu.vector_store %arg5[%c0_30, %c0_31, %c0_32], %85 {strides = array<i32>} : memref<1x8x32xf32, #tpu.memory_space<vmem>>, vector<1x8x32xf32>,
    return
  }
  func.func @transform_0(%arg0: i32) -> (i32, i32, i32) {
    %c0_i32 = arith.constant 0 : i32
    %c0_i32_0 = arith.constant 0 : i32
    %c0_i32_1 = arith.constant 0 : i32
    return %arg0, %c0_i32, %c0_i32_0 : i32, i32, i32
  }
  func.func @transform_1(%arg0: i32) -> (i32, i32, i32) {
    %c0_i32 = arith.constant 0 : i32
    %c0_i32_0 = arith.constant 0 : i32
    %c0_i32_1 = arith.constant 0 : i32
    return %arg0, %c0_i32, %c0_i32_0 : i32, i32, i32
  }
  func.func @transform_2(%arg0: i32) -> (i32, i32, i32) {
    %c0_i32 = arith.constant 0 : i32
    %c0_i32_0 = arith.constant 0 : i32
    %c0_i32_1 = arith.constant 0 : i32
    return %arg0, %c0_i32, %c0_i32_0 : i32, i32, i32
  }
  func.func @transform_3(%arg0: i32) -> (i32, i32, i32) {
    %c0_i32 = arith.constant 0 : i32
    %c0_i32_0 = arith.constant 0 : i32
    %c0_i32_1 = arith.constant 0 : i32
    return %arg0, %c0_i32, %c0_i32_0 : i32, i32, i32
  }
  func.func @transform_4(%arg0: i32) -> (i32, i32, i32) {
    %c0_i32 = arith.constant 0 : i32
    %c0_i32_0 = arith.constant 0 : i32
    %c0_i32_1 = arith.constant 0 : i32
    return %arg0, %c0_i32, %c0_i32_0 : i32, i32, i32
  }
}

module attributes {stable_mosaic.version = 11 : i64} {
  func.func @_ffn_addln_kernel(%arg0: i32, %arg1: memref<16x32xf32, #tpu.memory_space<vmem>>, %arg2: memref<32x64xf32, #tpu.memory_space<vmem>>, %arg3: memref<1x64xf32, #tpu.memory_space<vmem>>, %arg4: memref<64x32xf32, #tpu.memory_space<vmem>>, %arg5: memref<1x32xf32, #tpu.memory_space<vmem>>, %arg6: memref<1x32xf32, #tpu.memory_space<vmem>>, %arg7: memref<1x32xf32, #tpu.memory_space<vmem>>, %arg8: memref<16x32xf32, #tpu.memory_space<vmem>>) attributes {dimension_semantics = [#tpu.dimension_semantics<parallel>], iteration_bounds = array<i64: 1>, scalar_prefetch = 0 : i64, scratch_operands = 0 : i64, tpu.core_type = #tpu.core_type<tc>, window_params = [{transform_indices = @transform_0, window_bounds = array<i64: 16, 32>}, {pipeline_mode = #tpu.pipeline_mode<synchronous>, transform_indices = @transform_1, window_bounds = array<i64: 32, 64>}, {pipeline_mode = #tpu.pipeline_mode<synchronous>, transform_indices = @transform_2, window_bounds = array<i64: 1, 64>}, {pipeline_mode = #tpu.pipeline_mode<synchronous>, transform_indices = @transform_3, window_bounds = array<i64: 64, 32>}, {pipeline_mode = #tpu.pipeline_mode<synchronous>, transform_indices = @transform_4, window_bounds = array<i64: 1, 32>}, {pipeline_mode = #tpu.pipeline_mode<synchronous>, transform_indices = @transform_5, window_bounds = array<i64: 1, 32>}, {pipeline_mode = #tpu.pipeline_mode<synchronous>, transform_indices = @transform_6, window_bounds = array<i64: 1, 32>}, {transform_indices = @transform_7, window_bounds = array<i64: 16, 32>}]} {
    %c0 = arith.constant 0 : index
    %c0_0 = arith.constant 0 : index
    %0 = vector.load %arg1[%c0, %c0_0] : memref<16x32xf32, #tpu.memory_space<vmem>>, vector<16x32xf32>
    %c0_1 = arith.constant 0 : index
    %c0_2 = arith.constant 0 : index
    %1 = vector.load %arg2[%c0_1, %c0_2] : memref<32x64xf32, #tpu.memory_space<vmem>>, vector<32x64xf32>
    %cst = arith.constant dense<0.000000e+00> : vector<16x64xf32>
    %2 = tpu.matmul %0, %1, %cst {dimension_numbers = #tpu.dot_dimension_numbers<[1], [0], [0], [1], [0, 0, 1, 1], [], []>} : vector<16x32xf32>, vector<32x64xf32>, vector<16x64xf32> -> vector<16x64xf32>
    %c0_3 = arith.constant 0 : index
    %c0_4 = arith.constant 0 : index
    %3 = vector.load %arg3[%c0_3, %c0_4] : memref<1x64xf32, #tpu.memory_space<vmem>>, vector<1x64xf32>
    %4 = vector.broadcast %3 : vector<1x64xf32> to vector<16x64xf32>
    %5 = arith.addf %2, %4 : vector<16x64xf32>
    %cst_5 = arith.constant 0.000000e+00 : f32
    %6 = vector.broadcast %cst_5 : f32 to vector<16x64xf32>
    %7 = arith.maximumf %5, %6 : vector<16x64xf32>
    %c0_6 = arith.constant 0 : index
    %c0_7 = arith.constant 0 : index
    %8 = vector.load %arg4[%c0_6, %c0_7] : memref<64x32xf32, #tpu.memory_space<vmem>>, vector<64x32xf32>
    %cst_8 = arith.constant dense<0.000000e+00> : vector<16x32xf32>
    %9 = tpu.matmul %7, %8, %cst_8 {dimension_numbers = #tpu.dot_dimension_numbers<[1], [0], [0], [1], [0, 0, 1, 1], [], []>} : vector<16x64xf32>, vector<64x32xf32>, vector<16x32xf32> -> vector<16x32xf32>
    %c0_9 = arith.constant 0 : index
    %c0_10 = arith.constant 0 : index
    %10 = vector.load %arg5[%c0_9, %c0_10] : memref<1x32xf32, #tpu.memory_space<vmem>>, vector<1x32xf32>
    %11 = vector.broadcast %10 : vector<1x32xf32> to vector<16x32xf32>
    %12 = arith.addf %9, %11 : vector<16x32xf32>
    %13 = arith.addf %12, %0 : vector<16x32xf32>
    %cst_11 = arith.constant dense<0.000000e+00> : vector<16xf32>
    %14 = vector.multi_reduction <add>, %13, %cst_11 [1] : vector<16x32xf32> to vector<16xf32>
    %15 = vector.shape_cast %14 : vector<16xf32> to vector<16x1xf32>
    %cst_12 = arith.constant 3.200000e+01 : f32
    %16 = vector.broadcast %cst_12 : f32 to vector<16x1xf32>
    %17 = arith.divf %15, %16 : vector<16x1xf32>
    %18 = vector.broadcast %17 : vector<16x1xf32> to vector<16x32xf32>
    %19 = arith.subf %13, %18 : vector<16x32xf32>
    %20 = arith.mulf %19, %19 : vector<16x32xf32>
    %cst_13 = arith.constant dense<0.000000e+00> : vector<16xf32>
    %21 = vector.multi_reduction <add>, %20, %cst_13 [1] : vector<16x32xf32> to vector<16xf32>
    %22 = vector.shape_cast %21 : vector<16xf32> to vector<16x1xf32>
    %cst_14 = arith.constant 3.200000e+01 : f32
    %23 = vector.broadcast %cst_14 : f32 to vector<16x1xf32>
    %24 = arith.divf %22, %23 : vector<16x1xf32>
    %25 = vector.broadcast %17 : vector<16x1xf32> to vector<16x32xf32>
    %26 = arith.subf %13, %25 : vector<16x32xf32>
    %cst_15 = arith.constant 9.99999974E-6 : f32
    %27 = vector.broadcast %cst_15 : f32 to vector<16x1xf32>
    %28 = arith.addf %24, %27 : vector<16x1xf32>
    %29 = math.rsqrt %28 : vector<16x1xf32>
    %30 = vector.broadcast %29 : vector<16x1xf32> to vector<16x32xf32>
    %31 = arith.mulf %26, %30 : vector<16x32xf32>
    %c0_16 = arith.constant 0 : index
    %c0_17 = arith.constant 0 : index
    %32 = vector.load %arg6[%c0_16, %c0_17] : memref<1x32xf32, #tpu.memory_space<vmem>>, vector<1x32xf32>
    %33 = vector.broadcast %32 : vector<1x32xf32> to vector<16x32xf32>
    %34 = arith.mulf %31, %33 : vector<16x32xf32>
    %c0_18 = arith.constant 0 : index
    %c0_19 = arith.constant 0 : index
    %35 = vector.load %arg7[%c0_18, %c0_19] : memref<1x32xf32, #tpu.memory_space<vmem>>, vector<1x32xf32>
    %36 = vector.broadcast %35 : vector<1x32xf32> to vector<16x32xf32>
    %37 = arith.addf %34, %36 : vector<16x32xf32>
    %c0_20 = arith.constant 0 : index
    %c0_21 = arith.constant 0 : index
    %38 = vector.load %arg8[%c0_20, %c0_21] : memref<16x32xf32, #tpu.memory_space<vmem>>, vector<16x32xf32>
    tpu.vector_store %arg8[%c0_20, %c0_21], %37 {strides = array<i32>} : memref<16x32xf32, #tpu.memory_space<vmem>>, vector<16x32xf32>,
    return
  }
  func.func @transform_0(%arg0: i32) -> (i32, i32) {
    %c0_i32 = arith.constant 0 : i32
    %c0_i32_0 = arith.constant 0 : i32
    return %arg0, %c0_i32 : i32, i32
  }
  func.func @transform_1(%arg0: i32) -> (i32, i32) {
    %c0_i32 = arith.constant 0 : i32
    %c0_i32_0 = arith.constant 0 : i32
    %c0_i32_1 = arith.constant 0 : i32
    return %c0_i32, %c0_i32_0 : i32, i32
  }
  func.func @transform_2(%arg0: i32) -> (i32, i32) {
    %c0_i32 = arith.constant 0 : i32
    %c0_i32_0 = arith.constant 0 : i32
    %c0_i32_1 = arith.constant 0 : i32
    return %c0_i32, %c0_i32_0 : i32, i32
  }
  func.func @transform_3(%arg0: i32) -> (i32, i32) {
    %c0_i32 = arith.constant 0 : i32
    %c0_i32_0 = arith.constant 0 : i32
    %c0_i32_1 = arith.constant 0 : i32
    return %c0_i32, %c0_i32_0 : i32, i32
  }
  func.func @transform_4(%arg0: i32) -> (i32, i32) {
    %c0_i32 = arith.constant 0 : i32
    %c0_i32_0 = arith.constant 0 : i32
    %c0_i32_1 = arith.constant 0 : i32
    return %c0_i32, %c0_i32_0 : i32, i32
  }
  func.func @transform_5(%arg0: i32) -> (i32, i32) {
    %c0_i32 = arith.constant 0 : i32
    %c0_i32_0 = arith.constant 0 : i32
    %c0_i32_1 = arith.constant 0 : i32
    return %c0_i32, %c0_i32_0 : i32, i32
  }
  func.func @transform_6(%arg0: i32) -> (i32, i32) {
    %c0_i32 = arith.constant 0 : i32
    %c0_i32_0 = arith.constant 0 : i32
    %c0_i32_1 = arith.constant 0 : i32
    return %c0_i32, %c0_i32_0 : i32, i32
  }
  func.func @transform_7(%arg0: i32) -> (i32, i32) {
    %c0_i32 = arith.constant 0 : i32
    %c0_i32_0 = arith.constant 0 : i32
    return %arg0, %c0_i32 : i32, i32
  }
}

module attributes {stable_mosaic.version = 11 : i64} {
  func.func @_linear_kernel(%arg0: i32, %arg1: i32, %arg2: i32, %arg3: memref<16x32xf32, #tpu.memory_space<vmem>>, %arg4: memref<32x64xf32, #tpu.memory_space<vmem>>, %arg5: memref<1x64xf32, #tpu.memory_space<vmem>>, %arg6: memref<16x64xf32, #tpu.memory_space<vmem>>, %arg7: memref<16x64xf32, #tpu.memory_space<vmem>>) attributes {dimension_semantics = [#tpu.dimension_semantics<parallel>, #tpu.dimension_semantics<parallel>, #tpu.dimension_semantics<arbitrary>], iteration_bounds = array<i64: 1, 1, 1>, scalar_prefetch = 0 : i64, scratch_operands = 1 : i64, tpu.core_type = #tpu.core_type<tc>, window_params = [{transform_indices = @transform_0, window_bounds = array<i64: 16, 32>}, {transform_indices = @transform_1, window_bounds = array<i64: 32, 64>}, {transform_indices = @transform_2, window_bounds = array<i64: 1, 64>}, {transform_indices = @transform_3, window_bounds = array<i64: 16, 64>}]} {
    %c0_i32 = arith.constant 0 : i32
    %0 = arith.cmpi eq, %arg2, %c0_i32 : i32
    %1 = arith.extui %0 : i1 to i32
    %c0_i32_0 = arith.constant 0 : i32
    %2 = arith.cmpi ne, %1, %c0_i32_0 : i32
    scf.if %2 {
      %cst_10 = arith.constant 0.000000e+00 : f32
      %12 = vector.broadcast %cst_10 : f32 to vector<16x64xf32>
      %c0_11 = arith.constant 0 : index
      %c0_12 = arith.constant 0 : index
      %13 = vector.load %arg7[%c0_11, %c0_12] : memref<16x64xf32, #tpu.memory_space<vmem>>, vector<16x64xf32>
      tpu.vector_store %arg7[%c0_11, %c0_12], %12 {strides = array<i32>} : memref<16x64xf32, #tpu.memory_space<vmem>>, vector<16x64xf32>,
    } else {
    }
    %c0 = arith.constant 0 : index
    %c0_1 = arith.constant 0 : index
    %3 = vector.load %arg7[%c0, %c0_1] : memref<16x64xf32, #tpu.memory_space<vmem>>, vector<16x64xf32>
    %c0_2 = arith.constant 0 : index
    %c0_3 = arith.constant 0 : index
    %4 = vector.load %arg3[%c0_2, %c0_3] : memref<16x32xf32, #tpu.memory_space<vmem>>, vector<16x32xf32>
    %c0_4 = arith.constant 0 : index
    %c0_5 = arith.constant 0 : index
    %5 = vector.load %arg4[%c0_4, %c0_5] : memref<32x64xf32, #tpu.memory_space<vmem>>, vector<32x64xf32>
    %cst = arith.constant dense<0.000000e+00> : vector<16x64xf32>
    %6 = tpu.matmul %4, %5, %cst {dimension_numbers = #tpu.dot_dimension_numbers<[1], [0], [0], [1], [0, 0, 1, 1], [], []>} : vector<16x32xf32>, vector<32x64xf32>, vector<16x64xf32> -> vector<16x64xf32>
    %7 = arith.addf %3, %6 : vector<16x64xf32>
    %c0_6 = arith.constant 0 : index
    %c0_7 = arith.constant 0 : index
    %8 = vector.load %arg7[%c0_6, %c0_7] : memref<16x64xf32, #tpu.memory_space<vmem>>, vector<16x64xf32>
    tpu.vector_store %arg7[%c0_6, %c0_7], %7 {strides = array<i32>} : memref<16x64xf32, #tpu.memory_space<vmem>>, vector<16x64xf32>,
    %c0_i32_8 = arith.constant 0 : i32
    %9 = arith.cmpi eq, %arg2, %c0_i32_8 : i32
    %10 = arith.extui %9 : i1 to i32
    %c0_i32_9 = arith.constant 0 : i32
    %11 = arith.cmpi ne, %10, %c0_i32_9 : i32
    scf.if %11 {
      %c0_10 = arith.constant 0 : index
      %c0_11 = arith.constant 0 : index
      %12 = vector.load %arg7[%c0_10, %c0_11] : memref<16x64xf32, #tpu.memory_space<vmem>>, vector<16x64xf32>
      %c0_12 = arith.constant 0 : index
      %c0_13 = arith.constant 0 : index
      %13 = vector.load %arg5[%c0_12, %c0_13] : memref<1x64xf32, #tpu.memory_space<vmem>>, vector<1x64xf32>
      %14 = vector.broadcast %13 : vector<1x64xf32> to vector<16x64xf32>
      %15 = arith.addf %12, %14 : vector<16x64xf32>
      %c0_14 = arith.constant 0 : index
      %c0_15 = arith.constant 0 : index
      %16 = vector.load %arg6[%c0_14, %c0_15] : memref<16x64xf32, #tpu.memory_space<vmem>>, vector<16x64xf32>
      tpu.vector_store %arg6[%c0_14, %c0_15], %15 {strides = array<i32>} : memref<16x64xf32, #tpu.memory_space<vmem>>, vector<16x64xf32>,
    } else {
    }
    return
  }
  func.func @transform_0(%arg0: i32, %arg1: i32, %arg2: i32) -> (i32, i32) {
    %c0_i32 = arith.constant 0 : i32
    return %arg0, %arg2 : i32, i32
  }
  func.func @transform_1(%arg0: i32, %arg1: i32, %arg2: i32) -> (i32, i32) {
    %c0_i32 = arith.constant 0 : i32
    return %arg2, %arg1 : i32, i32
  }
  func.func @transform_2(%arg0: i32, %arg1: i32, %arg2: i32) -> (i32, i32) {
    %c0_i32 = arith.constant 0 : i32
    %c0_i32_0 = arith.constant 0 : i32
    return %c0_i32, %arg1 : i32, i32
  }
  func.func @transform_3(%arg0: i32, %arg1: i32, %arg2: i32) -> (i32, i32) {
    %c0_i32 = arith.constant 0 : i32
    return %arg0, %arg1 : i32, i32
  }
}

module attributes {stable_mosaic.version = 11 : i64} {
  func.func @_linear_kernel(%arg0: i32, %arg1: i32, %arg2: i32, %arg3: memref<16x32xf32, #tpu.memory_space<vmem>>, %arg4: memref<32x32xf32, #tpu.memory_space<vmem>>, %arg5: memref<1x32xf32, #tpu.memory_space<vmem>>, %arg6: memref<16x32xf32, #tpu.memory_space<vmem>>, %arg7: memref<16x32xf32, #tpu.memory_space<vmem>>) attributes {dimension_semantics = [#tpu.dimension_semantics<parallel>, #tpu.dimension_semantics<parallel>, #tpu.dimension_semantics<arbitrary>], iteration_bounds = array<i64: 1, 1, 1>, scalar_prefetch = 0 : i64, scratch_operands = 1 : i64, tpu.core_type = #tpu.core_type<tc>, window_params = [{transform_indices = @transform_0, window_bounds = array<i64: 16, 32>}, {transform_indices = @transform_1, window_bounds = array<i64: 32, 32>}, {transform_indices = @transform_2, window_bounds = array<i64: 1, 32>}, {transform_indices = @transform_3, window_bounds = array<i64: 16, 32>}]} {
    %c0_i32 = arith.constant 0 : i32
    %0 = arith.cmpi eq, %arg2, %c0_i32 : i32
    %1 = arith.extui %0 : i1 to i32
    %c0_i32_0 = arith.constant 0 : i32
    %2 = arith.cmpi ne, %1, %c0_i32_0 : i32
    scf.if %2 {
      %cst_10 = arith.constant 0.000000e+00 : f32
      %12 = vector.broadcast %cst_10 : f32 to vector<16x32xf32>
      %c0_11 = arith.constant 0 : index
      %c0_12 = arith.constant 0 : index
      %13 = vector.load %arg7[%c0_11, %c0_12] : memref<16x32xf32, #tpu.memory_space<vmem>>, vector<16x32xf32>
      tpu.vector_store %arg7[%c0_11, %c0_12], %12 {strides = array<i32>} : memref<16x32xf32, #tpu.memory_space<vmem>>, vector<16x32xf32>,
    } else {
    }
    %c0 = arith.constant 0 : index
    %c0_1 = arith.constant 0 : index
    %3 = vector.load %arg7[%c0, %c0_1] : memref<16x32xf32, #tpu.memory_space<vmem>>, vector<16x32xf32>
    %c0_2 = arith.constant 0 : index
    %c0_3 = arith.constant 0 : index
    %4 = vector.load %arg3[%c0_2, %c0_3] : memref<16x32xf32, #tpu.memory_space<vmem>>, vector<16x32xf32>
    %c0_4 = arith.constant 0 : index
    %c0_5 = arith.constant 0 : index
    %5 = vector.load %arg4[%c0_4, %c0_5] : memref<32x32xf32, #tpu.memory_space<vmem>>, vector<32x32xf32>
    %cst = arith.constant dense<0.000000e+00> : vector<16x32xf32>
    %6 = tpu.matmul %4, %5, %cst {dimension_numbers = #tpu.dot_dimension_numbers<[1], [0], [0], [1], [0, 0, 1, 1], [], []>} : vector<16x32xf32>, vector<32x32xf32>, vector<16x32xf32> -> vector<16x32xf32>
    %7 = arith.addf %3, %6 : vector<16x32xf32>
    %c0_6 = arith.constant 0 : index
    %c0_7 = arith.constant 0 : index
    %8 = vector.load %arg7[%c0_6, %c0_7] : memref<16x32xf32, #tpu.memory_space<vmem>>, vector<16x32xf32>
    tpu.vector_store %arg7[%c0_6, %c0_7], %7 {strides = array<i32>} : memref<16x32xf32, #tpu.memory_space<vmem>>, vector<16x32xf32>,
    %c0_i32_8 = arith.constant 0 : i32
    %9 = arith.cmpi eq, %arg2, %c0_i32_8 : i32
    %10 = arith.extui %9 : i1 to i32
    %c0_i32_9 = arith.constant 0 : i32
    %11 = arith.cmpi ne, %10, %c0_i32_9 : i32
    scf.if %11 {
      %c0_10 = arith.constant 0 : index
      %c0_11 = arith.constant 0 : index
      %12 = vector.load %arg7[%c0_10, %c0_11] : memref<16x32xf32, #tpu.memory_space<vmem>>, vector<16x32xf32>
      %c0_12 = arith.constant 0 : index
      %c0_13 = arith.constant 0 : index
      %13 = vector.load %arg5[%c0_12, %c0_13] : memref<1x32xf32, #tpu.memory_space<vmem>>, vector<1x32xf32>
      %14 = vector.broadcast %13 : vector<1x32xf32> to vector<16x32xf32>
      %15 = arith.addf %12, %14 : vector<16x32xf32>
      %c0_14 = arith.constant 0 : index
      %c0_15 = arith.constant 0 : index
      %16 = vector.load %arg6[%c0_14, %c0_15] : memref<16x32xf32, #tpu.memory_space<vmem>>, vector<16x32xf32>
      tpu.vector_store %arg6[%c0_14, %c0_15], %15 {strides = array<i32>} : memref<16x32xf32, #tpu.memory_space<vmem>>, vector<16x32xf32>,
    } else {
    }
    return
  }
  func.func @transform_0(%arg0: i32, %arg1: i32, %arg2: i32) -> (i32, i32) {
    %c0_i32 = arith.constant 0 : i32
    return %arg0, %arg2 : i32, i32
  }
  func.func @transform_1(%arg0: i32, %arg1: i32, %arg2: i32) -> (i32, i32) {
    %c0_i32 = arith.constant 0 : i32
    return %arg2, %arg1 : i32, i32
  }
  func.func @transform_2(%arg0: i32, %arg1: i32, %arg2: i32) -> (i32, i32) {
    %c0_i32 = arith.constant 0 : i32
    %c0_i32_0 = arith.constant 0 : i32
    return %c0_i32, %arg1 : i32, i32
  }
  func.func @transform_3(%arg0: i32, %arg1: i32, %arg2: i32) -> (i32, i32) {
    %c0_i32 = arith.constant 0 : i32
    return %arg0, %arg1 : i32, i32
  }
}

module attributes {stable_mosaic.version = 11 : i64} {
  func.func @_linear_kernel(%arg0: i32, %arg1: i32, %arg2: i32, %arg3: memref<16x32xf32, #tpu.memory_space<vmem>>, %arg4: memref<32x32xf32, #tpu.memory_space<vmem>>, %arg5: memref<1x32xf32, #tpu.memory_space<vmem>>, %arg6: memref<16x32xf32, #tpu.memory_space<vmem>>, %arg7: memref<16x32xf32, #tpu.memory_space<vmem>>) attributes {dimension_semantics = [#tpu.dimension_semantics<parallel>, #tpu.dimension_semantics<parallel>, #tpu.dimension_semantics<arbitrary>], iteration_bounds = array<i64: 1, 1, 1>, scalar_prefetch = 0 : i64, scratch_operands = 1 : i64, tpu.core_type = #tpu.core_type<tc>, window_params = [{transform_indices = @transform_0, window_bounds = array<i64: 16, 32>}, {transform_indices = @transform_1, window_bounds = array<i64: 32, 32>}, {transform_indices = @transform_2, window_bounds = array<i64: 1, 32>}, {transform_indices = @transform_3, window_bounds = array<i64: 16, 32>}]} {
    %c0_i32 = arith.constant 0 : i32
    %0 = arith.cmpi eq, %arg2, %c0_i32 : i32
    %1 = arith.extui %0 : i1 to i32
    %c0_i32_0 = arith.constant 0 : i32
    %2 = arith.cmpi ne, %1, %c0_i32_0 : i32
    scf.if %2 {
      %cst_10 = arith.constant 0.000000e+00 : f32
      %12 = vector.broadcast %cst_10 : f32 to vector<16x32xf32>
      %c0_11 = arith.constant 0 : index
      %c0_12 = arith.constant 0 : index
      %13 = vector.load %arg7[%c0_11, %c0_12] : memref<16x32xf32, #tpu.memory_space<vmem>>, vector<16x32xf32>
      tpu.vector_store %arg7[%c0_11, %c0_12], %12 {strides = array<i32>} : memref<16x32xf32, #tpu.memory_space<vmem>>, vector<16x32xf32>,
    } else {
    }
    %c0 = arith.constant 0 : index
    %c0_1 = arith.constant 0 : index
    %3 = vector.load %arg7[%c0, %c0_1] : memref<16x32xf32, #tpu.memory_space<vmem>>, vector<16x32xf32>
    %c0_2 = arith.constant 0 : index
    %c0_3 = arith.constant 0 : index
    %4 = vector.load %arg3[%c0_2, %c0_3] : memref<16x32xf32, #tpu.memory_space<vmem>>, vector<16x32xf32>
    %c0_4 = arith.constant 0 : index
    %c0_5 = arith.constant 0 : index
    %5 = vector.load %arg4[%c0_4, %c0_5] : memref<32x32xf32, #tpu.memory_space<vmem>>, vector<32x32xf32>
    %cst = arith.constant dense<0.000000e+00> : vector<16x32xf32>
    %6 = tpu.matmul %4, %5, %cst {dimension_numbers = #tpu.dot_dimension_numbers<[1], [0], [0], [1], [0, 0, 1, 1], [], []>} : vector<16x32xf32>, vector<32x32xf32>, vector<16x32xf32> -> vector<16x32xf32>
    %7 = arith.addf %3, %6 : vector<16x32xf32>
    %c0_6 = arith.constant 0 : index
    %c0_7 = arith.constant 0 : index
    %8 = vector.load %arg7[%c0_6, %c0_7] : memref<16x32xf32, #tpu.memory_space<vmem>>, vector<16x32xf32>
    tpu.vector_store %arg7[%c0_6, %c0_7], %7 {strides = array<i32>} : memref<16x32xf32, #tpu.memory_space<vmem>>, vector<16x32xf32>,
    %c0_i32_8 = arith.constant 0 : i32
    %9 = arith.cmpi eq, %arg2, %c0_i32_8 : i32
    %10 = arith.extui %9 : i1 to i32
    %c0_i32_9 = arith.constant 0 : i32
    %11 = arith.cmpi ne, %10, %c0_i32_9 : i32
    scf.if %11 {
      %c0_10 = arith.constant 0 : index
      %c0_11 = arith.constant 0 : index
      %12 = vector.load %arg7[%c0_10, %c0_11] : memref<16x32xf32, #tpu.memory_space<vmem>>, vector<16x32xf32>
      %c0_12 = arith.constant 0 : index
      %c0_13 = arith.constant 0 : index
      %13 = vector.load %arg5[%c0_12, %c0_13] : memref<1x32xf32, #tpu.memory_space<vmem>>, vector<1x32xf32>
      %14 = vector.broadcast %13 : vector<1x32xf32> to vector<16x32xf32>
      %15 = arith.addf %12, %14 : vector<16x32xf32>
      %c0_14 = arith.constant 0 : index
      %c0_15 = arith.constant 0 : index
      %16 = vector.load %arg6[%c0_14, %c0_15] : memref<16x32xf32, #tpu.memory_space<vmem>>, vector<16x32xf32>
      tpu.vector_store %arg6[%c0_14, %c0_15], %15 {strides = array<i32>} : memref<16x32xf32, #tpu.memory_space<vmem>>, vector<16x32xf32>,
    } else {
    }
    return
  }
  func.func @transform_0(%arg0: i32, %arg1: i32, %arg2: i32) -> (i32, i32) {
    %c0_i32 = arith.constant 0 : i32
    return %arg0, %arg2 : i32, i32
  }
  func.func @transform_1(%arg0: i32, %arg1: i32, %arg2: i32) -> (i32, i32) {
    %c0_i32 = arith.constant 0 : i32
    return %arg2, %arg1 : i32, i32
  }
  func.func @transform_2(%arg0: i32, %arg1: i32, %arg2: i32) -> (i32, i32) {
    %c0_i32 = arith.constant 0 : i32
    %c0_i32_0 = arith.constant 0 : i32
    return %c0_i32, %arg1 : i32, i32
  }
  func.func @transform_3(%arg0: i32, %arg1: i32, %arg2: i32) -> (i32, i32) {
    %c0_i32 = arith.constant 0 : i32
    return %arg0, %arg1 : i32, i32
  }
}

</mosaic_0001>

<llo_original>
// kernel: transformer_forward.25
$region0: #{transformer_forward.25}
  #allocation0 [shape = 'u32[]', space=smem, size = 0x4, offset = 0x4, fixed_abs, tag = 'smem constant byte address 0x4 - core index']
  #allocation1 [shape = 'u32[144,128]{1,0:T(1,128)}', space=vmem, size = 0x12000, scoped, tag = 'internal scratch']
  #allocation2 [shape = 'f32[16,96]{1,0:T(8,128)}', space=vmem, size = 0x2000, scoped, tag = 'scratch operand']
  %s0 = inlined_call_operand.vmem [shape: f32[16,32], index: 0, kind: input, shape index: {}]
  %s1 = inlined_call_operand.vmem [shape: f32[32,96], index: 1, kind: input, shape index: {}]
  %s2 = inlined_call_operand.vmem [shape: f32[1,96], index: 2, kind: input, shape index: {}]
  %s3 = inlined_call_operand.vmem [shape: f32[16,96], index: 3, kind: output, shape index: {}]
  %s4 = sld [smem:[#allocation0]]
  $region30: #{transformer_forward.25} parent=0
    _
  %s6 = ssub.s32 1, %s4
  %s7 = scalar_select 0, %s6, %s4
  // Predicated region
  $region2: #{transformer_forward.25} parent=0 // pred_check
    _
  $region3: #{transformer_forward.25} parent=0 // pred_check_branch
    %9 = sbr.rel (0) target = $region5
  $region4: #{transformer_forward.25} parent=0 // pred_region
    _
  $region5: #{transformer_forward.25} parent=0 // pred_fallthru
    _
  // Predicated region
  $region6: #{transformer_forward.25} parent=0 // pred_check
    _
  $region7: #{transformer_forward.25} parent=0 // pred_check_branch
    %11 = sbr.rel (0) target = $region9
  $region8: #{transformer_forward.25} parent=0 // pred_region
    _
  $region9: #{transformer_forward.25} parent=0 // pred_fallthru
    _
  // Predicated region
  $region10: #{transformer_forward.25} parent=0 // pred_check
    _
  $region11: #{transformer_forward.25} parent=0 // pred_check_branch
    %13 = sbr.rel (0) target = $region13
  $region12: #{transformer_forward.25} parent=0 // pred_region
    _
  $region13: #{transformer_forward.25} parent=0 // pred_fallthru
    _
  %p14 = scmp.eq.s32.totalorder 0, 0
  // Predicated region
  $region14: #{transformer_forward.25} parent=0 // pred_check
    %p15 = pneg %p14
  $region15: #{transformer_forward.25} parent=0 // pred_check_branch
    %17 = sbr.rel (%p15) target = $region17
  $region16: #{transformer_forward.25} parent=0 // pred_region
    %vm18 = vcmask 785408
    %19 = vst.msk [vmem:[#allocation2] sm:$0xff] %vm18, 0.0
    %20 = vst.msk [vmem:[#allocation2 + $0x8] sm:$0xff] %vm18, 0.0
  $region17: #{transformer_forward.25} parent=0 // pred_fallthru
    _
  %v21 = vld [vmem:[#allocation2] sm:$0xff]
  %v22 = vld [vmem:[#allocation2 + $0x8] sm:$0xff]
  %v23 = vld [vmem:[%s0] sm:$0xff]
  %v24 = vld [vmem:[%s0 + $0x8] sm:$0xff]
  %v25 = vld [vmem:[%s1] sm:$0xff]
  %v26 = vld [vmem:[%s1 + $0x8] sm:$0xff]
  %v27 = vld [vmem:[%s1 + $0x10] sm:$0xff]
  %v28 = vld [vmem:[%s1 + $0x18] sm:$0xff]
  %vm29 = vcmask 261120
  %v31 = vsel %vm29, %v23, 0
  %v34 = vsel %vm29, %v24, 0
  %36 = vmatprep.subr.mxu0 0.0
  %37 = vmatpush1.msra.mxu0 %v25
  %38 = vmatprep.subr.mxu0 0.0
  %39 = vmatpush1.msra.mxu0 %v26
  %40 = vmatprep.subr.mxu0 0.0
  %41 = vmatpush1.msra.mxu0 %v27
  %42 = vmatprep.subr.mxu0 0.0
  %43 = vmatpush1.msra.mxu0 %v28
  %44 = vmatprep.subr.mxu0 0.0
  %45 = vmatpush1.msra.mxu0 0.0
  %46 = vmatprep.subr.mxu0 0.0
  %47 = vmatpush1.msra.mxu0 0.0
  %48 = vmatprep.subr.mxu0 0.0
  %49 = vmatpush1.msra.mxu0 0.0
  %50 = vmatprep.subr.mxu0 0.0
  %51 = vmatpush1.msra.mxu0 0.0
  %52 = vmatprep.subr.mxu0 0.0
  %53 = vmatpush1.msra.mxu0 0.0
  %54 = vmatprep.subr.mxu0 0.0
  %55 = vmatpush1.msra.mxu0 0.0
  %56 = vmatprep.subr.mxu0 0.0
  %57 = vmatpush1.msra.mxu0 0.0
  %58 = vmatprep.subr.mxu0 0.0
  %59 = vmatpush1.msra.mxu0 0.0
  %60 = vmatprep.subr.mxu0 0.0
  %61 = vmatpush1.msra.mxu0 0.0
  %62 = vmatprep.subr.mxu0 0.0
  %63 = vmatpush1.msra.mxu0 0.0
  %64 = vmatprep.subr.mxu0 0.0
  %65 = vmatpush1.msra.mxu0 0.0
  %66 = vmatprep.subr.mxu0 0.0
  %67 = vmatpush1.msra.mxu0 0.0
  %68 = vmatprep.subr.mxu0 0.0
  %69 = vmatpush1.msra.mxu0 0.0
  %70 = vmatprep.subr.mxu0 0.0
  %71 = vmatpush1.msra.mxu0 0.0
  %72 = vmatprep.subr.mxu0 0.0
  %73 = vmatpush1.msra.mxu0 0.0
  %74 = vmatprep.subr.mxu0 0.0
  %75 = vmatpush1.msra.mxu0 0.0
  %76 = vmatprep.subr.mxu0 0.0
  %77 = vmatpush1.msra.mxu0 0.0
  %78 = vmatprep.subr.mxu0 0.0
  %79 = vmatpush1.msra.mxu0 0.0
  %80 = vmatprep.subr.mxu0 0.0
  %81 = vmatpush1.msra.mxu0 0.0
  %82 = vmatprep.subr.mxu0 0.0
  %83 = vmatpush1.msra.mxu0 0.0
  %84 = vmatprep.subr.mxu0 0.0
  %85 = vmatpush1.msra.mxu0 0.0
  %86 = vmatprep.subr.mxu0 0.0
  %87 = vmatpush1.msra.mxu0 0.0
  %88 = vmatprep.subr.mxu0 0.0
  %89 = vmatpush1.msra.mxu0 0.0
  %90 = vmatprep.subr.mxu0 0.0
  %91 = vmatpush1.msra.mxu0 0.0
  %92 = vmatprep.subr.mxu0 0.0
  %93 = vmatpush1.msra.mxu0 0.0
  %94 = vmatprep.subr.mxu0 0.0
  %95 = vmatpush1.msra.mxu0 0.0
  %96 = vmatprep.subr.mxu0 0.0
  %97 = vmatpush1.msra.mxu0 0.0
  %98 = vmatprep.subr.mxu0 0.0
  %99 = vmatpush1.msra.mxu0 0.0
  %100 = vmatprep.mubr.f32.mxu0 0.0
  %101 = vmatmul.mubr.f32.gmra.mrb[0].mxu0 %v31
  %v102 = vpop.f32.mrb[0].mxu0
  %v103 = vadd.f32 0.0, %v102
  %v104 = vpop.f32.mrb[0].mxu0
  %105 = vmatprep.mubr.f32.mxu0 0.0
  %106 = vmatmul.mubr.f32.gmra.mrb[0].mxu0 %v34
  %v107 = vpop.f32.mrb[0].mxu0
  %v108 = vadd.f32 0.0, %v107
  %v109 = vpop.f32.mrb[0].mxu0
  %110 = vdwg.mxu0
  %v111 = vadd.f32 %v21, %v103
  %v112 = vadd.f32 %v22, %v108
  %vm113 = vcmask 785408
  %114 = vst.msk [vmem:[#allocation2] sm:$0xff] %vm113, %v111
  %115 = vst.msk [vmem:[#allocation2 + $0x8] sm:$0xff] %vm113, %v112
  // Predicated region
  $region18: #{transformer_forward.25} parent=0 // pred_check
    %p116 = pneg %p14
  $region19: #{transformer_forward.25} parent=0 // pred_check_branch
    %118 = sbr.rel (%p116) target = $region21
  $region20: #{transformer_forward.25} parent=0 // pred_region
    %v119 = vld [vmem:[#allocation2] sm:$0xff]
    %v120 = vld [vmem:[#allocation2 + $0x8] sm:$0xff]
    %v121 = vld [vmem:[%s2] sm:$0x1]
    %v123 = vlaneseq
    %v124 = vshrl.u32 %v123, 7
    %v125 = vsub.s32 0, %v124
    %v126 = vrot.slane %v121, %v125
    %v128 = vadd.f32 %v119, %v126
    %v129 = vadd.f32 %v120, %v126
    %130 = vst.msk [vmem:[%s3] sm:$0xff] %vm113, %v128
    %131 = vst.msk [vmem:[%s3 + $0x8] sm:$0xff] %vm113, %v129
  $region21: #{transformer_forward.25} parent=0 // pred_fallthru
    _
  // Predicated region
  $region22: #{transformer_forward.25} parent=0 // pred_check
    _
  $region23: #{transformer_forward.25} parent=0 // pred_check_branch
    %133 = sbr.rel (0) target = $region25
  $region24: #{transformer_forward.25} parent=0 // pred_region
    _
  $region25: #{transformer_forward.25} parent=0 // pred_fallthru
    _
  // Predicated region
  $region26: #{transformer_forward.25} parent=0 // pred_check
    _
  $region27: #{transformer_forward.25} parent=0 // pred_check_branch
    %135 = sbr.rel (0) target = $region29
  $region28: #{transformer_forward.25} parent=0 // pred_region
    _
  $region29: #{transformer_forward.25} parent=0 // pred_fallthru
    _

// kernel: transformer_forward.27
$region0: #{transformer_forward.27}
  #allocation0 [shape = 'u32[]', space=smem, size = 0x4, offset = 0x4, fixed_abs, tag = 'smem constant byte address 0x4 - core index']
  #allocation1 [shape = 'u32[144,128]{1,0:T(1,128)}', space=vmem, size = 0x12000, scoped, tag = 'internal scratch']
  #allocation2 [shape = 'f32[16,32]{1,0:T(8,128)}', space=vmem, size = 0x2000, scoped, tag = 'scratch operand']
  %s0 = inlined_call_operand.vmem [shape: f32[16,32], index: 0, kind: input, shape index: {}]
  %s1 = inlined_call_operand.vmem [shape: f32[32,32], index: 1, kind: input, shape index: {}]
  %s2 = inlined_call_operand.vmem [shape: f32[1,32], index: 2, kind: input, shape index: {}]
  %s3 = inlined_call_operand.vmem [shape: f32[16,32], index: 3, kind: input, shape index: {}]
  %s4 = inlined_call_operand.vmem [shape: f32[1,32], index: 4, kind: input, shape index: {}]
  %s5 = inlined_call_operand.vmem [shape: f32[1,32], index: 5, kind: input, shape index: {}]
  %s6 = inlined_call_operand.vmem [shape: f32[16,32], index: 6, kind: output, shape index: {}]
  %s7 = sld [smem:[#allocation0]]
  $region42: #{transformer_forward.27} parent=0
    _
  %s9 = ssub.s32 1, %s7
  %s10 = scalar_select 0, %s9, %s7
  // Predicated region
  $region2: #{transformer_forward.27} parent=0 // pred_check
    _
  $region3: #{transformer_forward.27} parent=0 // pred_check_branch
    %12 = sbr.rel (0) target = $region5
  $region4: #{transformer_forward.27} parent=0 // pred_region
    _
  $region5: #{transformer_forward.27} parent=0 // pred_fallthru
    _
  // Predicated region
  $region6: #{transformer_forward.27} parent=0 // pred_check
    _
  $region7: #{transformer_forward.27} parent=0 // pred_check_branch
    %14 = sbr.rel (0) target = $region9
  $region8: #{transformer_forward.27} parent=0 // pred_region
    _
  $region9: #{transformer_forward.27} parent=0 // pred_fallthru
    _
  // Predicated region
  $region10: #{transformer_forward.27} parent=0 // pred_check
    _
  $region11: #{transformer_forward.27} parent=0 // pred_check_branch
    %16 = sbr.rel (0) target = $region13
  $region12: #{transformer_forward.27} parent=0 // pred_region
    _
  $region13: #{transformer_forward.27} parent=0 // pred_fallthru
    _
  // Predicated region
  $region14: #{transformer_forward.27} parent=0 // pred_check
    _
  $region15: #{transformer_forward.27} parent=0 // pred_check_branch
    %18 = sbr.rel (0) target = $region17
  $region16: #{transformer_forward.27} parent=0 // pred_region
    _
  $region17: #{transformer_forward.27} parent=0 // pred_fallthru
    _
  // Predicated region
  $region18: #{transformer_forward.27} parent=0 // pred_check
    _
  $region19: #{transformer_forward.27} parent=0 // pred_check_branch
    %20 = sbr.rel (0) target = $region21
  $region20: #{transformer_forward.27} parent=0 // pred_region
    _
  $region21: #{transformer_forward.27} parent=0 // pred_fallthru
    _
  // Predicated region
  $region22: #{transformer_forward.27} parent=0 // pred_check
    _
  $region23: #{transformer_forward.27} parent=0 // pred_check_branch
    %22 = sbr.rel (0) target = $region25
  $region24: #{transformer_forward.27} parent=0 // pred_region
    _
  $region25: #{transformer_forward.27} parent=0 // pred_fallthru
    _
  %p23 = scmp.eq.s32.totalorder 0, 0
  // Predicated region
  $region26: #{transformer_forward.27} parent=0 // pred_check
    %p24 = pneg %p23
  $region27: #{transformer_forward.27} parent=0 // pred_check_branch
    %26 = sbr.rel (%p24) target = $region29
  $region28: #{transformer_forward.27} parent=0 // pred_region
    %vm27 = vcmask 261120
    %28 = vst.msk [vmem:[#allocation2] sm:$0xff] %vm27, 0.0
    %29 = vst.msk [vmem:[#allocation2 + $0x8] sm:$0xff] %vm27, 0.0
  $region29: #{transformer_forward.27} parent=0 // pred_fallthru
    _
  %v30 = vld [vmem:[#allocation2] sm:$0xff]
  %v31 = vld [vmem:[#allocation2 + $0x8] sm:$0xff]
  %v32 = vld [vmem:[%s0] sm:$0xff]
  %v33 = vld [vmem:[%s0 + $0x8] sm:$0xff]
  %v34 = vld [vmem:[%s1] sm:$0xff]
  %v35 = vld [vmem:[%s1 + $0x8] sm:$0xff]
  %v36 = vld [vmem:[%s1 + $0x10] sm:$0xff]
  %v37 = vld [vmem:[%s1 + $0x18] sm:$0xff]
  %vm38 = vcmask 261120
  %v40 = vsel %vm38, %v32, 0
  %v43 = vsel %vm38, %v33, 0
  %45 = vmatprep.subr.mxu0 0.0
  %46 = vmatpush1.msra.mxu0 %v34
  %47 = vmatprep.subr.mxu0 0.0
  %48 = vmatpush1.msra.mxu0 %v35
  %49 = vmatprep.subr.mxu0 0.0
  %50 = vmatpush1.msra.mxu0 %v36
  %51 = vmatprep.subr.mxu0 0.0
  %52 = vmatpush1.msra.mxu0 %v37
  %53 = vmatprep.subr.mxu0 0.0
  %54 = vmatpush1.msra.mxu0 0.0
  %55 = vmatprep.subr.mxu0 0.0
  %56 = vmatpush1.msra.mxu0 0.0
  %57 = vmatprep.subr.mxu0 0.0
  %58 = vmatpush1.msra.mxu0 0.0
  %59 = vmatprep.subr.mxu0 0.0
  %60 = vmatpush1.msra.mxu0 0.0
  %61 = vmatprep.subr.mxu0 0.0
  %62 = vmatpush1.msra.mxu0 0.0
  %63 = vmatprep.subr.mxu0 0.0
  %64 = vmatpush1.msra.mxu0 0.0
  %65 = vmatprep.subr.mxu0 0.0
  %66 = vmatpush1.msra.mxu0 0.0
  %67 = vmatprep.subr.mxu0 0.0
  %68 = vmatpush1.msra.mxu0 0.0
  %69 = vmatprep.subr.mxu0 0.0
  %70 = vmatpush1.msra.mxu0 0.0
  %71 = vmatprep.subr.mxu0 0.0
  %72 = vmatpush1.msra.mxu0 0.0
  %73 = vmatprep.subr.mxu0 0.0
  %74 = vmatpush1.msra.mxu0 0.0
  %75 = vmatprep.subr.mxu0 0.0
  %76 = vmatpush1.msra.mxu0 0.0
  %77 = vmatprep.subr.mxu0 0.0
  %78 = vmatpush1.msra.mxu0 0.0
  %79 = vmatprep.subr.mxu0 0.0
  %80 = vmatpush1.msra.mxu0 0.0
  %81 = vmatprep.subr.mxu0 0.0
  %82 = vmatpush1.msra.mxu0 0.0
  %83 = vmatprep.subr.mxu0 0.0
  %84 = vmatpush1.msra.mxu0 0.0
  %85 = vmatprep.subr.mxu0 0.0
  %86 = vmatpush1.msra.mxu0 0.0
  %87 = vmatprep.subr.mxu0 0.0
  %88 = vmatpush1.msra.mxu0 0.0
  %89 = vmatprep.subr.mxu0 0.0
  %90 = vmatpush1.msra.mxu0 0.0
  %91 = vmatprep.subr.mxu0 0.0
  %92 = vmatpush1.msra.mxu0 0.0
  %93 = vmatprep.subr.mxu0 0.0
  %94 = vmatpush1.msra.mxu0 0.0
  %95 = vmatprep.subr.mxu0 0.0
  %96 = vmatpush1.msra.mxu0 0.0
  %97 = vmatprep.subr.mxu0 0.0
  %98 = vmatpush1.msra.mxu0 0.0
  %99 = vmatprep.subr.mxu0 0.0
  %100 = vmatpush1.msra.mxu0 0.0
  %101 = vmatprep.subr.mxu0 0.0
  %102 = vmatpush1.msra.mxu0 0.0
  %103 = vmatprep.subr.mxu0 0.0
  %104 = vmatpush1.msra.mxu0 0.0
  %105 = vmatprep.subr.mxu0 0.0
  %106 = vmatpush1.msra.mxu0 0.0
  %107 = vmatprep.subr.mxu0 0.0
  %108 = vmatpush1.msra.mxu0 0.0
  %109 = vmatprep.mubr.f32.mxu0 0.0
  %110 = vmatmul.mubr.f32.gmra.mrb[0].mxu0 %v40
  %v111 = vpop.f32.mrb[0].mxu0
  %v112 = vadd.f32 0.0, %v111
  %v113 = vpop.f32.mrb[0].mxu0
  %114 = vmatprep.mubr.f32.mxu0 0.0
  %115 = vmatmul.mubr.f32.gmra.mrb[0].mxu0 %v43
  %v116 = vpop.f32.mrb[0].mxu0
  %v117 = vadd.f32 0.0, %v116
  %v118 = vpop.f32.mrb[0].mxu0
  %119 = vdwg.mxu0
  %v120 = vadd.f32 %v30, %v112
  %v121 = vadd.f32 %v31, %v117
  %122 = vst.msk [vmem:[#allocation2] sm:$0xff] %vm38, %v120
  %123 = vst.msk [vmem:[#allocation2 + $0x8] sm:$0xff] %vm38, %v121
  // Predicated region
  $region30: #{transformer_forward.27} parent=0 // pred_check
    %p124 = pneg %p23
  $region31: #{transformer_forward.27} parent=0 // pred_check_branch
    %126 = sbr.rel (%p124) target = $region33
  $region32: #{transformer_forward.27} parent=0 // pred_region
    %v127 = vld [vmem:[#allocation2] sm:$0xff]
    %v128 = vld [vmem:[#allocation2 + $0x8] sm:$0xff]
    %v129 = vld [vmem:[%s2] sm:$0x1]
    %v131 = vlaneseq
    %v132 = vshrl.u32 %v131, 7
    %v133 = vsub.s32 0, %v132
    %v134 = vrot.slane %v129, %v133
    %v136 = vadd.f32 %v127, %v134
    %v137 = vadd.f32 %v128, %v134
    %v138 = vld [vmem:[%s3] sm:$0xff]
    %v139 = vld [vmem:[%s3 + $0x8] sm:$0xff]
    %v140 = vadd.f32 %v136, %v138
    %v141 = vadd.f32 %v137, %v139
    %v142 = vsel %vm38, %v140, 0.0
    %143 = vadd.xlane.f32.xlu0 %v142
    %v144 = vpop.xlane.xlu0 %143
    %v145 = vsel %vm38, %v141, 0.0
    %146 = vadd.xlane.f32.xlu0 %v145
    %v147 = vpop.xlane.xlu0 %146
    %v148 = vrcp.pop 32.0
    %v149 = vmul.f32 %v144, %v148
    %v150 = vmul.f32 %v147, %v148
    %v151 = vsub.f32 %v140, %v149
    %v152 = vsub.f32 %v141, %v150
    %v153 = vmul.f32 %v151, %v151
    %v154 = vmul.f32 %v152, %v152
    %v155 = vsel %vm38, %v153, 0.0
    %156 = vadd.xlane.f32.xlu0 %v155
    %v157 = vpop.xlane.xlu0 %156
    %v158 = vsel %vm38, %v154, 0.0
    %159 = vadd.xlane.f32.xlu0 %v158
    %v160 = vpop.xlane.xlu0 %159
    %v161 = vmul.f32 %v157, %v148
    %v162 = vmul.f32 %v160, %v148
    %v163 = vadd.f32 %v161, 1e-05
    %v164 = vadd.f32 %v162, 1e-05
    %v165 = vrsqrt.pop %v163
    %v166 = vrsqrt.pop %v164
    %v167 = vmul.f32 %v151, %v165
    %v168 = vmul.f32 %v152, %v166
    %v169 = vld [vmem:[%s4] sm:$0x1]
    %v171 = vlaneseq
    %v172 = vshrl.u32 %v171, 7
    %v173 = vsub.s32 0, %v172
    %v174 = vrot.slane %v169, %v173
    %v176 = vmul.f32 %v167, %v174
    %v177 = vmul.f32 %v168, %v174
    %v178 = vld [vmem:[%s5] sm:$0x1]
    %v180 = vlaneseq
    %v181 = vshrl.u32 %v180, 7
    %v182 = vsub.s32 0, %v181
    %v183 = vrot.slane %v178, %v182
    %v185 = vadd.f32 %v176, %v183
    %v186 = vadd.f32 %v177, %v183
    %187 = vst.msk [vmem:[%s6] sm:$0xff] %vm38, %v185
    %188 = vst.msk [vmem:[%s6 + $0x8] sm:$0xff] %vm38, %v186
  $region33: #{transformer_forward.27} parent=0 // pred_fallthru
    _
  // Predicated region
  $region34: #{transformer_forward.27} parent=0 // pred_check
    _
  $region35: #{transformer_forward.27} parent=0 // pred_check_branch
    %190 = sbr.rel (0) target = $region37
  $region36: #{transformer_forward.27} parent=0 // pred_region
    _
  $region37: #{transformer_forward.27} parent=0 // pred_fallthru
    _
  // Predicated region
  $region38: #{transformer_forward.27} parent=0 // pred_check
    _
  $region39: #{transformer_forward.27} parent=0 // pred_check_branch
    %192 = sbr.rel (0) target = $region41
  $region40: #{transformer_forward.27} parent=0 // pred_region
    _
  $region41: #{transformer_forward.27} parent=0 // pred_fallthru
    _

// kernel: transformer_forward.28
$region0: #{transformer_forward.28}
  #allocation0 [shape = 'u32[]', space=smem, size = 0x4, offset = 0x4, fixed_abs, tag = 'smem constant byte address 0x4 - core index']
  #allocation1 [shape = 'u32[144,128]{1,0:T(1,128)}', space=vmem, size = 0x12000, scoped, tag = 'internal scratch']
  %s0 = inlined_call_operand.vmem [shape: f32[16,32], index: 0, kind: input, shape index: {}]
  %s1 = inlined_call_operand.vmem [shape: f32[32,64], index: 1, kind: input, shape index: {}]
  %s2 = inlined_call_operand.vmem [shape: f32[1,64], index: 2, kind: input, shape index: {}]
  %s3 = inlined_call_operand.vmem [shape: f32[64,32], index: 3, kind: input, shape index: {}]
  %s4 = inlined_call_operand.vmem [shape: f32[1,32], index: 4, kind: input, shape index: {}]
  %s5 = inlined_call_operand.vmem [shape: f32[1,32], index: 5, kind: input, shape index: {}]
  %s6 = inlined_call_operand.vmem [shape: f32[1,32], index: 6, kind: input, shape index: {}]
  %s7 = inlined_call_operand.vmem [shape: f32[16,32], index: 7, kind: output, shape index: {}]
  %s8 = sld [smem:[#allocation0]]
  $region38: #{transformer_forward.28} parent=0
    _
  %s10 = ssub.s32 1, %s8
  %s11 = scalar_select 0, %s10, %s8
  // Predicated region
  $region2: #{transformer_forward.28} parent=0 // pred_check
    _
  $region3: #{transformer_forward.28} parent=0 // pred_check_branch
    %13 = sbr.rel (0) target = $region5
  $region4: #{transformer_forward.28} parent=0 // pred_region
    _
  $region5: #{transformer_forward.28} parent=0 // pred_fallthru
    _
  // Predicated region
  $region6: #{transformer_forward.28} parent=0 // pred_check
    _
  $region7: #{transformer_forward.28} parent=0 // pred_check_branch
    %15 = sbr.rel (0) target = $region9
  $region8: #{transformer_forward.28} parent=0 // pred_region
    _
  $region9: #{transformer_forward.28} parent=0 // pred_fallthru
    _
  // Predicated region
  $region10: #{transformer_forward.28} parent=0 // pred_check
    _
  $region11: #{transformer_forward.28} parent=0 // pred_check_branch
    %17 = sbr.rel (0) target = $region13
  $region12: #{transformer_forward.28} parent=0 // pred_region
    _
  $region13: #{transformer_forward.28} parent=0 // pred_fallthru
    _
  // Predicated region
  $region14: #{transformer_forward.28} parent=0 // pred_check
    _
  $region15: #{transformer_forward.28} parent=0 // pred_check_branch
    %19 = sbr.rel (0) target = $region17
  $region16: #{transformer_forward.28} parent=0 // pred_region
    _
  $region17: #{transformer_forward.28} parent=0 // pred_fallthru
    _
  // Predicated region
  $region18: #{transformer_forward.28} parent=0 // pred_check
    _
  $region19: #{transformer_forward.28} parent=0 // pred_check_branch
    %21 = sbr.rel (0) target = $region21
  $region20: #{transformer_forward.28} parent=0 // pred_region
    _
  $region21: #{transformer_forward.28} parent=0 // pred_fallthru
    _
  // Predicated region
  $region22: #{transformer_forward.28} parent=0 // pred_check
    _
  $region23: #{transformer_forward.28} parent=0 // pred_check_branch
    %23 = sbr.rel (0) target = $region25
  $region24: #{transformer_forward.28} parent=0 // pred_region
    _
  $region25: #{transformer_forward.28} parent=0 // pred_fallthru
    _
  // Predicated region
  $region26: #{transformer_forward.28} parent=0 // pred_check
    _
  $region27: #{transformer_forward.28} parent=0 // pred_check_branch
    %25 = sbr.rel (0) target = $region29
  $region28: #{transformer_forward.28} parent=0 // pred_region
    _
  $region29: #{transformer_forward.28} parent=0 // pred_fallthru
    _
  %v26 = vld [vmem:[%s0] sm:$0xff]
  %v27 = vld [vmem:[%s0 + $0x8] sm:$0xff]
  %v28 = vld [vmem:[%s1] sm:$0xff]
  %v29 = vld [vmem:[%s1 + $0x8] sm:$0xff]
  %v30 = vld [vmem:[%s1 + $0x10] sm:$0xff]
  %v31 = vld [vmem:[%s1 + $0x18] sm:$0xff]
  %v32 = vld [vmem:[%s2] sm:$0x1]
  %v34 = vlaneseq
  %v35 = vshrl.u32 %v34, 7
  %v36 = vsub.s32 0, %v35
  %v37 = vrot.slane %v32, %v36
  %vm39 = vcmask 261120
  %v41 = vsel %vm39, %v26, 0
  %v44 = vsel %vm39, %v27, 0
  %46 = vmatprep.subr.mxu0 0.0
  %47 = vmatpush1.msra.mxu0 %v28
  %48 = vmatprep.subr.mxu0 0.0
  %49 = vmatpush1.msra.mxu0 %v29
  %50 = vmatprep.subr.mxu0 0.0
  %51 = vmatpush1.msra.mxu0 %v30
  %52 = vmatprep.subr.mxu0 0.0
  %53 = vmatpush1.msra.mxu0 %v31
  %54 = vmatprep.subr.mxu0 0.0
  %55 = vmatpush1.msra.mxu0 0.0
  %56 = vmatprep.subr.mxu0 0.0
  %57 = vmatpush1.msra.mxu0 0.0
  %58 = vmatprep.subr.mxu0 0.0
  %59 = vmatpush1.msra.mxu0 0.0
  %60 = vmatprep.subr.mxu0 0.0
  %61 = vmatpush1.msra.mxu0 0.0
  %62 = vmatprep.subr.mxu0 0.0
  %63 = vmatpush1.msra.mxu0 0.0
  %64 = vmatprep.subr.mxu0 0.0
  %65 = vmatpush1.msra.mxu0 0.0
  %66 = vmatprep.subr.mxu0 0.0
  %67 = vmatpush1.msra.mxu0 0.0
  %68 = vmatprep.subr.mxu0 0.0
  %69 = vmatpush1.msra.mxu0 0.0
  %70 = vmatprep.subr.mxu0 0.0
  %71 = vmatpush1.msra.mxu0 0.0
  %72 = vmatprep.subr.mxu0 0.0
  %73 = vmatpush1.msra.mxu0 0.0
  %74 = vmatprep.subr.mxu0 0.0
  %75 = vmatpush1.msra.mxu0 0.0
  %76 = vmatprep.subr.mxu0 0.0
  %77 = vmatpush1.msra.mxu0 0.0
  %78 = vmatprep.subr.mxu0 0.0
  %79 = vmatpush1.msra.mxu0 0.0
  %80 = vmatprep.subr.mxu0 0.0
  %81 = vmatpush1.msra.mxu0 0.0
  %82 = vmatprep.subr.mxu0 0.0
  %83 = vmatpush1.msra.mxu0 0.0
  %84 = vmatprep.subr.mxu0 0.0
  %85 = vmatpush1.msra.mxu0 0.0
  %86 = vmatprep.subr.mxu0 0.0
  %87 = vmatpush1.msra.mxu0 0.0
  %88 = vmatprep.subr.mxu0 0.0
  %89 = vmatpush1.msra.mxu0 0.0
  %90 = vmatprep.subr.mxu0 0.0
  %91 = vmatpush1.msra.mxu0 0.0
  %92 = vmatprep.subr.mxu0 0.0
  %93 = vmatpush1.msra.mxu0 0.0
  %94 = vmatprep.subr.mxu0 0.0
  %95 = vmatpush1.msra.mxu0 0.0
  %96 = vmatprep.subr.mxu0 0.0
  %97 = vmatpush1.msra.mxu0 0.0
  %98 = vmatprep.subr.mxu0 0.0
  %99 = vmatpush1.msra.mxu0 0.0
  %100 = vmatprep.subr.mxu0 0.0
  %101 = vmatpush1.msra.mxu0 0.0
  %102 = vmatprep.subr.mxu0 0.0
  %103 = vmatpush1.msra.mxu0 0.0
  %104 = vmatprep.subr.mxu0 0.0
  %105 = vmatpush1.msra.mxu0 0.0
  %106 = vmatprep.subr.mxu0 0.0
  %107 = vmatpush1.msra.mxu0 0.0
  %108 = vmatprep.subr.mxu0 0.0
  %109 = vmatpush1.msra.mxu0 0.0
  %110 = vmatprep.mubr.f32.mxu0 0.0
  %111 = vmatmul.mubr.f32.gmra.mrb[0].mxu0 %v41
  %v112 = vpop.f32.mrb[0].mxu0
  %v113 = vadd.f32 %v37, %v112
  %v114 = vpop.f32.mrb[0].mxu0
  %115 = vmatprep.mubr.f32.mxu0 0.0
  %116 = vmatmul.mubr.f32.gmra.mrb[0].mxu0 %v44
  %v117 = vpop.f32.mrb[0].mxu0
  %v118 = vadd.f32 %v37, %v117
  %v119 = vpop.f32.mrb[0].mxu0
  %120 = vdwg.mxu0
  %v121 = vmax.f32 %v113, 0.0
  %v122 = vmax.f32 %v118, 0.0
  %v123 = vld [vmem:[%s3] sm:$0xff]
  %v124 = vld [vmem:[%s3 + $0x8] sm:$0xff]
  %v125 = vld [vmem:[%s3 + $0x10] sm:$0xff]
  %v126 = vld [vmem:[%s3 + $0x18] sm:$0xff]
  %v127 = vld [vmem:[%s3 + $0x20] sm:$0xff]
  %v128 = vld [vmem:[%s3 + $0x28] sm:$0xff]
  %v129 = vld [vmem:[%s3 + $0x30] sm:$0xff]
  %v130 = vld [vmem:[%s3 + $0x38] sm:$0xff]
  %v131 = vld [vmem:[%s4] sm:$0x1]
  %v133 = vlaneseq
  %v134 = vshrl.u32 %v133, 7
  %v135 = vsub.s32 0, %v134
  %v136 = vrot.slane %v131, %v135
  %vm138 = vcmask 523264
  %v140 = vsel %vm138, %v121, 0
  %v143 = vsel %vm138, %v122, 0
  %145 = vmatprep.subr.mxu0 0.0
  %146 = vmatpush1.msra.mxu0 %v123
  %147 = vmatprep.subr.mxu0 0.0
  %148 = vmatpush1.msra.mxu0 %v124
  %149 = vmatprep.subr.mxu0 0.0
  %150 = vmatpush1.msra.mxu0 %v125
  %151 = vmatprep.subr.mxu0 0.0
  %152 = vmatpush1.msra.mxu0 %v126
  %153 = vmatprep.subr.mxu0 0.0
  %154 = vmatpush1.msra.mxu0 %v127
  %155 = vmatprep.subr.mxu0 0.0
  %156 = vmatpush1.msra.mxu0 %v128
  %157 = vmatprep.subr.mxu0 0.0
  %158 = vmatpush1.msra.mxu0 %v129
  %159 = vmatprep.subr.mxu0 0.0
  %160 = vmatpush1.msra.mxu0 %v130
  %161 = vmatprep.subr.mxu0 0.0
  %162 = vmatpush1.msra.mxu0 0.0
  %163 = vmatprep.subr.mxu0 0.0
  %164 = vmatpush1.msra.mxu0 0.0
  %165 = vmatprep.subr.mxu0 0.0
  %166 = vmatpush1.msra.mxu0 0.0
  %167 = vmatprep.subr.mxu0 0.0
  %168 = vmatpush1.msra.mxu0 0.0
  %169 = vmatprep.subr.mxu0 0.0
  %170 = vmatpush1.msra.mxu0 0.0
  %171 = vmatprep.subr.mxu0 0.0
  %172 = vmatpush1.msra.mxu0 0.0
  %173 = vmatprep.subr.mxu0 0.0
  %174 = vmatpush1.msra.mxu0 0.0
  %175 = vmatprep.subr.mxu0 0.0
  %176 = vmatpush1.msra.mxu0 0.0
  %177 = vmatprep.subr.mxu0 0.0
  %178 = vmatpush1.msra.mxu0 0.0
  %179 = vmatprep.subr.mxu0 0.0
  %180 = vmatpush1.msra.mxu0 0.0
  %181 = vmatprep.subr.mxu0 0.0
  %182 = vmatpush1.msra.mxu0 0.0
  %183 = vmatprep.subr.mxu0 0.0
  %184 = vmatpush1.msra.mxu0 0.0
  %185 = vmatprep.subr.mxu0 0.0
  %186 = vmatpush1.msra.mxu0 0.0
  %187 = vmatprep.subr.mxu0 0.0
  %188 = vmatpush1.msra.mxu0 0.0
  %189 = vmatprep.subr.mxu0 0.0
  %190 = vmatpush1.msra.mxu0 0.0
  %191 = vmatprep.subr.mxu0 0.0
  %192 = vmatpush1.msra.mxu0 0.0
  %193 = vmatprep.subr.mxu0 0.0
  %194 = vmatpush1.msra.mxu0 0.0
  %195 = vmatprep.subr.mxu0 0.0
  %196 = vmatpush1.msra.mxu0 0.0
  %197 = vmatprep.subr.mxu0 0.0
  %198 = vmatpush1.msra.mxu0 0.0
  %199 = vmatprep.subr.mxu0 0.0
  %200 = vmatpush1.msra.mxu0 0.0
  %201 = vmatprep.subr.mxu0 0.0
  %202 = vmatpush1.msra.mxu0 0.0
  %203 = vmatprep.subr.mxu0 0.0
  %204 = vmatpush1.msra.mxu0 0.0
  %205 = vmatprep.subr.mxu0 0.0
  %206 = vmatpush1.msra.mxu0 0.0
  %207 = vmatprep.subr.mxu0 0.0
  %208 = vmatpush1.msra.mxu0 0.0
  %209 = vmatprep.mubr.f32.mxu0 0.0
  %210 = vmatmul.mubr.f32.gmra.mrb[0].mxu0 %v140
  %v211 = vpop.f32.mrb[0].mxu0
  %v212 = vadd.f32 %v136, %v211
  %v213 = vpop.f32.mrb[0].mxu0
  %214 = vmatprep.mubr.f32.mxu0 0.0
  %215 = vmatmul.mubr.f32.gmra.mrb[0].mxu0 %v143
  %v216 = vpop.f32.mrb[0].mxu0
  %v217 = vadd.f32 %v136, %v216
  %v218 = vpop.f32.mrb[0].mxu0
  %219 = vdwg.mxu0
  %v220 = vadd.f32 %v212, %v26
  %v221 = vadd.f32 %v217, %v27
  %v222 = vsel %vm39, %v220, 0.0
  %223 = vadd.xlane.f32.xlu0 %v222
  %v224 = vpop.xlane.xlu0 %223
  %v225 = vsel %vm39, %v221, 0.0
  %226 = vadd.xlane.f32.xlu0 %v225
  %v227 = vpop.xlane.xlu0 %226
  %v228 = vrcp.pop 32.0
  %v229 = vmul.f32 %v224, %v228
  %v230 = vmul.f32 %v227, %v228
  %v231 = vsub.f32 %v220, %v229
  %v232 = vsub.f32 %v221, %v230
  %v233 = vmul.f32 %v231, %v231
  %v234 = vmul.f32 %v232, %v232
  %v235 = vsel %vm39, %v233, 0.0
  %236 = vadd.xlane.f32.xlu0 %v235
  %v237 = vpop.xlane.xlu0 %236
  %v238 = vsel %vm39, %v234, 0.0
  %239 = vadd.xlane.f32.xlu0 %v238
  %v240 = vpop.xlane.xlu0 %239
  %v241 = vmul.f32 %v237, %v228
  %v242 = vmul.f32 %v240, %v228
  %v243 = vadd.f32 %v241, 1e-05
  %v244 = vadd.f32 %v242, 1e-05
  %v245 = vrsqrt.pop %v243
  %v246 = vrsqrt.pop %v244
  %v247 = vmul.f32 %v231, %v245
  %v248 = vmul.f32 %v232, %v246
  %v249 = vld [vmem:[%s5] sm:$0x1]
  %v251 = vlaneseq
  %v252 = vshrl.u32 %v251, 7
  %v253 = vsub.s32 0, %v252
  %v254 = vrot.slane %v249, %v253
  %v256 = vmul.f32 %v247, %v254
  %v257 = vmul.f32 %v248, %v254
  %v258 = vld [vmem:[%s6] sm:$0x1]
  %v260 = vlaneseq
  %v261 = vshrl.u32 %v260, 7
  %v262 = vsub.s32 0, %v261
  %v263 = vrot.slane %v258, %v262
  %v265 = vadd.f32 %v256, %v263
  %v266 = vadd.f32 %v257, %v263
  %267 = vst.msk [vmem:[%s7] sm:$0xff] %vm39, %v265
  %268 = vst.msk [vmem:[%s7 + $0x8] sm:$0xff] %vm39, %v266
  // Predicated region
  $region30: #{transformer_forward.28} parent=0 // pred_check
    _
  $region31: #{transformer_forward.28} parent=0 // pred_check_branch
    %270 = sbr.rel (0) target = $region33
  $region32: #{transformer_forward.28} parent=0 // pred_region
    _
  $region33: #{transformer_forward.28} parent=0 // pred_fallthru
    _
  // Predicated region
  $region34: #{transformer_forward.28} parent=0 // pred_check
    _
  $region35: #{transformer_forward.28} parent=0 // pred_check_branch
    %272 = sbr.rel (0) target = $region37
  $region36: #{transformer_forward.28} parent=0 // pred_region
    _
  $region37: #{transformer_forward.28} parent=0 // pred_fallthru
    _

// kernel: transformer_forward.26
$region0: #{transformer_forward.26}
  #allocation0 [shape = 'u32[]', space=smem, size = 0x4, offset = 0x4, fixed_abs, tag = 'smem constant byte address 0x4 - core index']
  #allocation1 [shape = 'u32[144,128]{1,0:T(1,128)}', space=vmem, size = 0x12000, scoped, tag = 'internal scratch']
  %s0 = inlined_call_operand.vmem [shape: f32[2,8,32], index: 0, kind: input, shape index: {}]
  %s1 = inlined_call_operand.vmem [shape: f32[2,8,32], index: 1, kind: input, shape index: {}]
  %s2 = inlined_call_operand.vmem [shape: f32[2,8,32], index: 2, kind: input, shape index: {}]
  %s3 = inlined_call_operand.vmem [shape: s32[2,8,8], index: 3, kind: input, shape index: {}]
  %s4 = inlined_call_operand.vmem [shape: f32[2,8,32], index: 4, kind: output, shape index: {}]
  %s5 = sld [smem:[#allocation0]]
  $region49: #{transformer_forward.26} parent=0
    _
  %s7 = ssub.s32 1, %s5
  %s8 = scalar_select 0, %s7, %s5
  loop: start=0, step=1, limit=4
  $region2: #{transformer_forward.26} parent=0 // loop_pre_header
    _
  $region3: #{transformer_forward.26} parent=0 // loop_header
    %s10 = sphi 0, %s14
    %p11 = scmp.ge.s32.totalorder %s10, 4
    %s20 = sphi 0, %s22
    %s23 = sphi 0, %s20
    %s24 = sphi 0, %s23
    %s40 = sphi 0, %s24
    %s46 = sphi 0, %s48
    %s49 = sphi 0, %s46
    %s50 = sphi 0, %s49
    %s66 = sphi 0, %s50
    %s72 = sphi 0, %s74
    %s75 = sphi 0, %s72
    %s76 = sphi 0, %s75
    %s92 = sphi 0, %s76
    %s98 = sphi 0, %s100
    %s101 = sphi 0, %s98
    %s102 = sphi 0, %s101
    %s118 = sphi 0, %s102
    %s124 = sphi 0, %s126
    %s127 = sphi 0, %s124
    %s128 = sphi 0, %s127
    %s144 = sphi 0, %s128
  $region4: #{transformer_forward.26} parent=0 // loop_header_branch
    %13 = sbr.rel (%p11) target = $region8
  $region5: #{transformer_forward.26} parent=0 // loop_body
    %s15 = ssub.s32 %s10, 1
    %s16 = ssub.s32 %s10, 2
    %s17 = sadd.s32 %s10, 1
    %s18 = ssub.s32 %s10, %s17
    %p19 = scmp.eq.s32.totalorder %s18, 0
    %s21 = sadd.s32 %s20, 1
    %s22 = scalar_select %p19, %s20, %s21
    %p25 = pneg %p19
    %p26 = scmp.eq.s32.totalorder %s10, 1
    %p27 = por %p25, %p26
    %p28 = scmp.ne.s32.totalorder %s20, %s23
    %p29 = scmp.eq.s32.totalorder %s10, 0
    %p30 = por %p28, %p29
    %p31 = scmp.ne.s32.totalorder %s20, %s23
    %p32 = scmp.eq.s32.totalorder %s15, 1
    %p33 = por %p31, %p32
    %p34 = scmp.ne.s32.totalorder %s23, %s24
    %p35 = scmp.eq.s32.totalorder %s15, 0
    %p36 = por %p34, %p35
    %p37 = scmp.ne.s32.totalorder %s23, %s24
    %p38 = scmp.eq.s32.totalorder %s16, 1
    %p39 = por %p37, %p38
    %p41 = scmp.ne.s32.totalorder %s24, %s40
    %p42 = scmp.eq.s32.totalorder %s16, 0
    %p43 = por %p41, %p42
    %s44 = ssub.s32 %s10, %s17
    %p45 = scmp.eq.s32.totalorder %s44, 0
    %s47 = sadd.s32 %s46, 1
    %s48 = scalar_select %p45, %s46, %s47
    %p51 = pneg %p45
    %p52 = scmp.eq.s32.totalorder %s10, 1
    %p53 = por %p51, %p52
    %p54 = scmp.ne.s32.totalorder %s46, %s49
    %p55 = scmp.eq.s32.totalorder %s10, 0
    %p56 = por %p54, %p55
    %p57 = scmp.ne.s32.totalorder %s46, %s49
    %p58 = scmp.eq.s32.totalorder %s15, 1
    %p59 = por %p57, %p58
    %p60 = scmp.ne.s32.totalorder %s49, %s50
    %p61 = scmp.eq.s32.totalorder %s15, 0
    %p62 = por %p60, %p61
    %p63 = scmp.ne.s32.totalorder %s49, %s50
    %p64 = scmp.eq.s32.totalorder %s16, 1
    %p65 = por %p63, %p64
    %p67 = scmp.ne.s32.totalorder %s50, %s66
    %p68 = scmp.eq.s32.totalorder %s16, 0
    %p69 = por %p67, %p68
    %s70 = ssub.s32 %s10, %s17
    %p71 = scmp.eq.s32.totalorder %s70, 0
    %s73 = sadd.s32 %s72, 1
    %s74 = scalar_select %p71, %s72, %s73
    %p77 = pneg %p71
    %p78 = scmp.eq.s32.totalorder %s10, 1
    %p79 = por %p77, %p78
    %p80 = scmp.ne.s32.totalorder %s72, %s75
    %p81 = scmp.eq.s32.totalorder %s10, 0
    %p82 = por %p80, %p81
    %p83 = scmp.ne.s32.totalorder %s72, %s75
    %p84 = scmp.eq.s32.totalorder %s15, 1
    %p85 = por %p83, %p84
    %p86 = scmp.ne.s32.totalorder %s75, %s76
    %p87 = scmp.eq.s32.totalorder %s15, 0
    %p88 = por %p86, %p87
    %p89 = scmp.ne.s32.totalorder %s75, %s76
    %p90 = scmp.eq.s32.totalorder %s16, 1
    %p91 = por %p89, %p90
    %p93 = scmp.ne.s32.totalorder %s76, %s92
    %p94 = scmp.eq.s32.totalorder %s16, 0
    %p95 = por %p93, %p94
    %s96 = ssub.s32 %s10, %s17
    %p97 = scmp.eq.s32.totalorder %s96, 0
    %s99 = sadd.s32 %s98, 1
    %s100 = scalar_select %p97, %s98, %s99
    %p103 = pneg %p97
    %p104 = scmp.eq.s32.totalorder %s10, 1
    %p105 = por %p103, %p104
    %p106 = scmp.ne.s32.totalorder %s98, %s101
    %p107 = scmp.eq.s32.totalorder %s10, 0
    %p108 = por %p106, %p107
    %p109 = scmp.ne.s32.totalorder %s98, %s101
    %p110 = scmp.eq.s32.totalorder %s15, 1
    %p111 = por %p109, %p110
    %p112 = scmp.ne.s32.totalorder %s101, %s102
    %p113 = scmp.eq.s32.totalorder %s15, 0
    %p114 = por %p112, %p113
    %p115 = scmp.ne.s32.totalorder %s101, %s102
    %p116 = scmp.eq.s32.totalorder %s16, 1
    %p117 = por %p115, %p116
    %p119 = scmp.ne.s32.totalorder %s102, %s118
    %p120 = scmp.eq.s32.totalorder %s16, 0
    %p121 = por %p119, %p120
    %s122 = ssub.s32 %s10, %s17
    %p123 = scmp.eq.s32.totalorder %s122, 0
    %s125 = sadd.s32 %s124, 1
    %s126 = scalar_select %p123, %s124, %s125
    %p129 = pneg %p123
    %p130 = scmp.eq.s32.totalorder %s10, 1
    %p131 = por %p129, %p130
    %p132 = scmp.ne.s32.totalorder %s124, %s127
    %p133 = scmp.eq.s32.totalorder %s10, 0
    %p134 = por %p132, %p133
    %p135 = scmp.ne.s32.totalorder %s124, %s127
    %p136 = scmp.eq.s32.totalorder %s15, 1
    %p137 = por %p135, %p136
    %p138 = scmp.ne.s32.totalorder %s127, %s128
    %p139 = scmp.eq.s32.totalorder %s15, 0
    %p140 = por %p138, %p139
    %p141 = scmp.ne.s32.totalorder %s127, %s128
    %p142 = scmp.eq.s32.totalorder %s16, 1
    %p143 = por %p141, %p142
    %p145 = scmp.ne.s32.totalorder %s128, %s144
    %p146 = scmp.eq.s32.totalorder %s16, 0
    %p147 = por %p145, %p146
    %p148 = scmp.le.s32.totalorder 1, %s10
    %p149 = scmp.lt.s32.totalorder %s10, 3
    %p150 = pnand %p148, %p149
    %p151 = pneg %p150
    // Predicated region
    $region9: #{transformer_forward.26} parent=5 // pred_check
      _
    $region10: #{transformer_forward.26} parent=5 // pred_check_branch
      %153 = sbr.rel (%p150) target = $region12
    $region11: #{transformer_forward.26} parent=5 // pred_region
      %s154 = ssub.s32 %s10, 1
    $region12: #{transformer_forward.26} parent=5 // pred_fallthru
      _
    %p155 = scmp.lt.s32.totalorder %s10, 2
    // Predicated region
    $region13: #{transformer_forward.26} parent=5 // pred_check
      %p156 = pneg %p155
    $region14: #{transformer_forward.26} parent=5 // pred_check_branch
      %158 = sbr.rel (%p156) target = $region16
    $region15: #{transformer_forward.26} parent=5 // pred_region
      // Predicated region
      $region17: #{transformer_forward.26} parent=15 // pred_check
        %p159 = pneg %p30
      $region18: #{transformer_forward.26} parent=15 // pred_check_branch
        %161 = sbr.rel (%p159) target = $region20
      $region19: #{transformer_forward.26} parent=15 // pred_region
        %p162 = scmp.lt.s32.totalorder %s10, 1
        %s163 = scalar_select %p162, %s10, 1
        %s164 = smul.addr %s163, 8
        %s165 = scalar_lea.vmem %s0, %s164
      $region20: #{transformer_forward.26} parent=15 // pred_fallthru
        _
      // Predicated region
      $region21: #{transformer_forward.26} parent=15 // pred_check
        %p166 = pneg %p56
      $region22: #{transformer_forward.26} parent=15 // pred_check_branch
        %168 = sbr.rel (%p166) target = $region24
      $region23: #{transformer_forward.26} parent=15 // pred_region
        %p169 = scmp.lt.s32.totalorder %s10, 1
        %s170 = scalar_select %p169, %s10, 1
        %s171 = smul.addr %s170, 8
        %s172 = scalar_lea.vmem %s1, %s171
      $region24: #{transformer_forward.26} parent=15 // pred_fallthru
        _
      // Predicated region
      $region25: #{transformer_forward.26} parent=15 // pred_check
        %p173 = pneg %p82
      $region26: #{transformer_forward.26} parent=15 // pred_check_branch
        %175 = sbr.rel (%p173) target = $region28
      $region27: #{transformer_forward.26} parent=15 // pred_region
        %p176 = scmp.lt.s32.totalorder %s10, 1
        %s177 = scalar_select %p176, %s10, 1
        %s178 = smul.addr %s177, 8
        %s179 = scalar_lea.vmem %s2, %s178
      $region28: #{transformer_forward.26} parent=15 // pred_fallthru
        _
      // Predicated region
      $region29: #{transformer_forward.26} parent=15 // pred_check
        %p180 = pneg %p108
      $region30: #{transformer_forward.26} parent=15 // pred_check_branch
        %182 = sbr.rel (%p180) target = $region32
      $region31: #{transformer_forward.26} parent=15 // pred_region
        %p183 = scmp.lt.s32.totalorder %s10, 1
        %s184 = scalar_select %p183, %s10, 1
        %s185 = smul.addr %s184, 8
        %s186 = scalar_lea.vmem %s3, %s185
      $region32: #{transformer_forward.26} parent=15 // pred_fallthru
        _
    $region16: #{transformer_forward.26} parent=5 // pred_fallthru
      _
    %p187 = scmp.le.s32.totalorder 1, %s10
    %p188 = scmp.lt.s32.totalorder %s10, 3
    %p189 = pnand %p187, %p188
    %p190 = pneg %p189
    // Predicated region
    $region33: #{transformer_forward.26} parent=5 // pred_check
      _
    $region34: #{transformer_forward.26} parent=5 // pred_check_branch
      %192 = sbr.rel (%p189) target = $region36
    $region35: #{transformer_forward.26} parent=5 // pred_region
      %s193 = ssub.s32 %s10, 1
      %p194 = scmp.lt.s32.totalorder %s15, 1
      %s195 = scalar_select %p194, %s15, 1
      %s196 = smul.addr %s195, 8
      %s197 = scalar_lea.vmem %s0, %s196
      %p198 = pneg %p36
      %p199 = pneg %p33
      %p200 = scmp.lt.s32.totalorder %s15, 1
      %s201 = scalar_select %p200, %s15, 1
      %s202 = smul.addr %s201, 8
      %s203 = scalar_lea.vmem %s1, %s202
      %p204 = pneg %p62
      %p205 = pneg %p59
      %p206 = scmp.lt.s32.totalorder %s15, 1
      %s207 = scalar_select %p206, %s15, 1
      %s208 = smul.addr %s207, 8
      %s209 = scalar_lea.vmem %s2, %s208
      %p210 = pneg %p88
      %p211 = pneg %p85
      %p212 = scmp.lt.s32.totalorder %s15, 1
      %s213 = scalar_select %p212, %s15, 1
      %s214 = smul.addr %s213, 8
      %s215 = scalar_lea.vmem %s3, %s214
      %p216 = pneg %p114
      %p217 = pneg %p111
      %p218 = pneg %p140
      %p219 = pneg %p137
      %p220 = scmp.lt.s32.totalorder %s15, 1
      %s221 = scalar_select %p220, %s15, 1
      %s222 = smul.addr %s221, 8
      %s223 = scalar_lea.vmem %s4, %s222
      %p224 = scmp.lt.s32.totalorder %s15, 1
      %s225 = scalar_select %p224, %s15, 1
      %s226 = smul.addr %s225, 8
      %s227 = scalar_lea.vmem %s0, %s226
      %p228 = scmp.lt.s32.totalorder %s15, 1
      %s229 = scalar_select %p228, %s15, 1
      %s230 = smul.addr %s229, 8
      %s231 = scalar_lea.vmem %s1, %s230
      %p232 = scmp.lt.s32.totalorder %s15, 1
      %s233 = scalar_select %p232, %s15, 1
      %s234 = smul.addr %s233, 8
      %s235 = scalar_lea.vmem %s2, %s234
      %p236 = scmp.lt.s32.totalorder %s15, 1
      %s237 = scalar_select %p236, %s15, 1
      %s238 = smul.addr %s237, 8
      %s239 = scalar_lea.vmem %s3, %s238
      %p240 = scmp.lt.s32.totalorder %s15, 1
      %s241 = scalar_select %p240, %s15, 1
      %s242 = smul.addr %s241, 8
      %s243 = scalar_lea.vmem %s4, %s242
      %v244 = vld [vmem:[%s227] sm:$0xff]
      %v245 = vld [vmem:[%s231] sm:$0xff]
      %v246 = vld [vmem:[%s235] sm:$0xff]
      %v247 = vld [vmem:[%s239] sm:$0xff]
      %vm248 = vcmp.ne.s32.totalorder %v247, 0
      %vm249 = vcmask 64512
      %v251 = vsel %vm249, %v244, 0
      %v254 = vsel %vm249, %v245, 0
      %256 = vmatprep.subr.mxu0 0.0
      %257 = vmatpush1.xpose.msra.mxu0 %v254
      %258 = vmatprep.subr.mxu0 0.0
      %259 = vmatpush1.xpose.msra.mxu0 0.0
      %260 = vmatprep.subr.mxu0 0.0
      %261 = vmatpush1.xpose.msra.mxu0 0.0
      %262 = vmatprep.subr.mxu0 0.0
      %263 = vmatpush1.xpose.msra.mxu0 0.0
      %264 = vmatprep.subr.mxu0 0.0
      %265 = vmatpush1.xpose.msra.mxu0 0.0
      %266 = vmatprep.subr.mxu0 0.0
      %267 = vmatpush1.xpose.msra.mxu0 0.0
      %268 = vmatprep.subr.mxu0 0.0
      %269 = vmatpush1.xpose.msra.mxu0 0.0
      %270 = vmatprep.subr.mxu0 0.0
      %271 = vmatpush1.xpose.msra.mxu0 0.0
      %272 = vmatprep.subr.mxu0 0.0
      %273 = vmatpush1.xpose.msra.mxu0 0.0
      %274 = vmatprep.subr.mxu0 0.0
      %275 = vmatpush1.xpose.msra.mxu0 0.0
      %276 = vmatprep.subr.mxu0 0.0
      %277 = vmatpush1.xpose.msra.mxu0 0.0
      %278 = vmatprep.subr.mxu0 0.0
      %279 = vmatpush1.xpose.msra.mxu0 0.0
      %280 = vmatprep.subr.mxu0 0.0
      %281 = vmatpush1.xpose.msra.mxu0 0.0
      %282 = vmatprep.subr.mxu0 0.0
      %283 = vmatpush1.xpose.msra.mxu0 0.0
      %284 = vmatprep.subr.mxu0 0.0
      %285 = vmatpush1.xpose.msra.mxu0 0.0
      %286 = vmatprep.subr.mxu0 0.0
      %287 = vmatpush1.xpose.msra.mxu0 0.0
      %288 = vmatprep.subr.mxu0 0.0
      %289 = vmatpush1.xpose.msra.mxu0 0.0
      %290 = vmatprep.subr.mxu0 0.0
      %291 = vmatpush1.xpose.msra.mxu0 0.0
      %292 = vmatprep.subr.mxu0 0.0
      %293 = vmatpush1.xpose.msra.mxu0 0.0
      %294 = vmatprep.subr.mxu0 0.0
      %295 = vmatpush1.xpose.msra.mxu0 0.0
      %296 = vmatprep.subr.mxu0 0.0
      %297 = vmatpush1.xpose.msra.mxu0 0.0
      %298 = vmatprep.subr.mxu0 0.0
      %299 = vmatpush1.xpose.msra.mxu0 0.0
      %300 = vmatprep.subr.mxu0 0.0
      %301 = vmatpush1.xpose.msra.mxu0 0.0
      %302 = vmatprep.subr.mxu0 0.0
      %303 = vmatpush1.xpose.msra.mxu0 0.0
      %304 = vmatprep.subr.mxu0 0.0
      %305 = vmatpush1.xpose.msra.mxu0 0.0
      %306 = vmatprep.subr.mxu0 0.0
      %307 = vmatpush1.xpose.msra.mxu0 0.0
      %308 = vmatprep.subr.mxu0 0.0
      %309 = vmatpush1.xpose.msra.mxu0 0.0
      %310 = vmatprep.subr.mxu0 0.0
      %311 = vmatpush1.xpose.msra.mxu0 0.0
      %312 = vmatprep.subr.mxu0 0.0
      %313 = vmatpush1.xpose.msra.mxu0 0.0
      %314 = vmatprep.subr.mxu0 0.0
      %315 = vmatpush1.xpose.msra.mxu0 0.0
      %316 = vmatprep.subr.mxu0 0.0
      %317 = vmatpush1.xpose.msra.mxu0 0.0
      %318 = vmatprep.subr.mxu0 0.0
      %319 = vmatpush1.xpose.msra.mxu0 0.0
      %320 = vmatprep.mubr.f32.mxu0 0.0
      %321 = vmatmul.mubr.f32.gmra.mrb[0].mxu0 %v251
      %v322 = vpop.f32.mrb[0].mxu0
      %v323 = vadd.f32 0.0, %v322
      %v324 = vpop.f32.mrb[0].mxu0
      %325 = vdwg.mxu0
      %v326 = vsel %vm248, %v323, -1e+09
      %v327 = vsel %vm249, %v326, -inf
      %328 = vmax.xlane.f32.xlu0 %v327
      %v329 = vpop.xlane.xlu0 %328
      %v330 = vsub.f32 %v326, %v329
      %v331 = vmul.f32 %v330, 1.442695
      %v332 = vpow.pop %v331
      %v333 = vsel %vm249, %v332, 0.0
      %334 = vadd.xlane.f32.xlu0 %v333
      %v335 = vpop.xlane.xlu0 %334
      %v336 = vrcp.pop %v335
      %v338 = vsel %vm249, %v332, 0
      %340 = vmatprep.subr.mxu0 0.0
      %341 = vmatpush1.msra.mxu0 %v246
      %342 = vmatprep.subr.mxu0 0.0
      %343 = vmatpush1.msra.mxu0 0.0
      %344 = vmatprep.subr.mxu0 0.0
      %345 = vmatpush1.msra.mxu0 0.0
      %346 = vmatprep.subr.mxu0 0.0
      %347 = vmatpush1.msra.mxu0 0.0
      %348 = vmatprep.subr.mxu0 0.0
      %349 = vmatpush1.msra.mxu0 0.0
      %350 = vmatprep.subr.mxu0 0.0
      %351 = vmatpush1.msra.mxu0 0.0
      %352 = vmatprep.subr.mxu0 0.0
      %353 = vmatpush1.msra.mxu0 0.0
      %354 = vmatprep.subr.mxu0 0.0
      %355 = vmatpush1.msra.mxu0 0.0
      %356 = vmatprep.subr.mxu0 0.0
      %357 = vmatpush1.msra.mxu0 0.0
      %358 = vmatprep.subr.mxu0 0.0
      %359 = vmatpush1.msra.mxu0 0.0
      %360 = vmatprep.subr.mxu0 0.0
      %361 = vmatpush1.msra.mxu0 0.0
      %362 = vmatprep.subr.mxu0 0.0
      %363 = vmatpush1.msra.mxu0 0.0
      %364 = vmatprep.subr.mxu0 0.0
      %365 = vmatpush1.msra.mxu0 0.0
      %366 = vmatprep.subr.mxu0 0.0
      %367 = vmatpush1.msra.mxu0 0.0
      %368 = vmatprep.subr.mxu0 0.0
      %369 = vmatpush1.msra.mxu0 0.0
      %370 = vmatprep.subr.mxu0 0.0
      %371 = vmatpush1.msra.mxu0 0.0
      %372 = vmatprep.subr.mxu0 0.0
      %373 = vmatpush1.msra.mxu0 0.0
      %374 = vmatprep.subr.mxu0 0.0
      %375 = vmatpush1.msra.mxu0 0.0
      %376 = vmatprep.subr.mxu0 0.0
      %377 = vmatpush1.msra.mxu0 0.0
      %378 = vmatprep.subr.mxu0 0.0
      %379 = vmatpush1.msra.mxu0 0.0
      %380 = vmatprep.subr.mxu0 0.0
      %381 = vmatpush1.msra.mxu0 0.0
      %382 = vmatprep.subr.mxu0 0.0
      %383 = vmatpush1.msra.mxu0 0.0
      %384 = vmatprep.subr.mxu0 0.0
      %385 = vmatpush1.msra.mxu0 0.0
      %386 = vmatprep.subr.mxu0 0.0
      %387 = vmatpush1.msra.mxu0 0.0
      %388 = vmatprep.subr.mxu0 0.0
      %389 = vmatpush1.msra.mxu0 0.0
      %390 = vmatprep.subr.mxu0 0.0
      %391 = vmatpush1.msra.mxu0 0.0
      %392 = vmatprep.subr.mxu0 0.0
      %393 = vmatpush1.msra.mxu0 0.0
      %394 = vmatprep.subr.mxu0 0.0
      %395 = vmatpush1.msra.mxu0 0.0
      %396 = vmatprep.subr.mxu0 0.0
      %397 = vmatpush1.msra.mxu0 0.0
      %398 = vmatprep.subr.mxu0 0.0
      %399 = vmatpush1.msra.mxu0 0.0
      %400 = vmatprep.subr.mxu0 0.0
      %401 = vmatpush1.msra.mxu0 0.0
      %402 = vmatprep.subr.mxu0 0.0
      %403 = vmatpush1.msra.mxu0 0.0
      %404 = vmatprep.mubr.f32.mxu0 0.0
      %405 = vmatmul.mubr.f32.gmra.mrb[0].mxu0 %v338
      %v406 = vpop.f32.mrb[0].mxu0
      %v407 = vadd.f32 0.0, %v406
      %v408 = vpop.f32.mrb[0].mxu0
      %409 = vdwg.mxu0
      %v410 = vmul.f32 %v407, %v336
      %411 = vrot.lane.b32.xlu0 %v244, 120
      %v412 = vpop.permute.xlu0 %411
      %413 = vrot.lane.b32.xlu0 %v245, 120
      %v414 = vpop.permute.xlu0 %413
      %v415 = vsel %vm249, %v412, 0
      %v417 = vsel %vm249, %v414, 0
      %419 = vmatprep.subr.mxu0 0.0
      %420 = vmatpush1.xpose.msra.mxu0 %v417
      %421 = vmatprep.subr.mxu0 0.0
      %422 = vmatpush1.xpose.msra.mxu0 0.0
      %423 = vmatprep.subr.mxu0 0.0
      %424 = vmatpush1.xpose.msra.mxu0 0.0
      %425 = vmatprep.subr.mxu0 0.0
      %426 = vmatpush1.xpose.msra.mxu0 0.0
      %427 = vmatprep.subr.mxu0 0.0
      %428 = vmatpush1.xpose.msra.mxu0 0.0
      %429 = vmatprep.subr.mxu0 0.0
      %430 = vmatpush1.xpose.msra.mxu0 0.0
      %431 = vmatprep.subr.mxu0 0.0
      %432 = vmatpush1.xpose.msra.mxu0 0.0
      %433 = vmatprep.subr.mxu0 0.0
      %434 = vmatpush1.xpose.msra.mxu0 0.0
      %435 = vmatprep.subr.mxu0 0.0
      %436 = vmatpush1.xpose.msra.mxu0 0.0
      %437 = vmatprep.subr.mxu0 0.0
      %438 = vmatpush1.xpose.msra.mxu0 0.0
      %439 = vmatprep.subr.mxu0 0.0
      %440 = vmatpush1.xpose.msra.mxu0 0.0
      %441 = vmatprep.subr.mxu0 0.0
      %442 = vmatpush1.xpose.msra.mxu0 0.0
      %443 = vmatprep.subr.mxu0 0.0
      %444 = vmatpush1.xpose.msra.mxu0 0.0
      %445 = vmatprep.subr.mxu0 0.0
      %446 = vmatpush1.xpose.msra.mxu0 0.0
      %447 = vmatprep.subr.mxu0 0.0
      %448 = vmatpush1.xpose.msra.mxu0 0.0
      %449 = vmatprep.subr.mxu0 0.0
      %450 = vmatpush1.xpose.msra.mxu0 0.0
      %451 = vmatprep.subr.mxu0 0.0
      %452 = vmatpush1.xpose.msra.mxu0 0.0
      %453 = vmatprep.subr.mxu0 0.0
      %454 = vmatpush1.xpose.msra.mxu0 0.0
      %455 = vmatprep.subr.mxu0 0.0
      %456 = vmatpush1.xpose.msra.mxu0 0.0
      %457 = vmatprep.subr.mxu0 0.0
      %458 = vmatpush1.xpose.msra.mxu0 0.0
      %459 = vmatprep.subr.mxu0 0.0
      %460 = vmatpush1.xpose.msra.mxu0 0.0
      %461 = vmatprep.subr.mxu0 0.0
      %462 = vmatpush1.xpose.msra.mxu0 0.0
      %463 = vmatprep.subr.mxu0 0.0
      %464 = vmatpush1.xpose.msra.mxu0 0.0
      %465 = vmatprep.subr.mxu0 0.0
      %466 = vmatpush1.xpose.msra.mxu0 0.0
      %467 = vmatprep.subr.mxu0 0.0
      %468 = vmatpush1.xpose.msra.mxu0 0.0
      %469 = vmatprep.subr.mxu0 0.0
      %470 = vmatpush1.xpose.msra.mxu0 0.0
      %471 = vmatprep.subr.mxu0 0.0
      %472 = vmatpush1.xpose.msra.mxu0 0.0
      %473 = vmatprep.subr.mxu0 0.0
      %474 = vmatpush1.xpose.msra.mxu0 0.0
      %475 = vmatprep.subr.mxu0 0.0
      %476 = vmatpush1.xpose.msra.mxu0 0.0
      %477 = vmatprep.subr.mxu0 0.0
      %478 = vmatpush1.xpose.msra.mxu0 0.0
      %479 = vmatprep.subr.mxu0 0.0
      %480 = vmatpush1.xpose.msra.mxu0 0.0
      %481 = vmatprep.subr.mxu0 0.0
      %482 = vmatpush1.xpose.msra.mxu0 0.0
      %483 = vmatprep.mubr.f32.mxu0 0.0
      %484 = vmatmul.mubr.f32.gmra.mrb[0].mxu0 %v415
      %v485 = vpop.f32.mrb[0].mxu0
      %v486 = vadd.f32 0.0, %v485
      %v487 = vpop.f32.mrb[0].mxu0
      %488 = vdwg.mxu0
      %v489 = vsel %vm248, %v486, -1e+09
      %v490 = vsel %vm249, %v489, -inf
      %491 = vmax.xlane.f32.xlu0 %v490
      %v492 = vpop.xlane.xlu0 %491
      %v493 = vsub.f32 %v489, %v492
      %v494 = vmul.f32 %v493, 1.442695
      %v495 = vpow.pop %v494
      %v496 = vsel %vm249, %v495, 0.0
      %497 = vadd.xlane.f32.xlu0 %v496
      %v498 = vpop.xlane.xlu0 %497
      %v499 = vrcp.pop %v498
      %501 = vrot.lane.b32.xlu0 %v246, 120
      %v502 = vpop.permute.xlu0 %501
      %v505 = vsel %vm249, %v495, 0
      %507 = vmatprep.subr.mxu0 0.0
      %508 = vmatpush1.msra.mxu0 %v502
      %509 = vmatprep.subr.mxu0 0.0
      %510 = vmatpush1.msra.mxu0 0.0
      %511 = vmatprep.subr.mxu0 0.0
      %512 = vmatpush1.msra.mxu0 0.0
      %513 = vmatprep.subr.mxu0 0.0
      %514 = vmatpush1.msra.mxu0 0.0
      %515 = vmatprep.subr.mxu0 0.0
      %516 = vmatpush1.msra.mxu0 0.0
      %517 = vmatprep.subr.mxu0 0.0
      %518 = vmatpush1.msra.mxu0 0.0
      %519 = vmatprep.subr.mxu0 0.0
      %520 = vmatpush1.msra.mxu0 0.0
      %521 = vmatprep.subr.mxu0 0.0
      %522 = vmatpush1.msra.mxu0 0.0
      %523 = vmatprep.subr.mxu0 0.0
      %524 = vmatpush1.msra.mxu0 0.0
      %525 = vmatprep.subr.mxu0 0.0
      %526 = vmatpush1.msra.mxu0 0.0
      %527 = vmatprep.subr.mxu0 0.0
      %528 = vmatpush1.msra.mxu0 0.0
      %529 = vmatprep.subr.mxu0 0.0
      %530 = vmatpush1.msra.mxu0 0.0
      %531 = vmatprep.subr.mxu0 0.0
      %532 = vmatpush1.msra.mxu0 0.0
      %533 = vmatprep.subr.mxu0 0.0
      %534 = vmatpush1.msra.mxu0 0.0
      %535 = vmatprep.subr.mxu0 0.0
      %536 = vmatpush1.msra.mxu0 0.0
      %537 = vmatprep.subr.mxu0 0.0
      %538 = vmatpush1.msra.mxu0 0.0
      %539 = vmatprep.subr.mxu0 0.0
      %540 = vmatpush1.msra.mxu0 0.0
      %541 = vmatprep.subr.mxu0 0.0
      %542 = vmatpush1.msra.mxu0 0.0
      %543 = vmatprep.subr.mxu0 0.0
      %544 = vmatpush1.msra.mxu0 0.0
      %545 = vmatprep.subr.mxu0 0.0
      %546 = vmatpush1.msra.mxu0 0.0
      %547 = vmatprep.subr.mxu0 0.0
      %548 = vmatpush1.msra.mxu0 0.0
      %549 = vmatprep.subr.mxu0 0.0
      %550 = vmatpush1.msra.mxu0 0.0
      %551 = vmatprep.subr.mxu0 0.0
      %552 = vmatpush1.msra.mxu0 0.0
      %553 = vmatprep.subr.mxu0 0.0
      %554 = vmatpush1.msra.mxu0 0.0
      %555 = vmatprep.subr.mxu0 0.0
      %556 = vmatpush1.msra.mxu0 0.0
      %557 = vmatprep.subr.mxu0 0.0
      %558 = vmatpush1.msra.mxu0 0.0
      %559 = vmatprep.subr.mxu0 0.0
      %560 = vmatpush1.msra.mxu0 0.0
      %561 = vmatprep.subr.mxu0 0.0
      %562 = vmatpush1.msra.mxu0 0.0
      %563 = vmatprep.subr.mxu0 0.0
      %564 = vmatpush1.msra.mxu0 0.0
      %565 = vmatprep.subr.mxu0 0.0
      %566 = vmatpush1.msra.mxu0 0.0
      %567 = vmatprep.subr.mxu0 0.0
      %568 = vmatpush1.msra.mxu0 0.0
      %569 = vmatprep.subr.mxu0 0.0
      %570 = vmatpush1.msra.mxu0 0.0
      %571 = vmatprep.mubr.f32.mxu0 0.0
      %572 = vmatmul.mubr.f32.gmra.mrb[0].mxu0 %v505
      %v573 = vpop.f32.mrb[0].mxu0
      %v574 = vadd.f32 0.0, %v573
      %v575 = vpop.f32.mrb[0].mxu0
      %576 = vdwg.mxu0
      %v577 = vmul.f32 %v574, %v499
      %578 = vrot.lane.b32.xlu0 %v244, 112
      %v579 = vpop.permute.xlu0 %578
      %580 = vrot.lane.b32.xlu0 %v245, 112
      %v581 = vpop.permute.xlu0 %580
      %v582 = vsel %vm249, %v579, 0
      %v584 = vsel %vm249, %v581, 0
      %586 = vmatprep.subr.mxu0 0.0
      %587 = vmatpush1.xpose.msra.mxu0 %v584
      %588 = vmatprep.subr.mxu0 0.0
      %589 = vmatpush1.xpose.msra.mxu0 0.0
      %590 = vmatprep.subr.mxu0 0.0
      %591 = vmatpush1.xpose.msra.mxu0 0.0
      %592 = vmatprep.subr.mxu0 0.0
      %593 = vmatpush1.xpose.msra.mxu0 0.0
      %594 = vmatprep.subr.mxu0 0.0
      %595 = vmatpush1.xpose.msra.mxu0 0.0
      %596 = vmatprep.subr.mxu0 0.0
      %597 = vmatpush1.xpose.msra.mxu0 0.0
      %598 = vmatprep.subr.mxu0 0.0
      %599 = vmatpush1.xpose.msra.mxu0 0.0
      %600 = vmatprep.subr.mxu0 0.0
      %601 = vmatpush1.xpose.msra.mxu0 0.0
      %602 = vmatprep.subr.mxu0 0.0
      %603 = vmatpush1.xpose.msra.mxu0 0.0
      %604 = vmatprep.subr.mxu0 0.0
      %605 = vmatpush1.xpose.msra.mxu0 0.0
      %606 = vmatprep.subr.mxu0 0.0
      %607 = vmatpush1.xpose.msra.mxu0 0.0
      %608 = vmatprep.subr.mxu0 0.0
      %609 = vmatpush1.xpose.msra.mxu0 0.0
      %610 = vmatprep.subr.mxu0 0.0
      %611 = vmatpush1.xpose.msra.mxu0 0.0
      %612 = vmatprep.subr.mxu0 0.0
      %613 = vmatpush1.xpose.msra.mxu0 0.0
      %614 = vmatprep.subr.mxu0 0.0
      %615 = vmatpush1.xpose.msra.mxu0 0.0
      %616 = vmatprep.subr.mxu0 0.0
      %617 = vmatpush1.xpose.msra.mxu0 0.0
      %618 = vmatprep.subr.mxu0 0.0
      %619 = vmatpush1.xpose.msra.mxu0 0.0
      %620 = vmatprep.subr.mxu0 0.0
      %621 = vmatpush1.xpose.msra.mxu0 0.0
      %622 = vmatprep.subr.mxu0 0.0
      %623 = vmatpush1.xpose.msra.mxu0 0.0
      %624 = vmatprep.subr.mxu0 0.0
      %625 = vmatpush1.xpose.msra.mxu0 0.0
      %626 = vmatprep.subr.mxu0 0.0
      %627 = vmatpush1.xpose.msra.mxu0 0.0
      %628 = vmatprep.subr.mxu0 0.0
      %629 = vmatpush1.xpose.msra.mxu0 0.0
      %630 = vmatprep.subr.mxu0 0.0
      %631 = vmatpush1.xpose.msra.mxu0 0.0
      %632 = vmatprep.subr.mxu0 0.0
      %633 = vmatpush1.xpose.msra.mxu0 0.0
      %634 = vmatprep.subr.mxu0 0.0
      %635 = vmatpush1.xpose.msra.mxu0 0.0
      %636 = vmatprep.subr.mxu0 0.0
      %637 = vmatpush1.xpose.msra.mxu0 0.0
      %638 = vmatprep.subr.mxu0 0.0
      %639 = vmatpush1.xpose.msra.mxu0 0.0
      %640 = vmatprep.subr.mxu0 0.0
      %641 = vmatpush1.xpose.msra.mxu0 0.0
      %642 = vmatprep.subr.mxu0 0.0
      %643 = vmatpush1.xpose.msra.mxu0 0.0
      %644 = vmatprep.subr.mxu0 0.0
      %645 = vmatpush1.xpose.msra.mxu0 0.0
      %646 = vmatprep.subr.mxu0 0.0
      %647 = vmatpush1.xpose.msra.mxu0 0.0
      %648 = vmatprep.subr.mxu0 0.0
      %649 = vmatpush1.xpose.msra.mxu0 0.0
      %650 = vmatprep.mubr.f32.mxu0 0.0
      %651 = vmatmul.mubr.f32.gmra.mrb[0].mxu0 %v582
      %v652 = vpop.f32.mrb[0].mxu0
      %v653 = vadd.f32 0.0, %v652
      %v654 = vpop.f32.mrb[0].mxu0
      %655 = vdwg.mxu0
      %v656 = vsel %vm248, %v653, -1e+09
      %v657 = vsel %vm249, %v656, -inf
      %658 = vmax.xlane.f32.xlu0 %v657
      %v659 = vpop.xlane.xlu0 %658
      %v660 = vsub.f32 %v656, %v659
      %v661 = vmul.f32 %v660, 1.442695
      %v662 = vpow.pop %v661
      %v663 = vsel %vm249, %v662, 0.0
      %664 = vadd.xlane.f32.xlu0 %v663
      %v665 = vpop.xlane.xlu0 %664
      %v666 = vrcp.pop %v665
      %667 = vrot.lane.b32.xlu0 %v246, 112
      %v668 = vpop.permute.xlu0 %667
      %v671 = vsel %vm249, %v662, 0
      %673 = vmatprep.subr.mxu0 0.0
      %674 = vmatpush1.msra.mxu0 %v668
      %675 = vmatprep.subr.mxu0 0.0
      %676 = vmatpush1.msra.mxu0 0.0
      %677 = vmatprep.subr.mxu0 0.0
      %678 = vmatpush1.msra.mxu0 0.0
      %679 = vmatprep.subr.mxu0 0.0
      %680 = vmatpush1.msra.mxu0 0.0
      %681 = vmatprep.subr.mxu0 0.0
      %682 = vmatpush1.msra.mxu0 0.0
      %683 = vmatprep.subr.mxu0 0.0
      %684 = vmatpush1.msra.mxu0 0.0
      %685 = vmatprep.subr.mxu0 0.0
      %686 = vmatpush1.msra.mxu0 0.0
      %687 = vmatprep.subr.mxu0 0.0
      %688 = vmatpush1.msra.mxu0 0.0
      %689 = vmatprep.subr.mxu0 0.0
      %690 = vmatpush1.msra.mxu0 0.0
      %691 = vmatprep.subr.mxu0 0.0
      %692 = vmatpush1.msra.mxu0 0.0
      %693 = vmatprep.subr.mxu0 0.0
      %694 = vmatpush1.msra.mxu0 0.0
      %695 = vmatprep.subr.mxu0 0.0
      %696 = vmatpush1.msra.mxu0 0.0
      %697 = vmatprep.subr.mxu0 0.0
      %698 = vmatpush1.msra.mxu0 0.0
      %699 = vmatprep.subr.mxu0 0.0
      %700 = vmatpush1.msra.mxu0 0.0
      %701 = vmatprep.subr.mxu0 0.0
      %702 = vmatpush1.msra.mxu0 0.0
      %703 = vmatprep.subr.mxu0 0.0
      %704 = vmatpush1.msra.mxu0 0.0
      %705 = vmatprep.subr.mxu0 0.0
      %706 = vmatpush1.msra.mxu0 0.0
      %707 = vmatprep.subr.mxu0 0.0
      %708 = vmatpush1.msra.mxu0 0.0
      %709 = vmatprep.subr.mxu0 0.0
      %710 = vmatpush1.msra.mxu0 0.0
      %711 = vmatprep.subr.mxu0 0.0
      %712 = vmatpush1.msra.mxu0 0.0
      %713 = vmatprep.subr.mxu0 0.0
      %714 = vmatpush1.msra.mxu0 0.0
      %715 = vmatprep.subr.mxu0 0.0
      %716 = vmatpush1.msra.mxu0 0.0
      %717 = vmatprep.subr.mxu0 0.0
      %718 = vmatpush1.msra.mxu0 0.0
      %719 = vmatprep.subr.mxu0 0.0
      %720 = vmatpush1.msra.mxu0 0.0
      %721 = vmatprep.subr.mxu0 0.0
      %722 = vmatpush1.msra.mxu0 0.0
      %723 = vmatprep.subr.mxu0 0.0
      %724 = vmatpush1.msra.mxu0 0.0
      %725 = vmatprep.subr.mxu0 0.0
      %726 = vmatpush1.msra.mxu0 0.0
      %727 = vmatprep.subr.mxu0 0.0
      %728 = vmatpush1.msra.mxu0 0.0
      %729 = vmatprep.subr.mxu0 0.0
      %730 = vmatpush1.msra.mxu0 0.0
      %731 = vmatprep.subr.mxu0 0.0
      %732 = vmatpush1.msra.mxu0 0.0
      %733 = vmatprep.subr.mxu0 0.0
      %734 = vmatpush1.msra.mxu0 0.0
      %735 = vmatprep.subr.mxu0 0.0
      %736 = vmatpush1.msra.mxu0 0.0
      %737 = vmatprep.mubr.f32.mxu0 0.0
      %738 = vmatmul.mubr.f32.gmra.mrb[0].mxu0 %v671
      %v739 = vpop.f32.mrb[0].mxu0
      %v740 = vadd.f32 0.0, %v739
      %v741 = vpop.f32.mrb[0].mxu0
      %742 = vdwg.mxu0
      %v743 = vmul.f32 %v740, %v666
      %744 = vrot.lane.b32.xlu0 %v244, 104
      %v745 = vpop.permute.xlu0 %744
      %746 = vrot.lane.b32.xlu0 %v245, 104
      %v747 = vpop.permute.xlu0 %746
      %v748 = vsel %vm249, %v745, 0
      %v750 = vsel %vm249, %v747, 0
      %752 = vmatprep.subr.mxu0 0.0
      %753 = vmatpush1.xpose.msra.mxu0 %v750
      %754 = vmatprep.subr.mxu0 0.0
      %755 = vmatpush1.xpose.msra.mxu0 0.0
      %756 = vmatprep.subr.mxu0 0.0
      %757 = vmatpush1.xpose.msra.mxu0 0.0
      %758 = vmatprep.subr.mxu0 0.0
      %759 = vmatpush1.xpose.msra.mxu0 0.0
      %760 = vmatprep.subr.mxu0 0.0
      %761 = vmatpush1.xpose.msra.mxu0 0.0
      %762 = vmatprep.subr.mxu0 0.0
      %763 = vmatpush1.xpose.msra.mxu0 0.0
      %764 = vmatprep.subr.mxu0 0.0
      %765 = vmatpush1.xpose.msra.mxu0 0.0
      %766 = vmatprep.subr.mxu0 0.0
      %767 = vmatpush1.xpose.msra.mxu0 0.0
      %768 = vmatprep.subr.mxu0 0.0
      %769 = vmatpush1.xpose.msra.mxu0 0.0
      %770 = vmatprep.subr.mxu0 0.0
      %771 = vmatpush1.xpose.msra.mxu0 0.0
      %772 = vmatprep.subr.mxu0 0.0
      %773 = vmatpush1.xpose.msra.mxu0 0.0
      %774 = vmatprep.subr.mxu0 0.0
      %775 = vmatpush1.xpose.msra.mxu0 0.0
      %776 = vmatprep.subr.mxu0 0.0
      %777 = vmatpush1.xpose.msra.mxu0 0.0
      %778 = vmatprep.subr.mxu0 0.0
      %779 = vmatpush1.xpose.msra.mxu0 0.0
      %780 = vmatprep.subr.mxu0 0.0
      %781 = vmatpush1.xpose.msra.mxu0 0.0
      %782 = vmatprep.subr.mxu0 0.0
      %783 = vmatpush1.xpose.msra.mxu0 0.0
      %784 = vmatprep.subr.mxu0 0.0
      %785 = vmatpush1.xpose.msra.mxu0 0.0
      %786 = vmatprep.subr.mxu0 0.0
      %787 = vmatpush1.xpose.msra.mxu0 0.0
      %788 = vmatprep.subr.mxu0 0.0
      %789 = vmatpush1.xpose.msra.mxu0 0.0
      %790 = vmatprep.subr.mxu0 0.0
      %791 = vmatpush1.xpose.msra.mxu0 0.0
      %792 = vmatprep.subr.mxu0 0.0
      %793 = vmatpush1.xpose.msra.mxu0 0.0
      %794 = vmatprep.subr.mxu0 0.0
      %795 = vmatpush1.xpose.msra.mxu0 0.0
      %796 = vmatprep.subr.mxu0 0.0
      %797 = vmatpush1.xpose.msra.mxu0 0.0
      %798 = vmatprep.subr.mxu0 0.0
      %799 = vmatpush1.xpose.msra.mxu0 0.0
      %800 = vmatprep.subr.mxu0 0.0
      %801 = vmatpush1.xpose.msra.mxu0 0.0
      %802 = vmatprep.subr.mxu0 0.0
      %803 = vmatpush1.xpose.msra.mxu0 0.0
      %804 = vmatprep.subr.mxu0 0.0
      %805 = vmatpush1.xpose.msra.mxu0 0.0
      %806 = vmatprep.subr.mxu0 0.0
      %807 = vmatpush1.xpose.msra.mxu0 0.0
      %808 = vmatprep.subr.mxu0 0.0
      %809 = vmatpush1.xpose.msra.mxu0 0.0
      %810 = vmatprep.subr.mxu0 0.0
      %811 = vmatpush1.xpose.msra.mxu0 0.0
      %812 = vmatprep.subr.mxu0 0.0
      %813 = vmatpush1.xpose.msra.mxu0 0.0
      %814 = vmatprep.subr.mxu0 0.0
      %815 = vmatpush1.xpose.msra.mxu0 0.0
      %816 = vmatprep.mubr.f32.mxu0 0.0
      %817 = vmatmul.mubr.f32.gmra.mrb[0].mxu0 %v748
      %v818 = vpop.f32.mrb[0].mxu0
      %v819 = vadd.f32 0.0, %v818
      %v820 = vpop.f32.mrb[0].mxu0
      %821 = vdwg.mxu0
      %v822 = vsel %vm248, %v819, -1e+09
      %v823 = vsel %vm249, %v822, -inf
      %824 = vmax.xlane.f32.xlu0 %v823
      %v825 = vpop.xlane.xlu0 %824
      %v826 = vsub.f32 %v822, %v825
      %v827 = vmul.f32 %v826, 1.442695
      %v828 = vpow.pop %v827
      %v829 = vsel %vm249, %v828, 0.0
      %830 = vadd.xlane.f32.xlu0 %v829
      %v831 = vpop.xlane.xlu0 %830
      %v832 = vrcp.pop %v831
      %833 = vrot.lane.b32.xlu0 %v246, 104
      %v834 = vpop.permute.xlu0 %833
      %v837 = vsel %vm249, %v828, 0
      %839 = vmatprep.subr.mxu0 0.0
      %840 = vmatpush1.msra.mxu0 %v834
      %841 = vmatprep.subr.mxu0 0.0
      %842 = vmatpush1.msra.mxu0 0.0
      %843 = vmatprep.subr.mxu0 0.0
      %844 = vmatpush1.msra.mxu0 0.0
      %845 = vmatprep.subr.mxu0 0.0
      %846 = vmatpush1.msra.mxu0 0.0
      %847 = vmatprep.subr.mxu0 0.0
      %848 = vmatpush1.msra.mxu0 0.0
      %849 = vmatprep.subr.mxu0 0.0
      %850 = vmatpush1.msra.mxu0 0.0
      %851 = vmatprep.subr.mxu0 0.0
      %852 = vmatpush1.msra.mxu0 0.0
      %853 = vmatprep.subr.mxu0 0.0
      %854 = vmatpush1.msra.mxu0 0.0
      %855 = vmatprep.subr.mxu0 0.0
      %856 = vmatpush1.msra.mxu0 0.0
      %857 = vmatprep.subr.mxu0 0.0
      %858 = vmatpush1.msra.mxu0 0.0
      %859 = vmatprep.subr.mxu0 0.0
      %860 = vmatpush1.msra.mxu0 0.0
      %861 = vmatprep.subr.mxu0 0.0
      %862 = vmatpush1.msra.mxu0 0.0
      %863 = vmatprep.subr.mxu0 0.0
      %864 = vmatpush1.msra.mxu0 0.0
      %865 = vmatprep.subr.mxu0 0.0
      %866 = vmatpush1.msra.mxu0 0.0
      %867 = vmatprep.subr.mxu0 0.0
      %868 = vmatpush1.msra.mxu0 0.0
      %869 = vmatprep.subr.mxu0 0.0
      %870 = vmatpush1.msra.mxu0 0.0
      %871 = vmatprep.subr.mxu0 0.0
      %872 = vmatpush1.msra.mxu0 0.0
      %873 = vmatprep.subr.mxu0 0.0
      %874 = vmatpush1.msra.mxu0 0.0
      %875 = vmatprep.subr.mxu0 0.0
      %876 = vmatpush1.msra.mxu0 0.0
      %877 = vmatprep.subr.mxu0 0.0
      %878 = vmatpush1.msra.mxu0 0.0
      %879 = vmatprep.subr.mxu0 0.0
      %880 = vmatpush1.msra.mxu0 0.0
      %881 = vmatprep.subr.mxu0 0.0
      %882 = vmatpush1.msra.mxu0 0.0
      %883 = vmatprep.subr.mxu0 0.0
      %884 = vmatpush1.msra.mxu0 0.0
      %885 = vmatprep.subr.mxu0 0.0
      %886 = vmatpush1.msra.mxu0 0.0
      %887 = vmatprep.subr.mxu0 0.0
      %888 = vmatpush1.msra.mxu0 0.0
      %889 = vmatprep.subr.mxu0 0.0
      %890 = vmatpush1.msra.mxu0 0.0
      %891 = vmatprep.subr.mxu0 0.0
      %892 = vmatpush1.msra.mxu0 0.0
      %893 = vmatprep.subr.mxu0 0.0
      %894 = vmatpush1.msra.mxu0 0.0
      %895 = vmatprep.subr.mxu0 0.0
      %896 = vmatpush1.msra.mxu0 0.0
      %897 = vmatprep.subr.mxu0 0.0
      %898 = vmatpush1.msra.mxu0 0.0
      %899 = vmatprep.subr.mxu0 0.0
      %900 = vmatpush1.msra.mxu0 0.0
      %901 = vmatprep.subr.mxu0 0.0
      %902 = vmatpush1.msra.mxu0 0.0
      %903 = vmatprep.mubr.f32.mxu0 0.0
      %904 = vmatmul.mubr.f32.gmra.mrb[0].mxu0 %v837
      %v905 = vpop.f32.mrb[0].mxu0
      %v906 = vadd.f32 0.0, %v905
      %v907 = vpop.f32.mrb[0].mxu0
      %908 = vdwg.mxu0
      %v909 = vmul.f32 %v906, %v832
      %911 = vrot.lane.b32.xlu0 %v577, 8
      %v912 = vpop.permute.xlu0 %911
      %915 = vrot.lane.b32.xlu0 %v743, 16
      %v916 = vpop.permute.xlu0 %915
      %919 = vrot.lane.b32.xlu0 %v909, 24
      %v920 = vpop.permute.xlu0 %919
      %v922 = vsel %vm249, %v410, %v912
      %vm923 = vcmask 130048
      %v924 = vsel %vm923, %v922, %v916
      %vm925 = vcmask 195584
      %v926 = vsel %vm925, %v924, %v920
      %vm927 = vcmask 261120
      %928 = vst.msk [vmem:[%s243] sm:$0xff] %vm927, %v926
      %p929 = scmp.lt.s32.totalorder %s15, 1
      %s930 = scalar_select %p929, %s15, 1
      %s931 = smul.addr %s930, 8
      %s932 = scalar_lea.vmem %s4, %s931
      // Predicated region
      $region37: #{transformer_forward.26} parent=35 // pred_check
        %p933 = pneg %p137
      $region38: #{transformer_forward.26} parent=35 // pred_check_branch
        %935 = sbr.rel (%p933) target = $region40
      $region39: #{transformer_forward.26} parent=35 // pred_region
        _
      $region40: #{transformer_forward.26} parent=35 // pred_fallthru
        _
    $region36: #{transformer_forward.26} parent=5 // pred_fallthru
      _
    %p936 = scmp.le.s32.totalorder 2, %s10
    // Predicated region
    $region41: #{transformer_forward.26} parent=5 // pred_check
      %p937 = pneg %p936
    $region42: #{transformer_forward.26} parent=5 // pred_check_branch
      %939 = sbr.rel (%p937) target = $region44
    $region43: #{transformer_forward.26} parent=5 // pred_region
      %s940 = ssub.s32 %s10, 2
      // Predicated region
      $region45: #{transformer_forward.26} parent=43 // pred_check
        %p941 = pneg %p143
      $region46: #{transformer_forward.26} parent=43 // pred_check_branch
        %943 = sbr.rel (%p941) target = $region48
      $region47: #{transformer_forward.26} parent=43 // pred_region
        %p944 = scmp.lt.s32.totalorder %s16, 1
        %s945 = scalar_select %p944, %s16, 1
        %s946 = smul.addr %s945, 8
        %s947 = scalar_lea.vmem %s4, %s946
      $region48: #{transformer_forward.26} parent=43 // pred_fallthru
        _
    $region44: #{transformer_forward.26} parent=5 // pred_fallthru
      _
  $region6: #{transformer_forward.26} parent=0 // loop_footer
    %s14 = sadd.s32 1, %s10
  $region7: #{transformer_forward.26} parent=0 // loop_footer_branch
    %9 = sbr.rel target = $region3
  $region8: #{transformer_forward.26} parent=0 // loop_exit
    _

// kernel: transformer_forward.37
$region0: #{transformer_forward.37}
  #allocation0 [shape = 'u32[]', space=smem, size = 0x4, offset = 0x4, fixed_abs, tag = 'smem constant byte address 0x4 - core index']
  #allocation1 [shape = 'u32[144,128]{1,0:T(1,128)}', space=vmem, size = 0x12000, scoped, tag = 'internal scratch']
  #allocation2 [shape = 'f32[16,64]{1,0:T(8,128)}', space=vmem, size = 0x2000, scoped, tag = 'scratch operand']
  %s0 = inlined_call_operand.vmem [shape: f32[16,32], index: 0, kind: input, shape index: {}]
  %s1 = inlined_call_operand.vmem [shape: f32[32,64], index: 1, kind: input, shape index: {}]
  %s2 = inlined_call_operand.vmem [shape: f32[1,64], index: 2, kind: input, shape index: {}]
  %s3 = inlined_call_operand.vmem [shape: f32[16,64], index: 3, kind: output, shape index: {}]
  %s4 = sld [smem:[#allocation0]]
  $region30: #{transformer_forward.37} parent=0
    _
  %s6 = ssub.s32 1, %s4
  %s7 = scalar_select 0, %s6, %s4
  // Predicated region
  $region2: #{transformer_forward.37} parent=0 // pred_check
    _
  $region3: #{transformer_forward.37} parent=0 // pred_check_branch
    %9 = sbr.rel (0) target = $region5
  $region4: #{transformer_forward.37} parent=0 // pred_region
    _
  $region5: #{transformer_forward.37} parent=0 // pred_fallthru
    _
  // Predicated region
  $region6: #{transformer_forward.37} parent=0 // pred_check
    _
  $region7: #{transformer_forward.37} parent=0 // pred_check_branch
    %11 = sbr.rel (0) target = $region9
  $region8: #{transformer_forward.37} parent=0 // pred_region
    _
  $region9: #{transformer_forward.37} parent=0 // pred_fallthru
    _
  // Predicated region
  $region10: #{transformer_forward.37} parent=0 // pred_check
    _
  $region11: #{transformer_forward.37} parent=0 // pred_check_branch
    %13 = sbr.rel (0) target = $region13
  $region12: #{transformer_forward.37} parent=0 // pred_region
    _
  $region13: #{transformer_forward.37} parent=0 // pred_fallthru
    _
  %p14 = scmp.eq.s32.totalorder 0, 0
  // Predicated region
  $region14: #{transformer_forward.37} parent=0 // pred_check
    %p15 = pneg %p14
  $region15: #{transformer_forward.37} parent=0 // pred_check_branch
    %17 = sbr.rel (%p15) target = $region17
  $region16: #{transformer_forward.37} parent=0 // pred_region
    %vm18 = vcmask 523264
    %19 = vst.msk [vmem:[#allocation2] sm:$0xff] %vm18, 0.0
    %20 = vst.msk [vmem:[#allocation2 + $0x8] sm:$0xff] %vm18, 0.0
  $region17: #{transformer_forward.37} parent=0 // pred_fallthru
    _
  %v21 = vld [vmem:[#allocation2] sm:$0xff]
  %v22 = vld [vmem:[#allocation2 + $0x8] sm:$0xff]
  %v23 = vld [vmem:[%s0] sm:$0xff]
  %v24 = vld [vmem:[%s0 + $0x8] sm:$0xff]
  %v25 = vld [vmem:[%s1] sm:$0xff]
  %v26 = vld [vmem:[%s1 + $0x8] sm:$0xff]
  %v27 = vld [vmem:[%s1 + $0x10] sm:$0xff]
  %v28 = vld [vmem:[%s1 + $0x18] sm:$0xff]
  %vm29 = vcmask 261120
  %v31 = vsel %vm29, %v23, 0
  %v34 = vsel %vm29, %v24, 0
  %36 = vmatprep.subr.mxu0 0.0
  %37 = vmatpush1.msra.mxu0 %v25
  %38 = vmatprep.subr.mxu0 0.0
  %39 = vmatpush1.msra.mxu0 %v26
  %40 = vmatprep.subr.mxu0 0.0
  %41 = vmatpush1.msra.mxu0 %v27
  %42 = vmatprep.subr.mxu0 0.0
  %43 = vmatpush1.msra.mxu0 %v28
  %44 = vmatprep.subr.mxu0 0.0
  %45 = vmatpush1.msra.mxu0 0.0
  %46 = vmatprep.subr.mxu0 0.0
  %47 = vmatpush1.msra.mxu0 0.0
  %48 = vmatprep.subr.mxu0 0.0
  %49 = vmatpush1.msra.mxu0 0.0
  %50 = vmatprep.subr.mxu0 0.0
  %51 = vmatpush1.msra.mxu0 0.0
  %52 = vmatprep.subr.mxu0 0.0
  %53 = vmatpush1.msra.mxu0 0.0
  %54 = vmatprep.subr.mxu0 0.0
  %55 = vmatpush1.msra.mxu0 0.0
  %56 = vmatprep.subr.mxu0 0.0
  %57 = vmatpush1.msra.mxu0 0.0
  %58 = vmatprep.subr.mxu0 0.0
  %59 = vmatpush1.msra.mxu0 0.0
  %60 = vmatprep.subr.mxu0 0.0
  %61 = vmatpush1.msra.mxu0 0.0
  %62 = vmatprep.subr.mxu0 0.0
  %63 = vmatpush1.msra.mxu0 0.0
  %64 = vmatprep.subr.mxu0 0.0
  %65 = vmatpush1.msra.mxu0 0.0
  %66 = vmatprep.subr.mxu0 0.0
  %67 = vmatpush1.msra.mxu0 0.0
  %68 = vmatprep.subr.mxu0 0.0
  %69 = vmatpush1.msra.mxu0 0.0
  %70 = vmatprep.subr.mxu0 0.0
  %71 = vmatpush1.msra.mxu0 0.0
  %72 = vmatprep.subr.mxu0 0.0
  %73 = vmatpush1.msra.mxu0 0.0
  %74 = vmatprep.subr.mxu0 0.0
  %75 = vmatpush1.msra.mxu0 0.0
  %76 = vmatprep.subr.mxu0 0.0
  %77 = vmatpush1.msra.mxu0 0.0
  %78 = vmatprep.subr.mxu0 0.0
  %79 = vmatpush1.msra.mxu0 0.0
  %80 = vmatprep.subr.mxu0 0.0
  %81 = vmatpush1.msra.mxu0 0.0
  %82 = vmatprep.subr.mxu0 0.0
  %83 = vmatpush1.msra.mxu0 0.0
  %84 = vmatprep.subr.mxu0 0.0
  %85 = vmatpush1.msra.mxu0 0.0
  %86 = vmatprep.subr.mxu0 0.0
  %87 = vmatpush1.msra.mxu0 0.0
  %88 = vmatprep.subr.mxu0 0.0
  %89 = vmatpush1.msra.mxu0 0.0
  %90 = vmatprep.subr.mxu0 0.0
  %91 = vmatpush1.msra.mxu0 0.0
  %92 = vmatprep.subr.mxu0 0.0
  %93 = vmatpush1.msra.mxu0 0.0
  %94 = vmatprep.subr.mxu0 0.0
  %95 = vmatpush1.msra.mxu0 0.0
  %96 = vmatprep.subr.mxu0 0.0
  %97 = vmatpush1.msra.mxu0 0.0
  %98 = vmatprep.subr.mxu0 0.0
  %99 = vmatpush1.msra.mxu0 0.0
  %100 = vmatprep.mubr.f32.mxu0 0.0
  %101 = vmatmul.mubr.f32.gmra.mrb[0].mxu0 %v31
  %v102 = vpop.f32.mrb[0].mxu0
  %v103 = vadd.f32 0.0, %v102
  %v104 = vpop.f32.mrb[0].mxu0
  %105 = vmatprep.mubr.f32.mxu0 0.0
  %106 = vmatmul.mubr.f32.gmra.mrb[0].mxu0 %v34
  %v107 = vpop.f32.mrb[0].mxu0
  %v108 = vadd.f32 0.0, %v107
  %v109 = vpop.f32.mrb[0].mxu0
  %110 = vdwg.mxu0
  %v111 = vadd.f32 %v21, %v103
  %v112 = vadd.f32 %v22, %v108
  %vm113 = vcmask 523264
  %114 = vst.msk [vmem:[#allocation2] sm:$0xff] %vm113, %v111
  %115 = vst.msk [vmem:[#allocation2 + $0x8] sm:$0xff] %vm113, %v112
  // Predicated region
  $region18: #{transformer_forward.37} parent=0 // pred_check
    %p116 = pneg %p14
  $region19: #{transformer_forward.37} parent=0 // pred_check_branch
    %118 = sbr.rel (%p116) target = $region21
  $region20: #{transformer_forward.37} parent=0 // pred_region
    %v119 = vld [vmem:[#allocation2] sm:$0xff]
    %v120 = vld [vmem:[#allocation2 + $0x8] sm:$0xff]
    %v121 = vld [vmem:[%s2] sm:$0x1]
    %v123 = vlaneseq
    %v124 = vshrl.u32 %v123, 7
    %v125 = vsub.s32 0, %v124
    %v126 = vrot.slane %v121, %v125
    %v128 = vadd.f32 %v119, %v126
    %v129 = vadd.f32 %v120, %v126
    %130 = vst.msk [vmem:[%s3] sm:$0xff] %vm113, %v128
    %131 = vst.msk [vmem:[%s3 + $0x8] sm:$0xff] %vm113, %v129
  $region21: #{transformer_forward.37} parent=0 // pred_fallthru
    _
  // Predicated region
  $region22: #{transformer_forward.37} parent=0 // pred_check
    _
  $region23: #{transformer_forward.37} parent=0 // pred_check_branch
    %133 = sbr.rel (0) target = $region25
  $region24: #{transformer_forward.37} parent=0 // pred_region
    _
  $region25: #{transformer_forward.37} parent=0 // pred_fallthru
    _
  // Predicated region
  $region26: #{transformer_forward.37} parent=0 // pred_check
    _
  $region27: #{transformer_forward.37} parent=0 // pred_check_branch
    %135 = sbr.rel (0) target = $region29
  $region28: #{transformer_forward.37} parent=0 // pred_region
    _
  $region29: #{transformer_forward.37} parent=0 // pred_fallthru
    _

// kernel: transformer_forward.36
$region0: #{transformer_forward.36}
  #allocation0 [shape = 'u32[]', space=smem, size = 0x4, offset = 0x4, fixed_abs, tag = 'smem constant byte address 0x4 - core index']
  #allocation1 [shape = 'u32[144,128]{1,0:T(1,128)}', space=vmem, size = 0x12000, scoped, tag = 'internal scratch']
  #allocation2 [shape = 'f32[16,32]{1,0:T(8,128)}', space=vmem, size = 0x2000, scoped, tag = 'scratch operand']
  %s0 = inlined_call_operand.vmem [shape: f32[16,32], index: 0, kind: input, shape index: {}]
  %s1 = inlined_call_operand.vmem [shape: f32[32,32], index: 1, kind: input, shape index: {}]
  %s2 = inlined_call_operand.vmem [shape: f32[1,32], index: 2, kind: input, shape index: {}]
  %s3 = inlined_call_operand.vmem [shape: f32[16,32], index: 3, kind: output, shape index: {}]
  %s4 = sld [smem:[#allocation0]]
  $region30: #{transformer_forward.36} parent=0
    _
  %s6 = ssub.s32 1, %s4
  %s7 = scalar_select 0, %s6, %s4
  // Predicated region
  $region2: #{transformer_forward.36} parent=0 // pred_check
    _
  $region3: #{transformer_forward.36} parent=0 // pred_check_branch
    %9 = sbr.rel (0) target = $region5
  $region4: #{transformer_forward.36} parent=0 // pred_region
    _
  $region5: #{transformer_forward.36} parent=0 // pred_fallthru
    _
  // Predicated region
  $region6: #{transformer_forward.36} parent=0 // pred_check
    _
  $region7: #{transformer_forward.36} parent=0 // pred_check_branch
    %11 = sbr.rel (0) target = $region9
  $region8: #{transformer_forward.36} parent=0 // pred_region
    _
  $region9: #{transformer_forward.36} parent=0 // pred_fallthru
    _
  // Predicated region
  $region10: #{transformer_forward.36} parent=0 // pred_check
    _
  $region11: #{transformer_forward.36} parent=0 // pred_check_branch
    %13 = sbr.rel (0) target = $region13
  $region12: #{transformer_forward.36} parent=0 // pred_region
    _
  $region13: #{transformer_forward.36} parent=0 // pred_fallthru
    _
  %p14 = scmp.eq.s32.totalorder 0, 0
  // Predicated region
  $region14: #{transformer_forward.36} parent=0 // pred_check
    %p15 = pneg %p14
  $region15: #{transformer_forward.36} parent=0 // pred_check_branch
    %17 = sbr.rel (%p15) target = $region17
  $region16: #{transformer_forward.36} parent=0 // pred_region
    %vm18 = vcmask 261120
    %19 = vst.msk [vmem:[#allocation2] sm:$0xff] %vm18, 0.0
    %20 = vst.msk [vmem:[#allocation2 + $0x8] sm:$0xff] %vm18, 0.0
  $region17: #{transformer_forward.36} parent=0 // pred_fallthru
    _
  %v21 = vld [vmem:[#allocation2] sm:$0xff]
  %v22 = vld [vmem:[#allocation2 + $0x8] sm:$0xff]
  %v23 = vld [vmem:[%s0] sm:$0xff]
  %v24 = vld [vmem:[%s0 + $0x8] sm:$0xff]
  %v25 = vld [vmem:[%s1] sm:$0xff]
  %v26 = vld [vmem:[%s1 + $0x8] sm:$0xff]
  %v27 = vld [vmem:[%s1 + $0x10] sm:$0xff]
  %v28 = vld [vmem:[%s1 + $0x18] sm:$0xff]
  %vm29 = vcmask 261120
  %v31 = vsel %vm29, %v23, 0
  %v34 = vsel %vm29, %v24, 0
  %36 = vmatprep.subr.mxu0 0.0
  %37 = vmatpush1.msra.mxu0 %v25
  %38 = vmatprep.subr.mxu0 0.0
  %39 = vmatpush1.msra.mxu0 %v26
  %40 = vmatprep.subr.mxu0 0.0
  %41 = vmatpush1.msra.mxu0 %v27
  %42 = vmatprep.subr.mxu0 0.0
  %43 = vmatpush1.msra.mxu0 %v28
  %44 = vmatprep.subr.mxu0 0.0
  %45 = vmatpush1.msra.mxu0 0.0
  %46 = vmatprep.subr.mxu0 0.0
  %47 = vmatpush1.msra.mxu0 0.0
  %48 = vmatprep.subr.mxu0 0.0
  %49 = vmatpush1.msra.mxu0 0.0
  %50 = vmatprep.subr.mxu0 0.0
  %51 = vmatpush1.msra.mxu0 0.0
  %52 = vmatprep.subr.mxu0 0.0
  %53 = vmatpush1.msra.mxu0 0.0
  %54 = vmatprep.subr.mxu0 0.0
  %55 = vmatpush1.msra.mxu0 0.0
  %56 = vmatprep.subr.mxu0 0.0
  %57 = vmatpush1.msra.mxu0 0.0
  %58 = vmatprep.subr.mxu0 0.0
  %59 = vmatpush1.msra.mxu0 0.0
  %60 = vmatprep.subr.mxu0 0.0
  %61 = vmatpush1.msra.mxu0 0.0
  %62 = vmatprep.subr.mxu0 0.0
  %63 = vmatpush1.msra.mxu0 0.0
  %64 = vmatprep.subr.mxu0 0.0
  %65 = vmatpush1.msra.mxu0 0.0
  %66 = vmatprep.subr.mxu0 0.0
  %67 = vmatpush1.msra.mxu0 0.0
  %68 = vmatprep.subr.mxu0 0.0
  %69 = vmatpush1.msra.mxu0 0.0
  %70 = vmatprep.subr.mxu0 0.0
  %71 = vmatpush1.msra.mxu0 0.0
  %72 = vmatprep.subr.mxu0 0.0
  %73 = vmatpush1.msra.mxu0 0.0
  %74 = vmatprep.subr.mxu0 0.0
  %75 = vmatpush1.msra.mxu0 0.0
  %76 = vmatprep.subr.mxu0 0.0
  %77 = vmatpush1.msra.mxu0 0.0
  %78 = vmatprep.subr.mxu0 0.0
  %79 = vmatpush1.msra.mxu0 0.0
  %80 = vmatprep.subr.mxu0 0.0
  %81 = vmatpush1.msra.mxu0 0.0
  %82 = vmatprep.subr.mxu0 0.0
  %83 = vmatpush1.msra.mxu0 0.0
  %84 = vmatprep.subr.mxu0 0.0
  %85 = vmatpush1.msra.mxu0 0.0
  %86 = vmatprep.subr.mxu0 0.0
  %87 = vmatpush1.msra.mxu0 0.0
  %88 = vmatprep.subr.mxu0 0.0
  %89 = vmatpush1.msra.mxu0 0.0
  %90 = vmatprep.subr.mxu0 0.0
  %91 = vmatpush1.msra.mxu0 0.0
  %92 = vmatprep.subr.mxu0 0.0
  %93 = vmatpush1.msra.mxu0 0.0
  %94 = vmatprep.subr.mxu0 0.0
  %95 = vmatpush1.msra.mxu0 0.0
  %96 = vmatprep.subr.mxu0 0.0
  %97 = vmatpush1.msra.mxu0 0.0
  %98 = vmatprep.subr.mxu0 0.0
  %99 = vmatpush1.msra.mxu0 0.0
  %100 = vmatprep.mubr.f32.mxu0 0.0
  %101 = vmatmul.mubr.f32.gmra.mrb[0].mxu0 %v31
  %v102 = vpop.f32.mrb[0].mxu0
  %v103 = vadd.f32 0.0, %v102
  %v104 = vpop.f32.mrb[0].mxu0
  %105 = vmatprep.mubr.f32.mxu0 0.0
  %106 = vmatmul.mubr.f32.gmra.mrb[0].mxu0 %v34
  %v107 = vpop.f32.mrb[0].mxu0
  %v108 = vadd.f32 0.0, %v107
  %v109 = vpop.f32.mrb[0].mxu0
  %110 = vdwg.mxu0
  %v111 = vadd.f32 %v21, %v103
  %v112 = vadd.f32 %v22, %v108
  %113 = vst.msk [vmem:[#allocation2] sm:$0xff] %vm29, %v111
  %114 = vst.msk [vmem:[#allocation2 + $0x8] sm:$0xff] %vm29, %v112
  // Predicated region
  $region18: #{transformer_forward.36} parent=0 // pred_check
    %p115 = pneg %p14
  $region19: #{transformer_forward.36} parent=0 // pred_check_branch
    %117 = sbr.rel (%p115) target = $region21
  $region20: #{transformer_forward.36} parent=0 // pred_region
    %v118 = vld [vmem:[#allocation2] sm:$0xff]
    %v119 = vld [vmem:[#allocation2 + $0x8] sm:$0xff]
    %v120 = vld [vmem:[%s2] sm:$0x1]
    %v122 = vlaneseq
    %v123 = vshrl.u32 %v122, 7
    %v124 = vsub.s32 0, %v123
    %v125 = vrot.slane %v120, %v124
    %v127 = vadd.f32 %v118, %v125
    %v128 = vadd.f32 %v119, %v125
    %129 = vst.msk [vmem:[%s3] sm:$0xff] %vm29, %v127
    %130 = vst.msk [vmem:[%s3 + $0x8] sm:$0xff] %vm29, %v128
  $region21: #{transformer_forward.36} parent=0 // pred_fallthru
    _
  // Predicated region
  $region22: #{transformer_forward.36} parent=0 // pred_check
    _
  $region23: #{transformer_forward.36} parent=0 // pred_check_branch
    %132 = sbr.rel (0) target = $region25
  $region24: #{transformer_forward.36} parent=0 // pred_region
    _
  $region25: #{transformer_forward.36} parent=0 // pred_fallthru
    _
  // Predicated region
  $region26: #{transformer_forward.36} parent=0 // pred_check
    _
  $region27: #{transformer_forward.36} parent=0 // pred_check_branch
    %134 = sbr.rel (0) target = $region29
  $region28: #{transformer_forward.36} parent=0 // pred_region
    _
  $region29: #{transformer_forward.36} parent=0 // pred_fallthru
    _

// kernel: transformer_forward.49
$region0: #{transformer_forward.49}
  #allocation0 [shape = 'u32[]', space=smem, size = 0x4, offset = 0x4, fixed_abs, tag = 'smem constant byte address 0x4 - core index']
  #allocation1 [shape = 'u32[144,128]{1,0:T(1,128)}', space=vmem, size = 0x12000, scoped, tag = 'internal scratch']
  #allocation2 [shape = 'f32[16,32]{1,0:T(8,128)}', space=vmem, size = 0x2000, scoped, tag = 'scratch operand']
  %s0 = inlined_call_operand.vmem [shape: f32[16,32], index: 0, kind: input, shape index: {}]
  %s1 = inlined_call_operand.vmem [shape: f32[32,32], index: 1, kind: input, shape index: {}]
  %s2 = inlined_call_operand.vmem [shape: f32[1,32], index: 2, kind: input, shape index: {}]
  %s3 = inlined_call_operand.hbm [shape: f32[16,32], index: 3, kind: output, shape index: {}]
  %s4 = sld [smem:[#allocation0]]
  $region30: #{transformer_forward.49} parent=0
    _
  %s6 = ssub.s32 1, %s4
  %s7 = scalar_select 0, %s6, %s4
  $region1: #{transformer_forward.49} parent=0
    #allocation3 [shape = 'u8[8192]{0}', space=vmem, size = 0x2000, scoped, tag = 'output window, operand 0, single buffered']
    #allocation4 [shape = 's32[1]{0}', space=sflag, size = 0x4, scoped, tag = 'scoped memory for transformer_forward.49']
    %8 = vsyncpa [#allocation4], 0
    // Predicated region
    $region2: #{transformer_forward.49} parent=1 // pred_check
      _
    $region3: #{transformer_forward.49} parent=1 // pred_check_branch
      %10 = sbr.rel (0) target = $region5
    $region4: #{transformer_forward.49} parent=1 // pred_region
      _
    $region5: #{transformer_forward.49} parent=1 // pred_fallthru
      _
    // Predicated region
    $region6: #{transformer_forward.49} parent=1 // pred_check
      _
    $region7: #{transformer_forward.49} parent=1 // pred_check_branch
      %12 = sbr.rel (0) target = $region9
    $region8: #{transformer_forward.49} parent=1 // pred_region
      _
    $region9: #{transformer_forward.49} parent=1 // pred_fallthru
      _
    // Predicated region
    $region10: #{transformer_forward.49} parent=1 // pred_check
      _
    $region11: #{transformer_forward.49} parent=1 // pred_check_branch
      %14 = sbr.rel (0) target = $region13
    $region12: #{transformer_forward.49} parent=1 // pred_region
      _
    $region13: #{transformer_forward.49} parent=1 // pred_fallthru
      _
    %p15 = scmp.eq.s32.totalorder 0, 0
    // Predicated region
    $region14: #{transformer_forward.49} parent=1 // pred_check
      %p16 = pneg %p15
    $region15: #{transformer_forward.49} parent=1 // pred_check_branch
      %18 = sbr.rel (%p16) target = $region17
    $region16: #{transformer_forward.49} parent=1 // pred_region
      %vm19 = vcmask 261120
      %20 = vst.msk [vmem:[#allocation2] sm:$0xff] %vm19, 0.0
      %21 = vst.msk [vmem:[#allocation2 + $0x8] sm:$0xff] %vm19, 0.0
    $region17: #{transformer_forward.49} parent=1 // pred_fallthru
      _
    %v22 = vld [vmem:[#allocation2] sm:$0xff]
    %v23 = vld [vmem:[#allocation2 + $0x8] sm:$0xff]
    %v24 = vld [vmem:[%s0] sm:$0xff]
    %v25 = vld [vmem:[%s0 + $0x8] sm:$0xff]
    %v26 = vld [vmem:[%s1] sm:$0xff]
    %v27 = vld [vmem:[%s1 + $0x8] sm:$0xff]
    %v28 = vld [vmem:[%s1 + $0x10] sm:$0xff]
    %v29 = vld [vmem:[%s1 + $0x18] sm:$0xff]
    %vm30 = vcmask 261120
    %v32 = vsel %vm30, %v24, 0
    %v35 = vsel %vm30, %v25, 0
    %37 = vmatprep.subr.mxu0 0.0
    %38 = vmatpush1.msra.mxu0 %v26
    %39 = vmatprep.subr.mxu0 0.0
    %40 = vmatpush1.msra.mxu0 %v27
    %41 = vmatprep.subr.mxu0 0.0
    %42 = vmatpush1.msra.mxu0 %v28
    %43 = vmatprep.subr.mxu0 0.0
    %44 = vmatpush1.msra.mxu0 %v29
    %45 = vmatprep.subr.mxu0 0.0
    %46 = vmatpush1.msra.mxu0 0.0
    %47 = vmatprep.subr.mxu0 0.0
    %48 = vmatpush1.msra.mxu0 0.0
    %49 = vmatprep.subr.mxu0 0.0
    %50 = vmatpush1.msra.mxu0 0.0
    %51 = vmatprep.subr.mxu0 0.0
    %52 = vmatpush1.msra.mxu0 0.0
    %53 = vmatprep.subr.mxu0 0.0
    %54 = vmatpush1.msra.mxu0 0.0
    %55 = vmatprep.subr.mxu0 0.0
    %56 = vmatpush1.msra.mxu0 0.0
    %57 = vmatprep.subr.mxu0 0.0
    %58 = vmatpush1.msra.mxu0 0.0
    %59 = vmatprep.subr.mxu0 0.0
    %60 = vmatpush1.msra.mxu0 0.0
    %61 = vmatprep.subr.mxu0 0.0
    %62 = vmatpush1.msra.mxu0 0.0
    %63 = vmatprep.subr.mxu0 0.0
    %64 = vmatpush1.msra.mxu0 0.0
    %65 = vmatprep.subr.mxu0 0.0
    %66 = vmatpush1.msra.mxu0 0.0
    %67 = vmatprep.subr.mxu0 0.0
    %68 = vmatpush1.msra.mxu0 0.0
    %69 = vmatprep.subr.mxu0 0.0
    %70 = vmatpush1.msra.mxu0 0.0
    %71 = vmatprep.subr.mxu0 0.0
    %72 = vmatpush1.msra.mxu0 0.0
    %73 = vmatprep.subr.mxu0 0.0
    %74 = vmatpush1.msra.mxu0 0.0
    %75 = vmatprep.subr.mxu0 0.0
    %76 = vmatpush1.msra.mxu0 0.0
    %77 = vmatprep.subr.mxu0 0.0
    %78 = vmatpush1.msra.mxu0 0.0
    %79 = vmatprep.subr.mxu0 0.0
    %80 = vmatpush1.msra.mxu0 0.0
    %81 = vmatprep.subr.mxu0 0.0
    %82 = vmatpush1.msra.mxu0 0.0
    %83 = vmatprep.subr.mxu0 0.0
    %84 = vmatpush1.msra.mxu0 0.0
    %85 = vmatprep.subr.mxu0 0.0
    %86 = vmatpush1.msra.mxu0 0.0
    %87 = vmatprep.subr.mxu0 0.0
    %88 = vmatpush1.msra.mxu0 0.0
    %89 = vmatprep.subr.mxu0 0.0
    %90 = vmatpush1.msra.mxu0 0.0
    %91 = vmatprep.subr.mxu0 0.0
    %92 = vmatpush1.msra.mxu0 0.0
    %93 = vmatprep.subr.mxu0 0.0
    %94 = vmatpush1.msra.mxu0 0.0
    %95 = vmatprep.subr.mxu0 0.0
    %96 = vmatpush1.msra.mxu0 0.0
    %97 = vmatprep.subr.mxu0 0.0
    %98 = vmatpush1.msra.mxu0 0.0
    %99 = vmatprep.subr.mxu0 0.0
    %100 = vmatpush1.msra.mxu0 0.0
    %101 = vmatprep.mubr.f32.mxu0 0.0
    %102 = vmatmul.mubr.f32.gmra.mrb[0].mxu0 %v32
    %v103 = vpop.f32.mrb[0].mxu0
    %v104 = vadd.f32 0.0, %v103
    %v105 = vpop.f32.mrb[0].mxu0
    %106 = vmatprep.mubr.f32.mxu0 0.0
    %107 = vmatmul.mubr.f32.gmra.mrb[0].mxu0 %v35
    %v108 = vpop.f32.mrb[0].mxu0
    %v109 = vadd.f32 0.0, %v108
    %v110 = vpop.f32.mrb[0].mxu0
    %111 = vdwg.mxu0
    %v112 = vadd.f32 %v22, %v104
    %v113 = vadd.f32 %v23, %v109
    %114 = vst.msk [vmem:[#allocation2] sm:$0xff] %vm30, %v112
    %115 = vst.msk [vmem:[#allocation2 + $0x8] sm:$0xff] %vm30, %v113
    // Predicated region
    $region18: #{transformer_forward.49} parent=1 // pred_check
      %p116 = pneg %p15
    $region19: #{transformer_forward.49} parent=1 // pred_check_branch
      %118 = sbr.rel (%p116) target = $region21
    $region20: #{transformer_forward.49} parent=1 // pred_region
      %v119 = vld [vmem:[#allocation2] sm:$0xff]
      %v120 = vld [vmem:[#allocation2 + $0x8] sm:$0xff]
      %v121 = vld [vmem:[%s2] sm:$0x1]
      %v123 = vlaneseq
      %v124 = vshrl.u32 %v123, 7
      %v125 = vsub.s32 0, %v124
      %v126 = vrot.slane %v121, %v125
      %v128 = vadd.f32 %v119, %v126
      %v129 = vadd.f32 %v120, %v126
      %130 = vst.msk [vmem:[#allocation3] sm:$0xff] %vm30, %v128
      %131 = vst.msk [vmem:[#allocation3 + $0x8] sm:$0xff] %vm30, %v129
    $region21: #{transformer_forward.49} parent=1 // pred_fallthru
      _
    // Predicated region
    $region22: #{transformer_forward.49} parent=1 // pred_check
      _
    $region23: #{transformer_forward.49} parent=1 // pred_check_branch
      %133 = sbr.rel (0) target = $region25
    $region24: #{transformer_forward.49} parent=1 // pred_region
      %s135 = ssub.s32 256, 256
      %136 = vsyncadd [#allocation4], %s135
      %s137 = sshll.u32 [#allocation3], 4
      %s138 = int_to_ptr.vmem [resolvable:$true] %s137
      %143 = dma.vmem_to_hbm [thread:$0]  %s138, 256, %s3, [#allocation4], 128, 128, 8
    $region25: #{transformer_forward.49} parent=1 // pred_fallthru
      _
    // Predicated region
    $region26: #{transformer_forward.49} parent=1 // pred_check
      _
    $region27: #{transformer_forward.49} parent=1 // pred_check_branch
      %145 = sbr.rel (0) target = $region29
    $region28: #{transformer_forward.49} parent=1 // pred_region
      %146 = dma.done [#allocation4], 256
    $region29: #{transformer_forward.49} parent=1 // pred_fallthru
      _
    %147 = vsyncpa [#allocation4], 1

</llo_original>
